<compile_context>
chip_gen: v7x
topology: tpu7x:2x2x1
jax: 0.10.0
libtpu: 0.0.40
codegen_flags: <defaults>
</compile_context>

<pallas_src>
import functools

import jax
import jax.numpy as jnp
from jax.experimental import pallas as pl
from jax.experimental.pallas import tpu as pltpu

NEG_SLOPE = 0.01      # F.leaky_relu default
LN_EPS = 1e-6         # LayerNorm eps in the module

L1, L2 = 400, 300     # real trunk widths (torch module)
L1P, L2P = 512, 384   # lane-padded widths (multiples of 128)


def _round_up(x, m):
    return ((x + m - 1) // m) * m


def _lrelu(x):
    return jnp.where(x >= 0, x, NEG_SLOPE * x)


def _dot(a, b):
    # bf16 MXU operands, f32 accumulation.
    return jnp.dot(a.astype(jnp.bfloat16), b.astype(jnp.bfloat16),
                   preferred_element_type=jnp.float32)


def _layer_norm(x, gamma, beta, n_valid):
    """LayerNorm matching the torch ref: gamma*(x-mean)/(std+eps)+beta, UNBIASED std.

    x: (R, W) f32; real data in columns [0, n_valid), columns [n_valid, W) are exactly
    zero (zero weight/bias columns feed them), so the mean sum needs no masking.
    Statistics stay (R, 1); only the final normalize touches the full width, and the
    reciprocal runs on the (R, 1) stats (EUP slot, nearly free).
    """
    W = x.shape[-1]
    mean = jnp.sum(x, axis=-1, keepdims=True) * (1.0 / n_valid)              # (R, 1)
    mask = (jax.lax.broadcasted_iota(jnp.int32, (1, W), 1) < n_valid).astype(jnp.float32)
    xc = (x - mean) * mask                      # padded cols forced back to exactly 0
    var = jnp.sum(xc * xc, axis=-1, keepdims=True) * (1.0 / (n_valid - 1))   # (R, 1)
    inv_std = pl.reciprocal(jnp.sqrt(var) + LN_EPS, approx=True)             # (R, 1)
    return gamma * (xc * inv_std) + beta


def _pvn_kernel(in_pad, pad_seg, A, pr, use_ln,
                inp_ref, rp_ref, pw_ref, w1_ref, w2_ref, wout_ref, vec_ref,
                out_ref):
    two_pr = 2 * pr
    a2p = A * two_pr
    K1 = A * pad_seg

    inp = inp_ref[...]                          # (TB, in_pad)      bf16
    rp = rp_ref[...]                            # (TB, A*pad_seg)   bf16

    # ---- twin policy-embedding MLP, action dim in lanes (block-diag weights) --------
    p = _lrelu(_dot(rp, pw_ref[0:K1, :]) + vec_ref[0:1, 0:a2p])
    p = _lrelu(_dot(p, pw_ref[K1:K1 + a2p, :]) + vec_ref[1:2, 0:a2p])
    # mean over action_dim is folded into the pre-averaged, vertically stacked layer-3
    # weights (mean commutes with the final linear layer) -> result is already (TB, 2*PR)
    p_mean = _dot(p, pw_ref[K1 + a2p:K1 + 2 * a2p, 0:two_pr]) + vec_ref[2:3, 0:two_pr]

    # ---- trunk: cat(input, p_mean) @ W1, both branches as tile-aligned half slabs ----
    h1 = (_dot(inp, w1_ref[0:in_pad, 0:L1P])
          + _dot(p_mean, w1_ref[in_pad:in_pad + two_pr, 0:L1P])
          + vec_ref[3:4, 0:L1P])
    h2 = (_dot(inp, w1_ref[0:in_pad, L1P:2 * L1P])
          + _dot(p_mean, w1_ref[in_pad:in_pad + two_pr, L1P:2 * L1P])
          + vec_ref[3:4, L1P:2 * L1P])
    if use_ln:
        h1 = _layer_norm(h1, vec_ref[4:5, 0:L1P], vec_ref[5:6, 0:L1P], L1)
        h2 = _layer_norm(h2, vec_ref[4:5, L1P:2 * L1P], vec_ref[5:6, L1P:2 * L1P], L1)
    h1 = _lrelu(h1)
    h2 = _lrelu(h2)

    g1 = _dot(h1, w2_ref[0:L1P, :]) + vec_ref[6:7, 0:L2P]
    g2 = _dot(h2, w2_ref[L1P:2 * L1P, :]) + vec_ref[6:7, L2P:2 * L2P]
    if use_ln:
        g1 = _layer_norm(g1, vec_ref[7:8, 0:L2P], vec_ref[8:9, 0:L2P], L2)
        g2 = _layer_norm(g2, vec_ref[7:8, L2P:2 * L2P], vec_ref[8:9, L2P:2 * L2P], L2)
    g1 = _lrelu(g1)
    g2 = _lrelu(g2)

    # lane-dense output block: col 0 = Q1, col 1 = Q2, cols 2..127 zero padding
    out_ref[...] = (_dot(g1, wout_ref[0:L2P, :])
                    + _dot(g2, wout_ref[L2P:2 * L2P, :])
                    + vec_ref[9:10, 0:128])


def _pick_tb(B):
    """Largest convenient batch tile; >=2 grid steps when B > 128 (v7x megacore)."""
    if B <= 128:
        return B
    for tb in (256, 128, 64, 32, 16):
        if tb <= B // 2 and B % tb == 0:
            return tb
    return B    # fallback: single full-array step


def policy_value_forward(inp, param, packed, *, ls, action_dim, pr, input_dim, use_ln):
    pw, w1, w2, wout, vec = packed
    A = action_dim
    B = inp.shape[0]
    pad_seg = _round_up(ls + 1, 16)
    in_pad = _round_up(input_dim, 16)

    # wrapper-side layout prep (plain XLA, cheap): zero-pad each per-action parameter
    # segment to 16 columns and the state/action input to a 16-multiple, so every
    # in-kernel bf16 weight slice is sublane-tile aligned.
    rp = param.reshape(B, A, ls + 1)
    rp = jnp.pad(rp, ((0, 0), (0, 0), (0, pad_seg - (ls + 1)))).reshape(B, A * pad_seg)
    inp_p = jnp.pad(inp, ((0, 0), (0, in_pad - input_dim)))

    TB = _pick_tb(B)
    grid = (B // TB,)

    kernel = functools.partial(_pvn_kernel, in_pad, pad_seg, A, pr, use_ln)

    out = pl.pallas_call(
        kernel,
        grid=grid,
        in_specs=[
            pl.BlockSpec((TB, in_pad), lambda i: (i, 0)),        # batch-tiled
            pl.BlockSpec((TB, A * pad_seg), lambda i: (i, 0)),   # batch-tiled
            pl.BlockSpec(pw.shape, lambda i: (0, 0)),            # weights: resident
            pl.BlockSpec(w1.shape, lambda i: (0, 0)),
            pl.BlockSpec(w2.shape, lambda i: (0, 0)),
            pl.BlockSpec(wout.shape, lambda i: (0, 0)),
            pl.BlockSpec(vec.shape, lambda i: (0, 0)),
        ],
        out_specs=pl.BlockSpec((TB, 128), lambda i: (i, 0)),
        out_shape=jax.ShapeDtypeStruct((B, 128), jnp.float32),
        compiler_params=pltpu.CompilerParams(
            dimension_semantics=("parallel",),                   # v7x 2nd TC
            vmem_limit_bytes=32 * 1024 * 1024),                  # v5e headroom
    )(inp_p.astype(jnp.bfloat16), rp.astype(jnp.bfloat16), pw, w1, w2, wout, vec)
    return out[:, 0:1], out[:, 1:2]


# ----------------------------------------------------------------------------- #
# Parameter construction (deterministic, PyTorch-Linear-style uniform init).
# ----------------------------------------------------------------------------- #
def _linear(key, fan_in, fan_out, scale=1.0):
    k1, k2 = jax.random.split(key)
    bound = fan_in ** -0.5
    w = jax.random.uniform(k1, (fan_in, fan_out), jnp.float32, -bound, bound) * scale
    b = jax.random.uniform(k2, (fan_out,), jnp.float32, -bound, bound) * scale
    return w, b


def make_raw_params(key, *, ls, pr, input_dim):
    keys = jax.random.split(key, 12)
    p = {}
    p["pw1"] = _linear(keys[0], ls + 1, pr)
    p["pw2"] = _linear(keys[1], pr, pr)
    p["pw3"] = _linear(keys[2], pr, pr)
    p["wl1"] = _linear(keys[3], input_dim + pr, L1)
    p["wl2"] = _linear(keys[4], L1, L2)
    p["wout1"] = _linear(keys[5], L2, 1, scale=0.1)           # .mul_(0.1)
    p["ln1"] = (jnp.ones((L1,), jnp.float32), jnp.zeros((L1,), jnp.float32))
    p["ln2"] = (jnp.ones((L2,), jnp.float32), jnp.zeros((L2,), jnp.float32))
    p["pw4"] = _linear(keys[6], ls + 1, pr)
    p["pw5"] = _linear(keys[7], pr, pr)
    p["pw6"] = _linear(keys[8], pr, pr)
    p["wl3"] = _linear(keys[9], input_dim + pr, L1)
    p["wl4"] = _linear(keys[10], L1, L2)
    p["wout2"] = _linear(keys[11], L2, 1, scale=0.1)          # .mul_(0.1)
    p["ln3"] = (jnp.ones((L1,), jnp.float32), jnp.zeros((L1,), jnp.float32))
    p["ln4"] = (jnp.ones((L2,), jnp.float32), jnp.zeros((L2,), jnp.float32))
    return p


def pack_params(raw, *, ls, pr, input_dim, action_dim):
    """Build the fused / packed kernel operands from the per-branch torch-style params."""
    A = action_dim
    pad_seg = _round_up(ls + 1, 16)
    in_pad = _round_up(input_dim, 16)
    two_pr = 2 * pr
    a2p = A * two_pr
    K1 = A * pad_seg

    # policy MLP: per-action block-diag layers 1/2; layer 3 is pre-averaged (/A) and
    # vertically stacked so its matmul directly yields the mean over action_dim.
    pw = jnp.zeros((K1 + 2 * a2p, a2p), jnp.float32)
    for a in range(A):
        r0, c0 = a * pad_seg, a * two_pr
        pw = pw.at[r0:r0 + ls + 1, c0:c0 + pr].set(raw["pw1"][0])
        pw = pw.at[r0:r0 + ls + 1, c0 + pr:c0 + two_pr].set(raw["pw4"][0])
        r0 = K1 + a * two_pr
        pw = pw.at[r0:r0 + pr, c0:c0 + pr].set(raw["pw2"][0])
        pw = pw.at[r0 + pr:r0 + two_pr, c0 + pr:c0 + two_pr].set(raw["pw5"][0])
        r0 = K1 + a2p + a * two_pr
        pw = pw.at[r0:r0 + pr, 0:pr].set(raw["pw3"][0] / A)
        pw = pw.at[r0 + pr:r0 + two_pr, pr:two_pr].set(raw["pw6"][0] / A)

    # trunk layer 1: branch-1 in cols [0:L1), branch-2 in cols [L1P:L1P+L1)
    w1 = jnp.zeros((in_pad + two_pr, 2 * L1P), jnp.float32)
    w1 = w1.at[0:input_dim, 0:L1].set(raw["wl1"][0][0:input_dim])
    w1 = w1.at[0:input_dim, L1P:L1P + L1].set(raw["wl3"][0][0:input_dim])
    w1 = w1.at[in_pad:in_pad + pr, 0:L1].set(raw["wl1"][0][input_dim:])
    w1 = w1.at[in_pad + pr:in_pad + two_pr, L1P:L1P + L1].set(raw["wl3"][0][input_dim:])

    # trunk layer 2: the two branch halves STACKED vertically (half the MACs/bytes of
    # the previous block-diagonal layout)
    w2 = jnp.zeros((2 * L1P, L2P), jnp.float32)
    w2 = w2.at[0:L1, 0:L2].set(raw["wl2"][0])
    w2 = w2.at[L1P:L1P + L1, 0:L2].set(raw["wl4"][0])

    wout = jnp.zeros((2 * L2P, 128), jnp.float32)             # lane-dense output weights
    wout = wout.at[0:L2, 0:1].set(raw["wout1"][0])
    wout = wout.at[L2P:L2P + L2, 1:2].set(raw["wout2"][0])

    # one packed array for every bias / LayerNorm vector (single DMA, f32 for LN math)
    vec = jnp.zeros((10, 2 * L1P), jnp.float32)
    for a in range(A):
        c0 = a * two_pr
        vec = vec.at[0, c0:c0 + pr].set(raw["pw1"][1]).at[0, c0 + pr:c0 + two_pr].set(raw["pw4"][1])
        vec = vec.at[1, c0:c0 + pr].set(raw["pw2"][1]).at[1, c0 + pr:c0 + two_pr].set(raw["pw5"][1])
    vec = vec.at[2, 0:pr].set(raw["pw3"][1]).at[2, pr:two_pr].set(raw["pw6"][1])
    vec = vec.at[3, 0:L1].set(raw["wl1"][1]).at[3, L1P:L1P + L1].set(raw["wl3"][1])
    vec = vec.at[4, 0:L1].set(raw["ln1"][0]).at[4, L1P:L1P + L1].set(raw["ln3"][0])
    vec = vec.at[5, 0:L1].set(raw["ln1"][1]).at[5, L1P:L1P + L1].set(raw["ln3"][1])
    vec = vec.at[6, 0:L2].set(raw["wl2"][1]).at[6, L2P:L2P + L2].set(raw["wl4"][1])
    vec = vec.at[7, 0:L2].set(raw["ln2"][0]).at[7, L2P:L2P + L2].set(raw["ln4"][0])
    vec = vec.at[8, 0:L2].set(raw["ln2"][1]).at[8, L2P:L2P + L2].set(raw["ln4"][1])
    vec = vec.at[9, 0:1].set(raw["wout1"][1]).at[9, 1:2].set(raw["wout2"][1])

    return (pw.astype(jnp.bfloat16), w1.astype(jnp.bfloat16),
            w2.astype(jnp.bfloat16), wout.astype(jnp.bfloat16), vec)


# ----------------------------------------------------------------------------- #
# Pure-JAX f32 reference (mirrors the torch forward exactly) for validation.
# ----------------------------------------------------------------------------- #
def _layer_norm_ref(x, gamma, beta):
    n = x.shape[-1]
    mean = jnp.mean(x, axis=-1, keepdims=True)
    var = jnp.sum((x - mean) ** 2, axis=-1, keepdims=True) / (n - 1)     # unbiased std
    return gamma * (x - mean) / (jnp.sqrt(var) + LN_EPS) + beta


def reference_forward(inp, param, raw, *, ls, action_dim, use_ln):
    rp = param.reshape(-1, ls + 1)

    def branch(pa, pb, pc, w1, w2, wo, ln_a, ln_b):
        p = _lrelu(rp @ pa[0] + pa[1])
        p = _lrelu(p @ pb[0] + pb[1])
        p = p @ pc[0] + pc[1]
        p = jnp.mean(p.reshape(-1, action_dim, p.shape[-1]), axis=1)
        h = jnp.concatenate([inp, p], axis=1) @ w1[0] + w1[1]
        if use_ln:
            h = _layer_norm_ref(h, ln_a[0], ln_a[1])
        h = _lrelu(h)
        h = h @ w2[0] + w2[1]
        if use_ln:
            h = _layer_norm_ref(h, ln_b[0], ln_b[1])
        h = _lrelu(h)
        return h @ wo[0] + wo[1]

    o1 = branch(raw["pw1"], raw["pw2"], raw["pw3"], raw["wl1"], raw["wl2"],
                raw["wout1"], raw["ln1"], raw["ln2"])
    o2 = branch(raw["pw4"], raw["pw5"], raw["pw6"], raw["wl3"], raw["wl4"],
                raw["wout2"], raw["ln3"], raw["ln4"])
    return o1, o2


if __name__ == "__main__":
    # small shapes consistent with the module
    ls, action_dim, pr = 8, 4, 16
    state_dim, OFF_TYPE, use_ln = 12, 1, True
    input_dim = state_dim + action_dim if OFF_TYPE == 1 else ls          # = 16
    B = 2
    policy_size = ls * action_dim + action_dim                           # = 36

    key = jax.random.PRNGKey(0)
    k_in, k_param, k_w = jax.random.split(key, 3)
    inp = jax.random.normal(k_in, (B, input_dim), jnp.float32)
    param = jax.random.normal(k_param, (B, policy_size), jnp.float32)

    raw = make_raw_params(k_w, ls=ls, pr=pr, input_dim=input_dim)
    packed = pack_params(raw, ls=ls, pr=pr, input_dim=input_dim, action_dim=action_dim)

    out1, out2 = policy_value_forward(inp, param, packed, ls=ls, action_dim=action_dim,
                                      pr=pr, input_dim=input_dim, use_ln=use_ln)
    jax.block_until_ready((out1, out2))

    ref1, ref2 = reference_forward(inp, param, raw, ls=ls, action_dim=action_dim,
                                   use_ln=use_ln)
    assert out1.shape == (B, 1) and out2.shape == (B, 1)
    # bf16 MXU inputs + approx reciprocal vs f32 reference -> loosened tolerance
    assert jnp.allclose(out1, ref1, atol=2e-2, rtol=5e-2), (out1, ref1)
    assert jnp.allclose(out2, ref2, atol=2e-2, rtol=5e-2), (out2, ref2)
    print("KERNEL_OK")
</pallas_src>

<mosaic_0001>
module attributes {stable_mosaic.version = 11 : i64} {
  func.func @_pvn_kernel(%arg0: i32, %arg1: memref<2x16xbf16, #tpu.memory_space<vmem>>, %arg2: memref<2x64xbf16, #tpu.memory_space<vmem>>, %arg3: memref<320x128xbf16, #tpu.memory_space<vmem>>, %arg4: memref<48x1024xbf16, #tpu.memory_space<vmem>>, %arg5: memref<1024x384xbf16, #tpu.memory_space<vmem>>, %arg6: memref<768x128xbf16, #tpu.memory_space<vmem>>, %arg7: memref<10x1024xf32, #tpu.memory_space<vmem>>, %arg8: memref<2x128xf32, #tpu.memory_space<vmem>>) attributes {dimension_semantics = [#tpu.dimension_semantics<parallel>], iteration_bounds = array<i64: 1>, scalar_prefetch = 0 : i64, scratch_operands = 0 : i64, tpu.core_type = #tpu.core_type<tc>, window_params = [{transform_indices = @transform_0, window_bounds = array<i64: 2, 16>}, {transform_indices = @transform_1, window_bounds = array<i64: 2, 64>}, {pipeline_mode = #tpu.pipeline_mode<synchronous>, transform_indices = @transform_2, window_bounds = array<i64: 320, 128>}, {pipeline_mode = #tpu.pipeline_mode<synchronous>, transform_indices = @transform_3, window_bounds = array<i64: 48, 1024>}, {pipeline_mode = #tpu.pipeline_mode<synchronous>, transform_indices = @transform_4, window_bounds = array<i64: 1024, 384>}, {pipeline_mode = #tpu.pipeline_mode<synchronous>, transform_indices = @transform_5, window_bounds = array<i64: 768, 128>}, {pipeline_mode = #tpu.pipeline_mode<synchronous>, transform_indices = @transform_6, window_bounds = array<i64: 10, 1024>}, {transform_indices = @transform_7, window_bounds = array<i64: 2, 128>}]} {
    %c0 = arith.constant 0 : index
    %c0_0 = arith.constant 0 : index
    %0 = vector.load %arg1[%c0, %c0_0] : memref<2x16xbf16, #tpu.memory_space<vmem>>, vector<2x16xbf16>
    %c0_1 = arith.constant 0 : index
    %c0_2 = arith.constant 0 : index
    %1 = vector.load %arg2[%c0_1, %c0_2] : memref<2x64xbf16, #tpu.memory_space<vmem>>, vector<2x64xbf16>
    %c0_3 = arith.constant 0 : index
    %c0_4 = arith.constant 0 : index
    %2 = vector.load %arg3[%c0_3, %c0_4] : memref<320x128xbf16, #tpu.memory_space<vmem>>, vector<64x128xbf16>
    %cst = arith.constant dense<0.000000e+00> : vector<2x128xf32>
    %3 = tpu.matmul %1, %2, %cst {dimension_numbers = #tpu.dot_dimension_numbers<[1], [0], [0], [1], [0, 0, 1, 1], [], []>} : vector<2x64xbf16>, vector<64x128xbf16>, vector<2x128xf32> -> vector<2x128xf32>
    %c0_5 = arith.constant 0 : index
    %c0_6 = arith.constant 0 : index
    %4 = vector.load %arg7[%c0_5, %c0_6] : memref<10x1024xf32, #tpu.memory_space<vmem>>, vector<1x128xf32>
    %5 = vector.broadcast %4 : vector<1x128xf32> to vector<2x128xf32>
    %6 = arith.addf %3, %5 : vector<2x128xf32>
    %cst_7 = arith.constant 0.000000e+00 : f32
    %7 = vector.broadcast %cst_7 : f32 to vector<2x128xf32>
    %8 = arith.cmpf oge, %6, %7 : vector<2x128xf32>
    %cst_8 = arith.constant 0.00999999977 : f32
    %9 = vector.broadcast %cst_8 : f32 to vector<2x128xf32>
    %10 = arith.mulf %9, %6 : vector<2x128xf32>
    %11 = arith.select %8, %6, %10 : vector<2x128xi1>, vector<2x128xf32>
    %c64 = arith.constant 64 : index
    %c0_9 = arith.constant 0 : index
    %12 = vector.load %arg3[%c64, %c0_9] : memref<320x128xbf16, #tpu.memory_space<vmem>>, vector<128x128xbf16>
    %13 = arith.truncf %11 : vector<2x128xf32> to vector<2x128xbf16>
    %cst_10 = arith.constant dense<0.000000e+00> : vector<2x128xf32>
    %14 = tpu.matmul %13, %12, %cst_10 {dimension_numbers = #tpu.dot_dimension_numbers<[1], [0], [0], [1], [0, 0, 1, 1], [], []>} : vector<2x128xbf16>, vector<128x128xbf16>, vector<2x128xf32> -> vector<2x128xf32>
    %c1 = arith.constant 1 : index
    %c0_11 = arith.constant 0 : index
    %15 = vector.load %arg7[%c1, %c0_11] : memref<10x1024xf32, #tpu.memory_space<vmem>>, vector<1x128xf32>
    %16 = vector.broadcast %15 : vector<1x128xf32> to vector<2x128xf32>
    %17 = arith.addf %14, %16 : vector<2x128xf32>
    %cst_12 = arith.constant 0.000000e+00 : f32
    %18 = vector.broadcast %cst_12 : f32 to vector<2x128xf32>
    %19 = arith.cmpf oge, %17, %18 : vector<2x128xf32>
    %cst_13 = arith.constant 0.00999999977 : f32
    %20 = vector.broadcast %cst_13 : f32 to vector<2x128xf32>
    %21 = arith.mulf %20, %17 : vector<2x128xf32>
    %22 = arith.select %19, %17, %21 : vector<2x128xi1>, vector<2x128xf32>
    %c192 = arith.constant 192 : index
    %c0_14 = arith.constant 0 : index
    %23 = vector.load %arg3[%c192, %c0_14] : memref<320x128xbf16, #tpu.memory_space<vmem>>, vector<128x32xbf16>
    %24 = arith.truncf %22 : vector<2x128xf32> to vector<2x128xbf16>
    %cst_15 = arith.constant dense<0.000000e+00> : vector<2x32xf32>
    %25 = tpu.matmul %24, %23, %cst_15 {dimension_numbers = #tpu.dot_dimension_numbers<[1], [0], [0], [1], [0, 0, 1, 1], [], []>} : vector<2x128xbf16>, vector<128x32xbf16>, vector<2x32xf32> -> vector<2x32xf32>
    %c2 = arith.constant 2 : index
    %c0_16 = arith.constant 0 : index
    %26 = vector.load %arg7[%c2, %c0_16] : memref<10x1024xf32, #tpu.memory_space<vmem>>, vector<1x32xf32>
    %27 = vector.broadcast %26 : vector<1x32xf32> to vector<2x32xf32>
    %28 = arith.addf %25, %27 : vector<2x32xf32>
    %c0_17 = arith.constant 0 : index
    %c0_18 = arith.constant 0 : index
    %29 = vector.load %arg4[%c0_17, %c0_18] : memref<48x1024xbf16, #tpu.memory_space<vmem>>, vector<16x512xbf16>
    %cst_19 = arith.constant dense<0.000000e+00> : vector<2x512xf32>
    %30 = tpu.matmul %0, %29, %cst_19 {dimension_numbers = #tpu.dot_dimension_numbers<[1], [0], [0], [1], [0, 0, 1, 1], [], []>} : vector<2x16xbf16>, vector<16x512xbf16>, vector<2x512xf32> -> vector<2x512xf32>
    %c16 = arith.constant 16 : index
    %c0_20 = arith.constant 0 : index
    %31 = vector.load %arg4[%c16, %c0_20] : memref<48x1024xbf16, #tpu.memory_space<vmem>>, vector<32x512xbf16>
    %32 = arith.truncf %28 : vector<2x32xf32> to vector<2x32xbf16>
    %cst_21 = arith.constant dense<0.000000e+00> : vector<2x512xf32>
    %33 = tpu.matmul %32, %31, %cst_21 {dimension_numbers = #tpu.dot_dimension_numbers<[1], [0], [0], [1], [0, 0, 1, 1], [], []>} : vector<2x32xbf16>, vector<32x512xbf16>, vector<2x512xf32> -> vector<2x512xf32>
    %34 = arith.addf %30, %33 : vector<2x512xf32>
    %c3 = arith.constant 3 : index
    %c0_22 = arith.constant 0 : index
    %35 = vector.load %arg7[%c3, %c0_22] : memref<10x1024xf32, #tpu.memory_space<vmem>>, vector<1x512xf32>
    %36 = vector.broadcast %35 : vector<1x512xf32> to vector<2x512xf32>
    %37 = arith.addf %34, %36 : vector<2x512xf32>
    %c0_23 = arith.constant 0 : index
    %c512 = arith.constant 512 : index
    %38 = vector.load %arg4[%c0_23, %c512] : memref<48x1024xbf16, #tpu.memory_space<vmem>>, vector<16x512xbf16>
    %cst_24 = arith.constant dense<0.000000e+00> : vector<2x512xf32>
    %39 = tpu.matmul %0, %38, %cst_24 {dimension_numbers = #tpu.dot_dimension_numbers<[1], [0], [0], [1], [0, 0, 1, 1], [], []>} : vector<2x16xbf16>, vector<16x512xbf16>, vector<2x512xf32> -> vector<2x512xf32>
    %c16_25 = arith.constant 16 : index
    %c512_26 = arith.constant 512 : index
    %40 = vector.load %arg4[%c16_25, %c512_26] : memref<48x1024xbf16, #tpu.memory_space<vmem>>, vector<32x512xbf16>
    %41 = arith.truncf %28 : vector<2x32xf32> to vector<2x32xbf16>
    %cst_27 = arith.constant dense<0.000000e+00> : vector<2x512xf32>
    %42 = tpu.matmul %41, %40, %cst_27 {dimension_numbers = #tpu.dot_dimension_numbers<[1], [0], [0], [1], [0, 0, 1, 1], [], []>} : vector<2x32xbf16>, vector<32x512xbf16>, vector<2x512xf32> -> vector<2x512xf32>
    %43 = arith.addf %39, %42 : vector<2x512xf32>
    %c3_28 = arith.constant 3 : index
    %c512_29 = arith.constant 512 : index
    %44 = vector.load %arg7[%c3_28, %c512_29] : memref<10x1024xf32, #tpu.memory_space<vmem>>, vector<1x512xf32>
    %45 = vector.broadcast %44 : vector<1x512xf32> to vector<2x512xf32>
    %46 = arith.addf %43, %45 : vector<2x512xf32>
    %c4 = arith.constant 4 : index
    %c0_30 = arith.constant 0 : index
    %47 = vector.load %arg7[%c4, %c0_30] : memref<10x1024xf32, #tpu.memory_space<vmem>>, vector<1x512xf32>
    %c5 = arith.constant 5 : index
    %c0_31 = arith.constant 0 : index
    %48 = vector.load %arg7[%c5, %c0_31] : memref<10x1024xf32, #tpu.memory_space<vmem>>, vector<1x512xf32>
    %cst_32 = arith.constant dense<0.000000e+00> : vector<2xf32>
    %49 = vector.multi_reduction <add>, %37, %cst_32 [1] : vector<2x512xf32> to vector<2xf32>
    %50 = vector.shape_cast %49 : vector<2xf32> to vector<2x1xf32>
    %cst_33 = arith.constant 2.500000e-03 : f32
    %51 = vector.broadcast %cst_33 : f32 to vector<2x1xf32>
    %52 = arith.mulf %50, %51 : vector<2x1xf32>
    %53 = tpu.iota {dimensions = array<i32: 1>} : vector<1x512xi32>
    %c400_i32 = arith.constant 400 : i32
    %54 = vector.broadcast %c400_i32 : i32 to vector<1x512xi32>
    %55 = arith.cmpi slt, %53, %54 : vector<1x512xi32>
    %56 = arith.extui %55 : vector<1x512xi1> to vector<1x512xi32>
    %57 = arith.sitofp %56 : vector<1x512xi32> to vector<1x512xf32>
    %58 = vector.broadcast %52 : vector<2x1xf32> to vector<2x512xf32>
    %59 = arith.subf %37, %58 : vector<2x512xf32>
    %60 = vector.broadcast %57 : vector<1x512xf32> to vector<2x512xf32>
    %61 = arith.mulf %59, %60 : vector<2x512xf32>
    %62 = arith.mulf %61, %61 : vector<2x512xf32>
    %cst_34 = arith.constant dense<0.000000e+00> : vector<2xf32>
    %63 = vector.multi_reduction <add>, %62, %cst_34 [1] : vector<2x512xf32> to vector<2xf32>
    %64 = vector.shape_cast %63 : vector<2xf32> to vector<2x1xf32>
    %cst_35 = arith.constant 0.00250626565 : f32
    %65 = vector.broadcast %cst_35 : f32 to vector<2x1xf32>
    %66 = arith.mulf %64, %65 : vector<2x1xf32>
    %67 = math.sqrt %66 : vector<2x1xf32>
    %cst_36 = arith.constant 9.99999997E-7 : f32
    %68 = vector.broadcast %cst_36 : f32 to vector<2x1xf32>
    %69 = arith.addf %67, %68 : vector<2x1xf32>
    %70 = tpu.reciprocal %69 {approx = true} : vector<2x1xf32> -> vector<2x1xf32>
    %71 = vector.broadcast %70 : vector<2x1xf32> to vector<2x512xf32>
    %72 = arith.mulf %61, %71 : vector<2x512xf32>
    %73 = vector.broadcast %47 : vector<1x512xf32> to vector<2x512xf32>
    %74 = arith.mulf %73, %72 : vector<2x512xf32>
    %75 = vector.broadcast %48 : vector<1x512xf32> to vector<2x512xf32>
    %76 = arith.addf %74, %75 : vector<2x512xf32>
    %c4_37 = arith.constant 4 : index
    %c512_38 = arith.constant 512 : index
    %77 = vector.load %arg7[%c4_37, %c512_38] : memref<10x1024xf32, #tpu.memory_space<vmem>>, vector<1x512xf32>
    %c5_39 = arith.constant 5 : index
    %c512_40 = arith.constant 512 : index
    %78 = vector.load %arg7[%c5_39, %c512_40] : memref<10x1024xf32, #tpu.memory_space<vmem>>, vector<1x512xf32>
    %cst_41 = arith.constant dense<0.000000e+00> : vector<2xf32>
    %79 = vector.multi_reduction <add>, %46, %cst_41 [1] : vector<2x512xf32> to vector<2xf32>
    %80 = vector.shape_cast %79 : vector<2xf32> to vector<2x1xf32>
    %cst_42 = arith.constant 2.500000e-03 : f32
    %81 = vector.broadcast %cst_42 : f32 to vector<2x1xf32>
    %82 = arith.mulf %80, %81 : vector<2x1xf32>
    %83 = tpu.iota {dimensions = array<i32: 1>} : vector<1x512xi32>
    %c400_i32_43 = arith.constant 400 : i32
    %84 = vector.broadcast %c400_i32_43 : i32 to vector<1x512xi32>
    %85 = arith.cmpi slt, %83, %84 : vector<1x512xi32>
    %86 = arith.extui %85 : vector<1x512xi1> to vector<1x512xi32>
    %87 = arith.sitofp %86 : vector<1x512xi32> to vector<1x512xf32>
    %88 = vector.broadcast %82 : vector<2x1xf32> to vector<2x512xf32>
    %89 = arith.subf %46, %88 : vector<2x512xf32>
    %90 = vector.broadcast %87 : vector<1x512xf32> to vector<2x512xf32>
    %91 = arith.mulf %89, %90 : vector<2x512xf32>
    %92 = arith.mulf %91, %91 : vector<2x512xf32>
    %cst_44 = arith.constant dense<0.000000e+00> : vector<2xf32>
    %93 = vector.multi_reduction <add>, %92, %cst_44 [1] : vector<2x512xf32> to vector<2xf32>
    %94 = vector.shape_cast %93 : vector<2xf32> to vector<2x1xf32>
    %cst_45 = arith.constant 0.00250626565 : f32
    %95 = vector.broadcast %cst_45 : f32 to vector<2x1xf32>
    %96 = arith.mulf %94, %95 : vector<2x1xf32>
    %97 = math.sqrt %96 : vector<2x1xf32>
    %cst_46 = arith.constant 9.99999997E-7 : f32
    %98 = vector.broadcast %cst_46 : f32 to vector<2x1xf32>
    %99 = arith.addf %97, %98 : vector<2x1xf32>
    %100 = tpu.reciprocal %99 {approx = true} : vector<2x1xf32> -> vector<2x1xf32>
    %101 = vector.broadcast %100 : vector<2x1xf32> to vector<2x512xf32>
    %102 = arith.mulf %91, %101 : vector<2x512xf32>
    %103 = vector.broadcast %77 : vector<1x512xf32> to vector<2x512xf32>
    %104 = arith.mulf %103, %102 : vector<2x512xf32>
    %105 = vector.broadcast %78 : vector<1x512xf32> to vector<2x512xf32>
    %106 = arith.addf %104, %105 : vector<2x512xf32>
    %cst_47 = arith.constant 0.000000e+00 : f32
    %107 = vector.broadcast %cst_47 : f32 to vector<2x512xf32>
    %108 = arith.cmpf oge, %76, %107 : vector<2x512xf32>
    %cst_48 = arith.constant 0.00999999977 : f32
    %109 = vector.broadcast %cst_48 : f32 to vector<2x512xf32>
    %110 = arith.mulf %109, %76 : vector<2x512xf32>
    %111 = arith.select %108, %76, %110 : vector<2x512xi1>, vector<2x512xf32>
    %cst_49 = arith.constant 0.000000e+00 : f32
    %112 = vector.broadcast %cst_49 : f32 to vector<2x512xf32>
    %113 = arith.cmpf oge, %106, %112 : vector<2x512xf32>
    %cst_50 = arith.constant 0.00999999977 : f32
    %114 = vector.broadcast %cst_50 : f32 to vector<2x512xf32>
    %115 = arith.mulf %114, %106 : vector<2x512xf32>
    %116 = arith.select %113, %106, %115 : vector<2x512xi1>, vector<2x512xf32>
    %c0_51 = arith.constant 0 : index
    %c0_52 = arith.constant 0 : index
    %117 = vector.load %arg5[%c0_51, %c0_52] : memref<1024x384xbf16, #tpu.memory_space<vmem>>, vector<512x384xbf16>
    %118 = arith.truncf %111 : vector<2x512xf32> to vector<2x512xbf16>
    %cst_53 = arith.constant dense<0.000000e+00> : vector<2x384xf32>
    %119 = tpu.matmul %118, %117, %cst_53 {dimension_numbers = #tpu.dot_dimension_numbers<[1], [0], [0], [1], [0, 0, 1, 1], [], []>} : vector<2x512xbf16>, vector<512x384xbf16>, vector<2x384xf32> -> vector<2x384xf32>
    %c6 = arith.constant 6 : index
    %c0_54 = arith.constant 0 : index
    %120 = vector.load %arg7[%c6, %c0_54] : memref<10x1024xf32, #tpu.memory_space<vmem>>, vector<1x384xf32>
    %121 = vector.broadcast %120 : vector<1x384xf32> to vector<2x384xf32>
    %122 = arith.addf %119, %121 : vector<2x384xf32>
    %c512_55 = arith.constant 512 : index
    %c0_56 = arith.constant 0 : index
    %123 = vector.load %arg5[%c512_55, %c0_56] : memref<1024x384xbf16, #tpu.memory_space<vmem>>, vector<512x384xbf16>
    %124 = arith.truncf %116 : vector<2x512xf32> to vector<2x512xbf16>
    %cst_57 = arith.constant dense<0.000000e+00> : vector<2x384xf32>
    %125 = tpu.matmul %124, %123, %cst_57 {dimension_numbers = #tpu.dot_dimension_numbers<[1], [0], [0], [1], [0, 0, 1, 1], [], []>} : vector<2x512xbf16>, vector<512x384xbf16>, vector<2x384xf32> -> vector<2x384xf32>
    %c6_58 = arith.constant 6 : index
    %c384 = arith.constant 384 : index
    %126 = vector.load %arg7[%c6_58, %c384] : memref<10x1024xf32, #tpu.memory_space<vmem>>, vector<1x384xf32>
    %127 = vector.broadcast %126 : vector<1x384xf32> to vector<2x384xf32>
    %128 = arith.addf %125, %127 : vector<2x384xf32>
    %c7 = arith.constant 7 : index
    %c0_59 = arith.constant 0 : index
    %129 = vector.load %arg7[%c7, %c0_59] : memref<10x1024xf32, #tpu.memory_space<vmem>>, vector<1x384xf32>
    %c8 = arith.constant 8 : index
    %c0_60 = arith.constant 0 : index
    %130 = vector.load %arg7[%c8, %c0_60] : memref<10x1024xf32, #tpu.memory_space<vmem>>, vector<1x384xf32>
    %cst_61 = arith.constant dense<0.000000e+00> : vector<2xf32>
    %131 = vector.multi_reduction <add>, %122, %cst_61 [1] : vector<2x384xf32> to vector<2xf32>
    %132 = vector.shape_cast %131 : vector<2xf32> to vector<2x1xf32>
    %cst_62 = arith.constant 0.00333333341 : f32
    %133 = vector.broadcast %cst_62 : f32 to vector<2x1xf32>
    %134 = arith.mulf %132, %133 : vector<2x1xf32>
    %135 = tpu.iota {dimensions = array<i32: 1>} : vector<1x384xi32>
    %c300_i32 = arith.constant 300 : i32
    %136 = vector.broadcast %c300_i32 : i32 to vector<1x384xi32>
    %137 = arith.cmpi slt, %135, %136 : vector<1x384xi32>
    %138 = arith.extui %137 : vector<1x384xi1> to vector<1x384xi32>
    %139 = arith.sitofp %138 : vector<1x384xi32> to vector<1x384xf32>
    %140 = vector.broadcast %134 : vector<2x1xf32> to vector<2x384xf32>
    %141 = arith.subf %122, %140 : vector<2x384xf32>
    %142 = vector.broadcast %139 : vector<1x384xf32> to vector<2x384xf32>
    %143 = arith.mulf %141, %142 : vector<2x384xf32>
    %144 = arith.mulf %143, %143 : vector<2x384xf32>
    %cst_63 = arith.constant dense<0.000000e+00> : vector<2xf32>
    %145 = vector.multi_reduction <add>, %144, %cst_63 [1] : vector<2x384xf32> to vector<2xf32>
    %146 = vector.shape_cast %145 : vector<2xf32> to vector<2x1xf32>
    %cst_64 = arith.constant 0.00334448158 : f32
    %147 = vector.broadcast %cst_64 : f32 to vector<2x1xf32>
    %148 = arith.mulf %146, %147 : vector<2x1xf32>
    %149 = math.sqrt %148 : vector<2x1xf32>
    %cst_65 = arith.constant 9.99999997E-7 : f32
    %150 = vector.broadcast %cst_65 : f32 to vector<2x1xf32>
    %151 = arith.addf %149, %150 : vector<2x1xf32>
    %152 = tpu.reciprocal %151 {approx = true} : vector<2x1xf32> -> vector<2x1xf32>
    %153 = vector.broadcast %152 : vector<2x1xf32> to vector<2x384xf32>
    %154 = arith.mulf %143, %153 : vector<2x384xf32>
    %155 = vector.broadcast %129 : vector<1x384xf32> to vector<2x384xf32>
    %156 = arith.mulf %155, %154 : vector<2x384xf32>
    %157 = vector.broadcast %130 : vector<1x384xf32> to vector<2x384xf32>
    %158 = arith.addf %156, %157 : vector<2x384xf32>
    %c7_66 = arith.constant 7 : index
    %c384_67 = arith.constant 384 : index
    %159 = vector.load %arg7[%c7_66, %c384_67] : memref<10x1024xf32, #tpu.memory_space<vmem>>, vector<1x384xf32>
    %c8_68 = arith.constant 8 : index
    %c384_69 = arith.constant 384 : index
    %160 = vector.load %arg7[%c8_68, %c384_69] : memref<10x1024xf32, #tpu.memory_space<vmem>>, vector<1x384xf32>
    %cst_70 = arith.constant dense<0.000000e+00> : vector<2xf32>
    %161 = vector.multi_reduction <add>, %128, %cst_70 [1] : vector<2x384xf32> to vector<2xf32>
    %162 = vector.shape_cast %161 : vector<2xf32> to vector<2x1xf32>
    %cst_71 = arith.constant 0.00333333341 : f32
    %163 = vector.broadcast %cst_71 : f32 to vector<2x1xf32>
    %164 = arith.mulf %162, %163 : vector<2x1xf32>
    %165 = tpu.iota {dimensions = array<i32: 1>} : vector<1x384xi32>
    %c300_i32_72 = arith.constant 300 : i32
    %166 = vector.broadcast %c300_i32_72 : i32 to vector<1x384xi32>
    %167 = arith.cmpi slt, %165, %166 : vector<1x384xi32>
    %168 = arith.extui %167 : vector<1x384xi1> to vector<1x384xi32>
    %169 = arith.sitofp %168 : vector<1x384xi32> to vector<1x384xf32>
    %170 = vector.broadcast %164 : vector<2x1xf32> to vector<2x384xf32>
    %171 = arith.subf %128, %170 : vector<2x384xf32>
    %172 = vector.broadcast %169 : vector<1x384xf32> to vector<2x384xf32>
    %173 = arith.mulf %171, %172 : vector<2x384xf32>
    %174 = arith.mulf %173, %173 : vector<2x384xf32>
    %cst_73 = arith.constant dense<0.000000e+00> : vector<2xf32>
    %175 = vector.multi_reduction <add>, %174, %cst_73 [1] : vector<2x384xf32> to vector<2xf32>
    %176 = vector.shape_cast %175 : vector<2xf32> to vector<2x1xf32>
    %cst_74 = arith.constant 0.00334448158 : f32
    %177 = vector.broadcast %cst_74 : f32 to vector<2x1xf32>
    %178 = arith.mulf %176, %177 : vector<2x1xf32>
    %179 = math.sqrt %178 : vector<2x1xf32>
    %cst_75 = arith.constant 9.99999997E-7 : f32
    %180 = vector.broadcast %cst_75 : f32 to vector<2x1xf32>
    %181 = arith.addf %179, %180 : vector<2x1xf32>
    %182 = tpu.reciprocal %181 {approx = true} : vector<2x1xf32> -> vector<2x1xf32>
    %183 = vector.broadcast %182 : vector<2x1xf32> to vector<2x384xf32>
    %184 = arith.mulf %173, %183 : vector<2x384xf32>
    %185 = vector.broadcast %159 : vector<1x384xf32> to vector<2x384xf32>
    %186 = arith.mulf %185, %184 : vector<2x384xf32>
    %187 = vector.broadcast %160 : vector<1x384xf32> to vector<2x384xf32>
    %188 = arith.addf %186, %187 : vector<2x384xf32>
    %cst_76 = arith.constant 0.000000e+00 : f32
    %189 = vector.broadcast %cst_76 : f32 to vector<2x384xf32>
    %190 = arith.cmpf oge, %158, %189 : vector<2x384xf32>
    %cst_77 = arith.constant 0.00999999977 : f32
    %191 = vector.broadcast %cst_77 : f32 to vector<2x384xf32>
    %192 = arith.mulf %191, %158 : vector<2x384xf32>
    %193 = arith.select %190, %158, %192 : vector<2x384xi1>, vector<2x384xf32>
    %cst_78 = arith.constant 0.000000e+00 : f32
    %194 = vector.broadcast %cst_78 : f32 to vector<2x384xf32>
    %195 = arith.cmpf oge, %188, %194 : vector<2x384xf32>
    %cst_79 = arith.constant 0.00999999977 : f32
    %196 = vector.broadcast %cst_79 : f32 to vector<2x384xf32>
    %197 = arith.mulf %196, %188 : vector<2x384xf32>
    %198 = arith.select %195, %188, %197 : vector<2x384xi1>, vector<2x384xf32>
    %c0_80 = arith.constant 0 : index
    %c0_81 = arith.constant 0 : index
    %199 = vector.load %arg6[%c0_80, %c0_81] : memref<768x128xbf16, #tpu.memory_space<vmem>>, vector<384x128xbf16>
    %200 = arith.truncf %193 : vector<2x384xf32> to vector<2x384xbf16>
    %cst_82 = arith.constant dense<0.000000e+00> : vector<2x128xf32>
    %201 = tpu.matmul %200, %199, %cst_82 {dimension_numbers = #tpu.dot_dimension_numbers<[1], [0], [0], [1], [0, 0, 1, 1], [], []>} : vector<2x384xbf16>, vector<384x128xbf16>, vector<2x128xf32> -> vector<2x128xf32>
    %c384_83 = arith.constant 384 : index
    %c0_84 = arith.constant 0 : index
    %202 = vector.load %arg6[%c384_83, %c0_84] : memref<768x128xbf16, #tpu.memory_space<vmem>>, vector<384x128xbf16>
    %203 = arith.truncf %198 : vector<2x384xf32> to vector<2x384xbf16>
    %cst_85 = arith.constant dense<0.000000e+00> : vector<2x128xf32>
    %204 = tpu.matmul %203, %202, %cst_85 {dimension_numbers = #tpu.dot_dimension_numbers<[1], [0], [0], [1], [0, 0, 1, 1], [], []>} : vector<2x384xbf16>, vector<384x128xbf16>, vector<2x128xf32> -> vector<2x128xf32>
    %205 = arith.addf %201, %204 : vector<2x128xf32>
    %c9 = arith.constant 9 : index
    %c0_86 = arith.constant 0 : index
    %206 = vector.load %arg7[%c9, %c0_86] : memref<10x1024xf32, #tpu.memory_space<vmem>>, vector<1x128xf32>
    %207 = vector.broadcast %206 : vector<1x128xf32> to vector<2x128xf32>
    %208 = arith.addf %205, %207 : vector<2x128xf32>
    %c0_87 = arith.constant 0 : index
    %c0_88 = arith.constant 0 : index
    %209 = vector.load %arg8[%c0_87, %c0_88] : memref<2x128xf32, #tpu.memory_space<vmem>>, vector<2x128xf32>
    tpu.vector_store %arg8[%c0_87, %c0_88], %208 {strides = array<i32>} : memref<2x128xf32, #tpu.memory_space<vmem>>, vector<2x128xf32>,
    return
  }
  func.func @transform_0(%arg0: i32) -> (i32, i32) {
    %c0_i32 = arith.constant 0 : i32
    %c0_i32_0 = arith.constant 0 : i32
    return %arg0, %c0_i32 : i32, i32
  }
  func.func @transform_1(%arg0: i32) -> (i32, i32) {
    %c0_i32 = arith.constant 0 : i32
    %c0_i32_0 = arith.constant 0 : i32
    return %arg0, %c0_i32 : i32, i32
  }
  func.func @transform_2(%arg0: i32) -> (i32, i32) {
    %c0_i32 = arith.constant 0 : i32
    %c0_i32_0 = arith.constant 0 : i32
    %c0_i32_1 = arith.constant 0 : i32
    return %c0_i32, %c0_i32_0 : i32, i32
  }
  func.func @transform_3(%arg0: i32) -> (i32, i32) {
    %c0_i32 = arith.constant 0 : i32
    %c0_i32_0 = arith.constant 0 : i32
    %c0_i32_1 = arith.constant 0 : i32
    return %c0_i32, %c0_i32_0 : i32, i32
  }
  func.func @transform_4(%arg0: i32) -> (i32, i32) {
    %c0_i32 = arith.constant 0 : i32
    %c0_i32_0 = arith.constant 0 : i32
    %c0_i32_1 = arith.constant 0 : i32
    return %c0_i32, %c0_i32_0 : i32, i32
  }
  func.func @transform_5(%arg0: i32) -> (i32, i32) {
    %c0_i32 = arith.constant 0 : i32
    %c0_i32_0 = arith.constant 0 : i32
    %c0_i32_1 = arith.constant 0 : i32
    return %c0_i32, %c0_i32_0 : i32, i32
  }
  func.func @transform_6(%arg0: i32) -> (i32, i32) {
    %c0_i32 = arith.constant 0 : i32
    %c0_i32_0 = arith.constant 0 : i32
    %c0_i32_1 = arith.constant 0 : i32
    return %c0_i32, %c0_i32_0 : i32, i32
  }
  func.func @transform_7(%arg0: i32) -> (i32, i32) {
    %c0_i32 = arith.constant 0 : i32
    %c0_i32_0 = arith.constant 0 : i32
    return %arg0, %c0_i32 : i32, i32
  }
}

</mosaic_0001>

<llo_original>
// kernel: tpu_custom_call.1
$region0: #{tpu_custom_call.1}
  #allocation0 [shape = 'u32[]', space=smem, size = 0x4, offset = 0x4, fixed_abs, tag = 'smem constant byte address 0x4 - core index']
  #allocation1 [shape = 'u32[144,128]{1,0:T(1,128)}', space=vmem, size = 0x12000, scoped, tag = 'internal scratch']
  %s0 = inlined_call_operand.hbm [shape: bf16[2,16], index: 0, kind: input, shape index: {}]
  %s1 = inlined_call_operand.vmem [shape: bf16[2,64], index: 1, kind: input, shape index: {}]
  %s2 = inlined_call_operand.hbm [shape: bf16[320,128], index: 2, kind: input, shape index: {}]
  %s3 = inlined_call_operand.hbm [shape: bf16[48,1024], index: 3, kind: input, shape index: {}]
  %s4 = inlined_call_operand.hbm [shape: bf16[1024,384], index: 4, kind: input, shape index: {}]
  %s5 = inlined_call_operand.hbm [shape: bf16[768,128], index: 5, kind: input, shape index: {}]
  %s6 = inlined_call_operand.hbm [shape: f32[10,1024], index: 6, kind: input, shape index: {}]
  %s7 = inlined_call_operand.hbm [shape: f32[2,128], index: 7, kind: output, shape index: {}]
  %s8 = sld [smem:[#allocation0]]
  $region62: #{tpu_custom_call.1} parent=0
    _
  %s10 = ssub.s32 1, %s8
  %s11 = scalar_select 0, %s10, %s8
  $region1: #{tpu_custom_call.1} parent=0
    #allocation2 [shape = 'u8[512]{0}', space=vmem, size = 0x400, scoped, tag = 'input window, operand 0, single buffered']
    #allocation3 [shape = 's32[1]{0}', space=sflag, size = 0x4, scoped, tag = 'scoped memory for tpu_custom_call.1']
    #allocation4 [shape = 's32[1]{0}', space=sflag, size = 0x4, scoped, tag = 'scoped memory for tpu_custom_call.1']
    #allocation5 [shape = 'u8[81920]{0}', space=vmem, size = 0x14000, scoped, tag = 'input window, operand 2, single buffered']
    #allocation6 [shape = 's32[1]{0}', space=sflag, size = 0x4, scoped, tag = 'scoped memory for tpu_custom_call.1']
    #allocation7 [shape = 'u8[98304]{0}', space=vmem, size = 0x18000, scoped, tag = 'input window, operand 3, single buffered']
    #allocation8 [shape = 'u8[786432]{0}', space=vmem, size = 0xc0000, scoped, tag = 'input window, operand 4, single buffered']
    #allocation9 [shape = 's32[1]{0}', space=sflag, size = 0x4, scoped, tag = 'scoped memory for tpu_custom_call.1']
    #allocation10 [shape = 'u8[196608]{0}', space=vmem, size = 0x30000, scoped, tag = 'input window, operand 5, single buffered']
    #allocation11 [shape = 'u8[65536]{0}', space=vmem, size = 0x10000, scoped, tag = 'input window, operand 6, single buffered']
    #allocation12 [shape = 's32[1]{0}', space=sflag, size = 0x4, scoped, tag = 'scoped memory for tpu_custom_call.1']
    #allocation13 [shape = 'u8[1024]{0}', space=vmem, size = 0x400, scoped, tag = 'output window, operand 0, single buffered']
    %12 = vsyncpa [#allocation3], 0
    %13 = vsyncpa [#allocation6], 0
    %14 = vsyncpa [#allocation9], 0
    %15 = vsyncpa [#allocation12], 0
    %16 = vsyncpa [#allocation4], 0
    // Predicated region
    $region2: #{tpu_custom_call.1} parent=1 // pred_check
      _
    $region3: #{tpu_custom_call.1} parent=1 // pred_check_branch
      %18 = sbr.rel (0) target = $region5
    $region4: #{tpu_custom_call.1} parent=1 // pred_region
      %s20 = ssub.s32 16, 16
      %21 = vsyncadd [#allocation3], %s20
      %s23 = sshll.u32 [#allocation2], 4
      %s24 = int_to_ptr.vmem [resolvable:$true] %s23
      %26 = dma.hbm_to_vmem [thread:$0]  %s0, 16, %s24, [#allocation3]
    $region5: #{tpu_custom_call.1} parent=1 // pred_fallthru
      _
    // Predicated region
    $region6: #{tpu_custom_call.1} parent=1 // pred_check
      _
    $region7: #{tpu_custom_call.1} parent=1 // pred_check_branch
      %28 = sbr.rel (0) target = $region9
    $region8: #{tpu_custom_call.1} parent=1 // pred_region
      _
    $region9: #{tpu_custom_call.1} parent=1 // pred_fallthru
      _
    // Predicated region
    $region10: #{tpu_custom_call.1} parent=1 // pred_check
      _
    $region11: #{tpu_custom_call.1} parent=1 // pred_check_branch
      %30 = sbr.rel (0) target = $region13
    $region12: #{tpu_custom_call.1} parent=1 // pred_region
      %s32 = ssub.s32 2560, 2560
      %33 = vsyncadd [#allocation6], %s32
      %s34 = sshll.u32 [#allocation5], 4
      %s35 = int_to_ptr.vmem [resolvable:$true] %s34
      %40 = dma.hbm_to_vmem [thread:$0]  %s2, 2560, %s35, [#allocation6], 64, 64, 4
    $region13: #{tpu_custom_call.1} parent=1 // pred_fallthru
      _
    // Predicated region
    $region14: #{tpu_custom_call.1} parent=1 // pred_check
      _
    $region15: #{tpu_custom_call.1} parent=1 // pred_check_branch
      %42 = sbr.rel (0) target = $region17
    $region16: #{tpu_custom_call.1} parent=1 // pred_region
      %s44 = ssub.s32 3072, 3072
      %45 = vsyncadd [#allocation6], %s44
      %s46 = sshll.u32 [#allocation7], 4
      %s47 = int_to_ptr.vmem [resolvable:$true] %s46
      %52 = dma.hbm_to_vmem [thread:$0]  %s3, 3072, %s47, [#allocation6], 512, 512, 32
    $region17: #{tpu_custom_call.1} parent=1 // pred_fallthru
      _
    // Predicated region
    $region18: #{tpu_custom_call.1} parent=1 // pred_check
      _
    $region19: #{tpu_custom_call.1} parent=1 // pred_check_branch
      %54 = sbr.rel (0) target = $region21
    $region20: #{tpu_custom_call.1} parent=1 // pred_region
      %s56 = ssub.s32 24576, 24576
      %57 = vsyncadd [#allocation9], %s56
      %s58 = sshll.u32 [#allocation8], 4
      %s59 = int_to_ptr.vmem [resolvable:$true] %s58
      %64 = dma.hbm_to_vmem [thread:$0]  %s4, 24576, %s59, [#allocation9], 192, 192, 12
    $region21: #{tpu_custom_call.1} parent=1 // pred_fallthru
      _
    // Predicated region
    $region22: #{tpu_custom_call.1} parent=1 // pred_check
      _
    $region23: #{tpu_custom_call.1} parent=1 // pred_check_branch
      %66 = sbr.rel (0) target = $region25
    $region24: #{tpu_custom_call.1} parent=1 // pred_region
      %s68 = ssub.s32 6144, 6144
      %69 = vsyncadd [#allocation9], %s68
      %s70 = sshll.u32 [#allocation10], 4
      %s71 = int_to_ptr.vmem [resolvable:$true] %s70
      %76 = dma.hbm_to_vmem [thread:$0]  %s5, 6144, %s71, [#allocation9], 64, 64, 4
    $region25: #{tpu_custom_call.1} parent=1 // pred_fallthru
      _
    // Predicated region
    $region26: #{tpu_custom_call.1} parent=1 // pred_check
      _
    $region27: #{tpu_custom_call.1} parent=1 // pred_check_branch
      %78 = sbr.rel (0) target = $region29
    $region28: #{tpu_custom_call.1} parent=1 // pred_region
      %s80 = ssub.s32 2048, 2048
      %81 = vsyncadd [#allocation12], %s80
      %s82 = sshll.u32 [#allocation11], 4
      %s83 = int_to_ptr.vmem [resolvable:$true] %s82
      %88 = dma.hbm_to_vmem [thread:$0]  %s6, 2048, %s83, [#allocation12], 1024, 1024, 64
    $region29: #{tpu_custom_call.1} parent=1 // pred_fallthru
      _
    // Predicated region
    $region30: #{tpu_custom_call.1} parent=1 // pred_check
      _
    $region31: #{tpu_custom_call.1} parent=1 // pred_check_branch
      %90 = sbr.rel (0) target = $region33
    $region32: #{tpu_custom_call.1} parent=1 // pred_region
      %91 = dma.done [#allocation3], 16
    $region33: #{tpu_custom_call.1} parent=1 // pred_fallthru
      _
    // Predicated region
    $region34: #{tpu_custom_call.1} parent=1 // pred_check
      _
    $region35: #{tpu_custom_call.1} parent=1 // pred_check_branch
      %93 = sbr.rel (0) target = $region37
    $region36: #{tpu_custom_call.1} parent=1 // pred_region
      %94 = dma.done [#allocation6], 2560
    $region37: #{tpu_custom_call.1} parent=1 // pred_fallthru
      _
    // Predicated region
    $region38: #{tpu_custom_call.1} parent=1 // pred_check
      _
    $region39: #{tpu_custom_call.1} parent=1 // pred_check_branch
      %96 = sbr.rel (0) target = $region41
    $region40: #{tpu_custom_call.1} parent=1 // pred_region
      %97 = dma.done [#allocation6], 3072
    $region41: #{tpu_custom_call.1} parent=1 // pred_fallthru
      _
    // Predicated region
    $region42: #{tpu_custom_call.1} parent=1 // pred_check
      _
    $region43: #{tpu_custom_call.1} parent=1 // pred_check_branch
      %99 = sbr.rel (0) target = $region45
    $region44: #{tpu_custom_call.1} parent=1 // pred_region
      %100 = dma.done [#allocation9], 24576
    $region45: #{tpu_custom_call.1} parent=1 // pred_fallthru
      _
    // Predicated region
    $region46: #{tpu_custom_call.1} parent=1 // pred_check
      _
    $region47: #{tpu_custom_call.1} parent=1 // pred_check_branch
      %102 = sbr.rel (0) target = $region49
    $region48: #{tpu_custom_call.1} parent=1 // pred_region
      %103 = dma.done [#allocation9], 6144
    $region49: #{tpu_custom_call.1} parent=1 // pred_fallthru
      _
    // Predicated region
    $region50: #{tpu_custom_call.1} parent=1 // pred_check
      _
    $region51: #{tpu_custom_call.1} parent=1 // pred_check_branch
      %105 = sbr.rel (0) target = $region53
    $region52: #{tpu_custom_call.1} parent=1 // pred_region
      %106 = dma.done [#allocation12], 2048
    $region53: #{tpu_custom_call.1} parent=1 // pred_fallthru
      _
    %v108 = vld [vmem:[#allocation2] sm:$0x1]
    %v109 = vld [vmem:[%s1] sm:$0x1]
    %v110 = vld [vmem:[#allocation5] sm:$0xf]
    %v111 = vld [vmem:[#allocation5 + $0x4] sm:$0xf]
    %v112 = vld [vmem:[#allocation5 + $0x8] sm:$0xf]
    %v113 = vld [vmem:[#allocation5 + $0xc] sm:$0xf]
    %v114 = vld [vmem:[#allocation5 + $0x10] sm:$0xf]
    %v115 = vld [vmem:[#allocation5 + $0x14] sm:$0xf]
    %v116 = vld [vmem:[#allocation5 + $0x18] sm:$0xf]
    %v117 = vld [vmem:[#allocation5 + $0x1c] sm:$0xf]
    %v118 = vld [vmem:[#allocation11] ss:$0 sm:$0xff]
    %v127 = vunpack.c.l.b16 %v110
    %v128 = vunpack.c.l.b16 %v111
    %v129 = vunpack.c.l.b16 %v112
    %v130 = vunpack.c.l.b16 %v113
    %v131 = vunpack.c.l.b16 %v114
    %v132 = vunpack.c.l.b16 %v115
    %v133 = vunpack.c.l.b16 %v116
    %v134 = vunpack.c.l.b16 %v117
    %v135 = vpack.c.b16 %v128, %v127
    %v136 = vpack.c.b16 %v130, %v129
    %v137 = vpack.c.b16 %v132, %v131
    %v138 = vpack.c.b16 %v134, %v133
    %vm143 = vcmask 523264
    %v145 = vsel %vm143, %v109, 0
    %147 = vmatprep.subr.bf16.mxu0 0
    %148 = vmatpush1.bf16.msra.mxu0 %v135
    %149 = vmatprep.subr.bf16.mxu0 0
    %150 = vmatpush1.bf16.msra.mxu0 %v136
    %151 = vmatprep.subr.bf16.mxu0 0
    %152 = vmatpush1.bf16.msra.mxu0 %v137
    %153 = vmatprep.subr.bf16.mxu0 0
    %154 = vmatpush1.bf16.msra.mxu0 %v138
    %155 = vmatprep.subr.bf16.mxu0 0
    %156 = vmatpush1.bf16.msra.mxu0 0
    %157 = vmatprep.subr.bf16.mxu0 0
    %158 = vmatpush1.bf16.msra.mxu0 0
    %159 = vmatprep.subr.bf16.mxu0 0
    %160 = vmatpush1.bf16.msra.mxu0 0
    %161 = vmatprep.subr.bf16.mxu0 0
    %162 = vmatpush1.bf16.msra.mxu0 0
    %163 = vmatprep.subr.bf16.mxu0 0
    %164 = vmatpush1.bf16.msra.mxu0 0
    %165 = vmatprep.subr.bf16.mxu0 0
    %166 = vmatpush1.bf16.msra.mxu0 0
    %167 = vmatprep.subr.bf16.mxu0 0
    %168 = vmatpush1.bf16.msra.mxu0 0
    %169 = vmatprep.subr.bf16.mxu0 0
    %170 = vmatpush1.bf16.msra.mxu0 0
    %171 = vmatprep.subr.bf16.mxu0 0
    %172 = vmatpush1.bf16.msra.mxu0 0
    %173 = vmatprep.subr.bf16.mxu0 0
    %174 = vmatpush1.bf16.msra.mxu0 0
    %175 = vmatprep.subr.bf16.mxu0 0
    %176 = vmatpush1.bf16.msra.mxu0 0
    %177 = vmatprep.subr.bf16.mxu0 0
    %178 = vmatpush1.bf16.msra.mxu0 0
    %179 = vmatprep.mubr.bf16.mxu0 0
    %180 = vmatmul.mubr.bf16.gmra.mrb[0].mxu0 %v145
    %v181 = vpop.f32.mrb[0].mxu0
    %v182 = vadd.f32 %v118, %v181
    %v183 = vpop.f32.mrb[0].mxu0
    %v184 = vpop.f32.mrb[0].mxu0
    %v185 = vpop.f32.mrb[0].mxu0
    %186 = vdwg.mxu0
    %vm187 = vcmp.ge.f32.partialorder %v182, 0.0
    %v188 = vmul.f32 %v182, 0.01
    %v189 = vsel %vm187, %v182, %v188
    %v190 = vld [vmem:[#allocation5 + $0x20] sm:$0xf]
    %v191 = vld [vmem:[#allocation5 + $0x24] sm:$0xf]
    %v192 = vld [vmem:[#allocation5 + $0x28] sm:$0xf]
    %v193 = vld [vmem:[#allocation5 + $0x2c] sm:$0xf]
    %v194 = vld [vmem:[#allocation5 + $0x30] sm:$0xf]
    %v195 = vld [vmem:[#allocation5 + $0x34] sm:$0xf]
    %v196 = vld [vmem:[#allocation5 + $0x38] sm:$0xf]
    %v197 = vld [vmem:[#allocation5 + $0x3c] sm:$0xf]
    %v198 = vld [vmem:[#allocation5 + $0x40] sm:$0xf]
    %v199 = vld [vmem:[#allocation5 + $0x44] sm:$0xf]
    %v200 = vld [vmem:[#allocation5 + $0x48] sm:$0xf]
    %v201 = vld [vmem:[#allocation5 + $0x4c] sm:$0xf]
    %v202 = vld [vmem:[#allocation5 + $0x50] sm:$0xf]
    %v203 = vld [vmem:[#allocation5 + $0x54] sm:$0xf]
    %v204 = vld [vmem:[#allocation5 + $0x58] sm:$0xf]
    %v205 = vld [vmem:[#allocation5 + $0x5c] sm:$0xf]
    %v206 = vpack.c.bf16 %v189, %v189
    %v207 = vld [vmem:[#allocation11 + $0x1] ss:$0 sm:$0xff]
    %v224 = vunpack.c.l.b16 %v190
    %v225 = vunpack.c.l.b16 %v191
    %v226 = vunpack.c.l.b16 %v192
    %v227 = vunpack.c.l.b16 %v193
    %v228 = vunpack.c.l.b16 %v194
    %v229 = vunpack.c.l.b16 %v195
    %v230 = vunpack.c.l.b16 %v196
    %v231 = vunpack.c.l.b16 %v197
    %v232 = vunpack.c.l.b16 %v198
    %v233 = vunpack.c.l.b16 %v199
    %v234 = vunpack.c.l.b16 %v200
    %v235 = vunpack.c.l.b16 %v201
    %v236 = vunpack.c.l.b16 %v202
    %v237 = vunpack.c.l.b16 %v203
    %v238 = vunpack.c.l.b16 %v204
    %v239 = vunpack.c.l.b16 %v205
    %v240 = vpack.c.b16 %v225, %v224
    %v241 = vpack.c.b16 %v227, %v226
    %v242 = vpack.c.b16 %v229, %v228
    %v243 = vpack.c.b16 %v231, %v230
    %v244 = vpack.c.b16 %v233, %v232
    %v245 = vpack.c.b16 %v235, %v234
    %v246 = vpack.c.b16 %v237, %v236
    %v247 = vpack.c.b16 %v239, %v238
    %256 = vmatprep.subr.bf16.mxu0 0
    %257 = vmatpush1.bf16.msra.mxu0 %v240
    %258 = vmatprep.subr.bf16.mxu0 0
    %259 = vmatpush1.bf16.msra.mxu0 %v241
    %260 = vmatprep.subr.bf16.mxu0 0
    %261 = vmatpush1.bf16.msra.mxu0 %v242
    %262 = vmatprep.subr.bf16.mxu0 0
    %263 = vmatpush1.bf16.msra.mxu0 %v243
    %264 = vmatprep.subr.bf16.mxu0 0
    %265 = vmatpush1.bf16.msra.mxu0 %v244
    %266 = vmatprep.subr.bf16.mxu0 0
    %267 = vmatpush1.bf16.msra.mxu0 %v245
    %268 = vmatprep.subr.bf16.mxu0 0
    %269 = vmatpush1.bf16.msra.mxu0 %v246
    %270 = vmatprep.subr.bf16.mxu0 0
    %271 = vmatpush1.bf16.msra.mxu0 %v247
    %272 = vmatprep.subr.bf16.mxu0 0
    %273 = vmatpush1.bf16.msra.mxu0 0
    %274 = vmatprep.subr.bf16.mxu0 0
    %275 = vmatpush1.bf16.msra.mxu0 0
    %276 = vmatprep.subr.bf16.mxu0 0
    %277 = vmatpush1.bf16.msra.mxu0 0
    %278 = vmatprep.subr.bf16.mxu0 0
    %279 = vmatpush1.bf16.msra.mxu0 0
    %280 = vmatprep.subr.bf16.mxu0 0
    %281 = vmatpush1.bf16.msra.mxu0 0
    %282 = vmatprep.subr.bf16.mxu0 0
    %283 = vmatpush1.bf16.msra.mxu0 0
    %284 = vmatprep.subr.bf16.mxu0 0
    %285 = vmatpush1.bf16.msra.mxu0 0
    %286 = vmatprep.subr.bf16.mxu0 0
    %287 = vmatpush1.bf16.msra.mxu0 0
    %288 = vmatprep.mubr.bf16.mxu0 0
    %289 = vmatmul.mubr.bf16.gmra.mrb[0].mxu0 %v206
    %v290 = vpop.f32.mrb[0].mxu0
    %v291 = vadd.f32 %v207, %v290
    %v292 = vpop.f32.mrb[0].mxu0
    %v293 = vpop.f32.mrb[0].mxu0
    %v294 = vpop.f32.mrb[0].mxu0
    %295 = vdwg.mxu0
    %vm296 = vcmp.ge.f32.partialorder %v291, 0.0
    %v297 = vmul.f32 %v291, 0.01
    %v298 = vsel %vm296, %v291, %v297
    %v299 = vld [vmem:[#allocation5 + $0x60] sm:$0xf]
    %v300 = vld [vmem:[#allocation5 + $0x64] sm:$0xf]
    %v301 = vld [vmem:[#allocation5 + $0x68] sm:$0xf]
    %v302 = vld [vmem:[#allocation5 + $0x6c] sm:$0xf]
    %v303 = vld [vmem:[#allocation5 + $0x70] sm:$0xf]
    %v304 = vld [vmem:[#allocation5 + $0x74] sm:$0xf]
    %v305 = vld [vmem:[#allocation5 + $0x78] sm:$0xf]
    %v306 = vld [vmem:[#allocation5 + $0x7c] sm:$0xf]
    %v307 = vld [vmem:[#allocation5 + $0x80] sm:$0xf]
    %v308 = vld [vmem:[#allocation5 + $0x84] sm:$0xf]
    %v309 = vld [vmem:[#allocation5 + $0x88] sm:$0xf]
    %v310 = vld [vmem:[#allocation5 + $0x8c] sm:$0xf]
    %v311 = vld [vmem:[#allocation5 + $0x90] sm:$0xf]
    %v312 = vld [vmem:[#allocation5 + $0x94] sm:$0xf]
    %v313 = vld [vmem:[#allocation5 + $0x98] sm:$0xf]
    %v314 = vld [vmem:[#allocation5 + $0x9c] sm:$0xf]
    %v315 = vpack.c.bf16 %v298, %v298
    %v316 = vld [vmem:[#allocation11 + $0x2] ss:$0 sm:$0xff]
    %v333 = vunpack.c.l.b16 %v299
    %v334 = vunpack.c.l.b16 %v300
    %v335 = vunpack.c.l.b16 %v301
    %v336 = vunpack.c.l.b16 %v302
    %v337 = vunpack.c.l.b16 %v303
    %v338 = vunpack.c.l.b16 %v304
    %v339 = vunpack.c.l.b16 %v305
    %v340 = vunpack.c.l.b16 %v306
    %v341 = vunpack.c.l.b16 %v307
    %v342 = vunpack.c.l.b16 %v308
    %v343 = vunpack.c.l.b16 %v309
    %v344 = vunpack.c.l.b16 %v310
    %v345 = vunpack.c.l.b16 %v311
    %v346 = vunpack.c.l.b16 %v312
    %v347 = vunpack.c.l.b16 %v313
    %v348 = vunpack.c.l.b16 %v314
    %v349 = vpack.c.b16 %v334, %v333
    %v350 = vpack.c.b16 %v336, %v335
    %v351 = vpack.c.b16 %v338, %v337
    %v352 = vpack.c.b16 %v340, %v339
    %v353 = vpack.c.b16 %v342, %v341
    %v354 = vpack.c.b16 %v344, %v343
    %v355 = vpack.c.b16 %v346, %v345
    %v356 = vpack.c.b16 %v348, %v347
    %365 = vmatprep.subr.bf16.mxu0 0
    %366 = vmatpush1.bf16.msra.mxu0 %v349
    %367 = vmatprep.subr.bf16.mxu0 0
    %368 = vmatpush1.bf16.msra.mxu0 %v350
    %369 = vmatprep.subr.bf16.mxu0 0
    %370 = vmatpush1.bf16.msra.mxu0 %v351
    %371 = vmatprep.subr.bf16.mxu0 0
    %372 = vmatpush1.bf16.msra.mxu0 %v352
    %373 = vmatprep.subr.bf16.mxu0 0
    %374 = vmatpush1.bf16.msra.mxu0 %v353
    %375 = vmatprep.subr.bf16.mxu0 0
    %376 = vmatpush1.bf16.msra.mxu0 %v354
    %377 = vmatprep.subr.bf16.mxu0 0
    %378 = vmatpush1.bf16.msra.mxu0 %v355
    %379 = vmatprep.subr.bf16.mxu0 0
    %380 = vmatpush1.bf16.msra.mxu0 %v356
    %381 = vmatprep.subr.bf16.mxu0 0
    %382 = vmatpush1.bf16.msra.mxu0 0
    %383 = vmatprep.subr.bf16.mxu0 0
    %384 = vmatpush1.bf16.msra.mxu0 0
    %385 = vmatprep.subr.bf16.mxu0 0
    %386 = vmatpush1.bf16.msra.mxu0 0
    %387 = vmatprep.subr.bf16.mxu0 0
    %388 = vmatpush1.bf16.msra.mxu0 0
    %389 = vmatprep.subr.bf16.mxu0 0
    %390 = vmatpush1.bf16.msra.mxu0 0
    %391 = vmatprep.subr.bf16.mxu0 0
    %392 = vmatpush1.bf16.msra.mxu0 0
    %393 = vmatprep.subr.bf16.mxu0 0
    %394 = vmatpush1.bf16.msra.mxu0 0
    %395 = vmatprep.subr.bf16.mxu0 0
    %396 = vmatpush1.bf16.msra.mxu0 0
    %397 = vmatprep.mubr.bf16.mxu0 0
    %398 = vmatmul.mubr.bf16.gmra.mrb[0].mxu0 %v315
    %v399 = vpop.f32.mrb[0].mxu0
    %v400 = vadd.f32 %v316, %v399
    %v401 = vpop.f32.mrb[0].mxu0
    %v402 = vpop.f32.mrb[0].mxu0
    %v403 = vpop.f32.mrb[0].mxu0
    %404 = vdwg.mxu0
    %v405 = vld [vmem:[#allocation7] sm:$0xff]
    %v406 = vld [vmem:[#allocation7 + $0x8] sm:$0xff]
    %v407 = vld [vmem:[#allocation7 + $0x20] sm:$0xff]
    %v408 = vld [vmem:[#allocation7 + $0x28] sm:$0xff]
    %v409 = vld [vmem:[#allocation7 + $0x40] sm:$0xff]
    %v410 = vld [vmem:[#allocation7 + $0x48] sm:$0xff]
    %v411 = vld [vmem:[#allocation7 + $0x60] sm:$0xff]
    %v412 = vld [vmem:[#allocation7 + $0x68] sm:$0xff]
    %v413 = vld [vmem:[#allocation7 + $0x80] sm:$0xff]
    %v414 = vld [vmem:[#allocation7 + $0x88] sm:$0xff]
    %v415 = vld [vmem:[#allocation7 + $0xa0] sm:$0xff]
    %v416 = vld [vmem:[#allocation7 + $0xa8] sm:$0xff]
    %v417 = vpack.c.bf16 %v400, %v400
    %v426 = vunpack.c.l.b16 %v409
    %v427 = vunpack.c.h.b16 %v409
    %v428 = vunpack.c.l.b16 %v410
    %v429 = vunpack.c.h.b16 %v410
    %v430 = vunpack.c.l.b16 %v411
    %v431 = vunpack.c.h.b16 %v411
    %v432 = vunpack.c.l.b16 %v412
    %v433 = vunpack.c.h.b16 %v412
    %v434 = vunpack.c.l.b16 %v413
    %v435 = vunpack.c.h.b16 %v413
    %v436 = vunpack.c.l.b16 %v414
    %v437 = vunpack.c.h.b16 %v414
    %v438 = vunpack.c.l.b16 %v415
    %v439 = vunpack.c.h.b16 %v415
    %v440 = vunpack.c.l.b16 %v416
    %v441 = vunpack.c.h.b16 %v416
    %v442 = vpack.c.b16 %v430, %v426
    %v443 = vpack.c.b16 %v431, %v427
    %v444 = vpack.c.b16 %v432, %v428
    %v445 = vpack.c.b16 %v433, %v429
    %v446 = vpack.c.b16 %v438, %v434
    %v447 = vpack.c.b16 %v439, %v435
    %v448 = vpack.c.b16 %v440, %v436
    %v449 = vpack.c.b16 %v441, %v437
    %vm458 = vcmask 261120
    %v460 = vsel %vm458, %v417, 0
    %462 = vmatprep.subr.bf16.mxu0 %v443
    %463 = vmatpush1.bf16.msra.mxu0 %v442
    %464 = vmatprep.subr.bf16.mxu0 %v447
    %465 = vmatpush1.bf16.msra.mxu0 %v446
    %466 = vmatprep.subr.bf16.mxu0 0
    %467 = vmatpush1.bf16.msra.mxu0 0
    %468 = vmatprep.subr.bf16.mxu0 0
    %469 = vmatpush1.bf16.msra.mxu0 0
    %470 = vmatprep.subr.bf16.mxu0 0
    %471 = vmatpush1.bf16.msra.mxu0 0
    %472 = vmatprep.subr.bf16.mxu0 0
    %473 = vmatpush1.bf16.msra.mxu0 0
    %474 = vmatprep.subr.bf16.mxu0 0
    %475 = vmatpush1.bf16.msra.mxu0 0
    %476 = vmatprep.subr.bf16.mxu0 0
    %477 = vmatpush1.bf16.msra.mxu0 0
    %478 = vmatprep.subr.bf16.mxu0 0
    %479 = vmatpush1.bf16.msra.mxu0 0
    %480 = vmatprep.subr.bf16.mxu0 0
    %481 = vmatpush1.bf16.msra.mxu0 0
    %482 = vmatprep.subr.bf16.mxu0 0
    %483 = vmatpush1.bf16.msra.mxu0 0
    %484 = vmatprep.subr.bf16.mxu0 0
    %485 = vmatpush1.bf16.msra.mxu0 0
    %486 = vmatprep.subr.bf16.mxu0 0
    %487 = vmatpush1.bf16.msra.mxu0 0
    %488 = vmatprep.subr.bf16.mxu0 0
    %489 = vmatpush1.bf16.msra.mxu0 0
    %490 = vmatprep.subr.bf16.mxu0 0
    %491 = vmatpush1.bf16.msra.mxu0 0
    %492 = vmatprep.subr.bf16.mxu0 0
    %493 = vmatpush1.bf16.msra.mxu0 0
    %494 = vmatprep.mubr.bf16.mxu0 0
    %495 = vmatmul.mubr.bf16.gmra.mrb[0].mxu0 %v460
    %v496 = vpop.f32.mrb[0].mxu0
    %v497 = vadd.f32 0.0, %v496
    %v498 = vpop.f32.mrb[0].mxu0
    %v499 = vadd.f32 0.0, %v498
    %v500 = vpop.f32.mrb[0].mxu0
    %v501 = vpop.f32.mrb[0].mxu0
    %502 = vdwg.mxu0
    %503 = vmatprep.subr.bf16.mxu0 %v445
    %504 = vmatpush1.bf16.msra.mxu0 %v444
    %505 = vmatprep.subr.bf16.mxu0 %v449
    %506 = vmatpush1.bf16.msra.mxu0 %v448
    %507 = vmatprep.subr.bf16.mxu0 0
    %508 = vmatpush1.bf16.msra.mxu0 0
    %509 = vmatprep.subr.bf16.mxu0 0
    %510 = vmatpush1.bf16.msra.mxu0 0
    %511 = vmatprep.subr.bf16.mxu0 0
    %512 = vmatpush1.bf16.msra.mxu0 0
    %513 = vmatprep.subr.bf16.mxu0 0
    %514 = vmatpush1.bf16.msra.mxu0 0
    %515 = vmatprep.subr.bf16.mxu0 0
    %516 = vmatpush1.bf16.msra.mxu0 0
    %517 = vmatprep.subr.bf16.mxu0 0
    %518 = vmatpush1.bf16.msra.mxu0 0
    %519 = vmatprep.subr.bf16.mxu0 0
    %520 = vmatpush1.bf16.msra.mxu0 0
    %521 = vmatprep.subr.bf16.mxu0 0
    %522 = vmatpush1.bf16.msra.mxu0 0
    %523 = vmatprep.subr.bf16.mxu0 0
    %524 = vmatpush1.bf16.msra.mxu0 0
    %525 = vmatprep.subr.bf16.mxu0 0
    %526 = vmatpush1.bf16.msra.mxu0 0
    %527 = vmatprep.subr.bf16.mxu0 0
    %528 = vmatpush1.bf16.msra.mxu0 0
    %529 = vmatprep.subr.bf16.mxu0 0
    %530 = vmatpush1.bf16.msra.mxu0 0
    %531 = vmatprep.subr.bf16.mxu0 0
    %532 = vmatpush1.bf16.msra.mxu0 0
    %533 = vmatprep.subr.bf16.mxu0 0
    %534 = vmatpush1.bf16.msra.mxu0 0
    %535 = vmatprep.mubr.bf16.mxu0 0
    %536 = vmatmul.mubr.bf16.gmra.mrb[0].mxu0 %v460
    %v537 = vpop.f32.mrb[0].mxu0
    %v538 = vadd.f32 0.0, %v537
    %v539 = vpop.f32.mrb[0].mxu0
    %v540 = vadd.f32 0.0, %v539
    %v541 = vpop.f32.mrb[0].mxu0
    %v542 = vpop.f32.mrb[0].mxu0
    %543 = vdwg.mxu0
    %v548 = vunpack.c.l.b16 %v405
    %v549 = vunpack.c.h.b16 %v405
    %v550 = vunpack.c.l.b16 %v406
    %v551 = vunpack.c.h.b16 %v406
    %v552 = vunpack.c.l.b16 %v407
    %v553 = vunpack.c.h.b16 %v407
    %v554 = vunpack.c.l.b16 %v408
    %v555 = vunpack.c.h.b16 %v408
    %v556 = vpack.c.b16 %v552, %v548
    %v557 = vpack.c.b16 %v553, %v549
    %v558 = vpack.c.b16 %v554, %v550
    %v559 = vpack.c.b16 %v555, %v551
    %vm564 = vcmask 130048
    %v566 = vsel %vm564, %v108, 0
    %568 = vmatprep.subr.bf16.mxu0 %v557
    %569 = vmatpush1.bf16.msra.mxu0 %v556
    %570 = vmatprep.subr.bf16.mxu0 0
    %571 = vmatpush1.bf16.msra.mxu0 0
    %572 = vmatprep.subr.bf16.mxu0 0
    %573 = vmatpush1.bf16.msra.mxu0 0
    %574 = vmatprep.subr.bf16.mxu0 0
    %575 = vmatpush1.bf16.msra.mxu0 0
    %576 = vmatprep.subr.bf16.mxu0 0
    %577 = vmatpush1.bf16.msra.mxu0 0
    %578 = vmatprep.subr.bf16.mxu0 0
    %579 = vmatpush1.bf16.msra.mxu0 0
    %580 = vmatprep.subr.bf16.mxu0 0
    %581 = vmatpush1.bf16.msra.mxu0 0
    %582 = vmatprep.subr.bf16.mxu0 0
    %583 = vmatpush1.bf16.msra.mxu0 0
    %584 = vmatprep.subr.bf16.mxu0 0
    %585 = vmatpush1.bf16.msra.mxu0 0
    %586 = vmatprep.subr.bf16.mxu0 0
    %587 = vmatpush1.bf16.msra.mxu0 0
    %588 = vmatprep.subr.bf16.mxu0 0
    %589 = vmatpush1.bf16.msra.mxu0 0
    %590 = vmatprep.subr.bf16.mxu0 0
    %591 = vmatpush1.bf16.msra.mxu0 0
    %592 = vmatprep.subr.bf16.mxu0 0
    %593 = vmatpush1.bf16.msra.mxu0 0
    %594 = vmatprep.subr.bf16.mxu0 0
    %595 = vmatpush1.bf16.msra.mxu0 0
    %596 = vmatprep.subr.bf16.mxu0 0
    %597 = vmatpush1.bf16.msra.mxu0 0
    %598 = vmatprep.subr.bf16.mxu0 0
    %599 = vmatpush1.bf16.msra.mxu0 0
    %600 = vmatprep.mubr.bf16.mxu0 0
    %601 = vmatmul.mubr.bf16.gmra.mrb[0].mxu0 %v566
    %v602 = vpop.f32.mrb[0].mxu0
    %v603 = vadd.f32 %v497, %v602
    %v604 = vpop.f32.mrb[0].mxu0
    %v605 = vadd.f32 %v499, %v604
    %v606 = vpop.f32.mrb[0].mxu0
    %v607 = vpop.f32.mrb[0].mxu0
    %608 = vdwg.mxu0
    %609 = vmatprep.subr.bf16.mxu0 %v559
    %610 = vmatpush1.bf16.msra.mxu0 %v558
    %611 = vmatprep.subr.bf16.mxu0 0
    %612 = vmatpush1.bf16.msra.mxu0 0
    %613 = vmatprep.subr.bf16.mxu0 0
    %614 = vmatpush1.bf16.msra.mxu0 0
    %615 = vmatprep.subr.bf16.mxu0 0
    %616 = vmatpush1.bf16.msra.mxu0 0
    %617 = vmatprep.subr.bf16.mxu0 0
    %618 = vmatpush1.bf16.msra.mxu0 0
    %619 = vmatprep.subr.bf16.mxu0 0
    %620 = vmatpush1.bf16.msra.mxu0 0
    %621 = vmatprep.subr.bf16.mxu0 0
    %622 = vmatpush1.bf16.msra.mxu0 0
    %623 = vmatprep.subr.bf16.mxu0 0
    %624 = vmatpush1.bf16.msra.mxu0 0
    %625 = vmatprep.subr.bf16.mxu0 0
    %626 = vmatpush1.bf16.msra.mxu0 0
    %627 = vmatprep.subr.bf16.mxu0 0
    %628 = vmatpush1.bf16.msra.mxu0 0
    %629 = vmatprep.subr.bf16.mxu0 0
    %630 = vmatpush1.bf16.msra.mxu0 0
    %631 = vmatprep.subr.bf16.mxu0 0
    %632 = vmatpush1.bf16.msra.mxu0 0
    %633 = vmatprep.subr.bf16.mxu0 0
    %634 = vmatpush1.bf16.msra.mxu0 0
    %635 = vmatprep.subr.bf16.mxu0 0
    %636 = vmatpush1.bf16.msra.mxu0 0
    %637 = vmatprep.subr.bf16.mxu0 0
    %638 = vmatpush1.bf16.msra.mxu0 0
    %639 = vmatprep.subr.bf16.mxu0 0
    %640 = vmatpush1.bf16.msra.mxu0 0
    %641 = vmatprep.mubr.bf16.mxu0 0
    %642 = vmatmul.mubr.bf16.gmra.mrb[0].mxu0 %v566
    %v643 = vpop.f32.mrb[0].mxu0
    %v644 = vadd.f32 %v538, %v643
    %v645 = vpop.f32.mrb[0].mxu0
    %v646 = vadd.f32 %v540, %v645
    %v647 = vpop.f32.mrb[0].mxu0
    %v648 = vpop.f32.mrb[0].mxu0
    %649 = vdwg.mxu0
    %s650 = scalar_lea.vmem [#allocation11], 3
    %v651 = vld [vmem:[%s650] ss:$8 sm:$0xf]
    %v653 = vlaneseq
    %v654 = vshrl.u32 %v653, 7
    %v655 = vsub.s32 0, %v654
    %v656 = vrot.slane %v651, %v655
    %v657 = vlaneseq
    %v658 = vshrl.u32 %v657, 7
    %v659 = vsub.s32 1, %v658
    %v660 = vrot.slane %v651, %v659
    %v661 = vlaneseq
    %v662 = vshrl.u32 %v661, 7
    %v663 = vsub.s32 2, %v662
    %v664 = vrot.slane %v651, %v663
    %v665 = vlaneseq
    %v666 = vshrl.u32 %v665, 7
    %v667 = vsub.s32 3, %v666
    %v668 = vrot.slane %v651, %v667
    %v673 = vadd.f32 %v603, %v656
    %v674 = vadd.f32 %v605, %v660
    %v675 = vadd.f32 %v644, %v664
    %v676 = vadd.f32 %v646, %v668
    %v677 = vld [vmem:[#allocation7 + $0x10] sm:$0xff]
    %v678 = vld [vmem:[#allocation7 + $0x18] sm:$0xff]
    %v679 = vld [vmem:[#allocation7 + $0x30] sm:$0xff]
    %v680 = vld [vmem:[#allocation7 + $0x38] sm:$0xff]
    %v681 = vld [vmem:[#allocation7 + $0x50] sm:$0xff]
    %v682 = vld [vmem:[#allocation7 + $0x58] sm:$0xff]
    %v683 = vld [vmem:[#allocation7 + $0x70] sm:$0xff]
    %v684 = vld [vmem:[#allocation7 + $0x78] sm:$0xff]
    %v685 = vld [vmem:[#allocation7 + $0x90] sm:$0xff]
    %v686 = vld [vmem:[#allocation7 + $0x98] sm:$0xff]
    %v687 = vld [vmem:[#allocation7 + $0xb0] sm:$0xff]
    %v688 = vld [vmem:[#allocation7 + $0xb8] sm:$0xff]
    %v697 = vunpack.c.l.b16 %v681
    %v698 = vunpack.c.h.b16 %v681
    %v699 = vunpack.c.l.b16 %v682
    %v700 = vunpack.c.h.b16 %v682
    %v701 = vunpack.c.l.b16 %v683
    %v702 = vunpack.c.h.b16 %v683
    %v703 = vunpack.c.l.b16 %v684
    %v704 = vunpack.c.h.b16 %v684
    %v705 = vunpack.c.l.b16 %v685
    %v706 = vunpack.c.h.b16 %v685
    %v707 = vunpack.c.l.b16 %v686
    %v708 = vunpack.c.h.b16 %v686
    %v709 = vunpack.c.l.b16 %v687
    %v710 = vunpack.c.h.b16 %v687
    %v711 = vunpack.c.l.b16 %v688
    %v712 = vunpack.c.h.b16 %v688
    %v713 = vpack.c.b16 %v701, %v697
    %v714 = vpack.c.b16 %v702, %v698
    %v715 = vpack.c.b16 %v703, %v699
    %v716 = vpack.c.b16 %v704, %v700
    %v717 = vpack.c.b16 %v709, %v705
    %v718 = vpack.c.b16 %v710, %v706
    %v719 = vpack.c.b16 %v711, %v707
    %v720 = vpack.c.b16 %v712, %v708
    %729 = vmatprep.subr.bf16.mxu0 %v714
    %730 = vmatpush1.bf16.msra.mxu0 %v713
    %731 = vmatprep.subr.bf16.mxu0 %v718
    %732 = vmatpush1.bf16.msra.mxu0 %v717
    %733 = vmatprep.subr.bf16.mxu0 0
    %734 = vmatpush1.bf16.msra.mxu0 0
    %735 = vmatprep.subr.bf16.mxu0 0
    %736 = vmatpush1.bf16.msra.mxu0 0
    %737 = vmatprep.subr.bf16.mxu0 0
    %738 = vmatpush1.bf16.msra.mxu0 0
    %739 = vmatprep.subr.bf16.mxu0 0
    %740 = vmatpush1.bf16.msra.mxu0 0
    %741 = vmatprep.subr.bf16.mxu0 0
    %742 = vmatpush1.bf16.msra.mxu0 0
    %743 = vmatprep.subr.bf16.mxu0 0
    %744 = vmatpush1.bf16.msra.mxu0 0
    %745 = vmatprep.subr.bf16.mxu0 0
    %746 = vmatpush1.bf16.msra.mxu0 0
    %747 = vmatprep.subr.bf16.mxu0 0
    %748 = vmatpush1.bf16.msra.mxu0 0
    %749 = vmatprep.subr.bf16.mxu0 0
    %750 = vmatpush1.bf16.msra.mxu0 0
    %751 = vmatprep.subr.bf16.mxu0 0
    %752 = vmatpush1.bf16.msra.mxu0 0
    %753 = vmatprep.subr.bf16.mxu0 0
    %754 = vmatpush1.bf16.msra.mxu0 0
    %755 = vmatprep.subr.bf16.mxu0 0
    %756 = vmatpush1.bf16.msra.mxu0 0
    %757 = vmatprep.subr.bf16.mxu0 0
    %758 = vmatpush1.bf16.msra.mxu0 0
    %759 = vmatprep.subr.bf16.mxu0 0
    %760 = vmatpush1.bf16.msra.mxu0 0
    %761 = vmatprep.mubr.bf16.mxu0 0
    %762 = vmatmul.mubr.bf16.gmra.mrb[0].mxu0 %v460
    %v763 = vpop.f32.mrb[0].mxu0
    %v764 = vadd.f32 0.0, %v763
    %v765 = vpop.f32.mrb[0].mxu0
    %v766 = vadd.f32 0.0, %v765
    %v767 = vpop.f32.mrb[0].mxu0
    %v768 = vpop.f32.mrb[0].mxu0
    %769 = vdwg.mxu0
    %770 = vmatprep.subr.bf16.mxu0 %v716
    %771 = vmatpush1.bf16.msra.mxu0 %v715
    %772 = vmatprep.subr.bf16.mxu0 %v720
    %773 = vmatpush1.bf16.msra.mxu0 %v719
    %774 = vmatprep.subr.bf16.mxu0 0
    %775 = vmatpush1.bf16.msra.mxu0 0
    %776 = vmatprep.subr.bf16.mxu0 0
    %777 = vmatpush1.bf16.msra.mxu0 0
    %778 = vmatprep.subr.bf16.mxu0 0
    %779 = vmatpush1.bf16.msra.mxu0 0
    %780 = vmatprep.subr.bf16.mxu0 0
    %781 = vmatpush1.bf16.msra.mxu0 0
    %782 = vmatprep.subr.bf16.mxu0 0
    %783 = vmatpush1.bf16.msra.mxu0 0
    %784 = vmatprep.subr.bf16.mxu0 0
    %785 = vmatpush1.bf16.msra.mxu0 0
    %786 = vmatprep.subr.bf16.mxu0 0
    %787 = vmatpush1.bf16.msra.mxu0 0
    %788 = vmatprep.subr.bf16.mxu0 0
    %789 = vmatpush1.bf16.msra.mxu0 0
    %790 = vmatprep.subr.bf16.mxu0 0
    %791 = vmatpush1.bf16.msra.mxu0 0
    %792 = vmatprep.subr.bf16.mxu0 0
    %793 = vmatpush1.bf16.msra.mxu0 0
    %794 = vmatprep.subr.bf16.mxu0 0
    %795 = vmatpush1.bf16.msra.mxu0 0
    %796 = vmatprep.subr.bf16.mxu0 0
    %797 = vmatpush1.bf16.msra.mxu0 0
    %798 = vmatprep.subr.bf16.mxu0 0
    %799 = vmatpush1.bf16.msra.mxu0 0
    %800 = vmatprep.subr.bf16.mxu0 0
    %801 = vmatpush1.bf16.msra.mxu0 0
    %802 = vmatprep.mubr.bf16.mxu0 0
    %803 = vmatmul.mubr.bf16.gmra.mrb[0].mxu0 %v460
    %v804 = vpop.f32.mrb[0].mxu0
    %v805 = vadd.f32 0.0, %v804
    %v806 = vpop.f32.mrb[0].mxu0
    %v807 = vadd.f32 0.0, %v806
    %v808 = vpop.f32.mrb[0].mxu0
    %v809 = vpop.f32.mrb[0].mxu0
    %810 = vdwg.mxu0
    %v815 = vunpack.c.l.b16 %v677
    %v816 = vunpack.c.h.b16 %v677
    %v817 = vunpack.c.l.b16 %v678
    %v818 = vunpack.c.h.b16 %v678
    %v819 = vunpack.c.l.b16 %v679
    %v820 = vunpack.c.h.b16 %v679
    %v821 = vunpack.c.l.b16 %v680
    %v822 = vunpack.c.h.b16 %v680
    %v823 = vpack.c.b16 %v819, %v815
    %v824 = vpack.c.b16 %v820, %v816
    %v825 = vpack.c.b16 %v821, %v817
    %v826 = vpack.c.b16 %v822, %v818
    %831 = vmatprep.subr.bf16.mxu0 %v824
    %832 = vmatpush1.bf16.msra.mxu0 %v823
    %833 = vmatprep.subr.bf16.mxu0 0
    %834 = vmatpush1.bf16.msra.mxu0 0
    %835 = vmatprep.subr.bf16.mxu0 0
    %836 = vmatpush1.bf16.msra.mxu0 0
    %837 = vmatprep.subr.bf16.mxu0 0
    %838 = vmatpush1.bf16.msra.mxu0 0
    %839 = vmatprep.subr.bf16.mxu0 0
    %840 = vmatpush1.bf16.msra.mxu0 0
    %841 = vmatprep.subr.bf16.mxu0 0
    %842 = vmatpush1.bf16.msra.mxu0 0
    %843 = vmatprep.subr.bf16.mxu0 0
    %844 = vmatpush1.bf16.msra.mxu0 0
    %845 = vmatprep.subr.bf16.mxu0 0
    %846 = vmatpush1.bf16.msra.mxu0 0
    %847 = vmatprep.subr.bf16.mxu0 0
    %848 = vmatpush1.bf16.msra.mxu0 0
    %849 = vmatprep.subr.bf16.mxu0 0
    %850 = vmatpush1.bf16.msra.mxu0 0
    %851 = vmatprep.subr.bf16.mxu0 0
    %852 = vmatpush1.bf16.msra.mxu0 0
    %853 = vmatprep.subr.bf16.mxu0 0
    %854 = vmatpush1.bf16.msra.mxu0 0
    %855 = vmatprep.subr.bf16.mxu0 0
    %856 = vmatpush1.bf16.msra.mxu0 0
    %857 = vmatprep.subr.bf16.mxu0 0
    %858 = vmatpush1.bf16.msra.mxu0 0
    %859 = vmatprep.subr.bf16.mxu0 0
    %860 = vmatpush1.bf16.msra.mxu0 0
    %861 = vmatprep.subr.bf16.mxu0 0
    %862 = vmatpush1.bf16.msra.mxu0 0
    %863 = vmatprep.mubr.bf16.mxu0 0
    %864 = vmatmul.mubr.bf16.gmra.mrb[0].mxu0 %v566
    %v865 = vpop.f32.mrb[0].mxu0
    %v866 = vadd.f32 %v764, %v865
    %v867 = vpop.f32.mrb[0].mxu0
    %v868 = vadd.f32 %v766, %v867
    %v869 = vpop.f32.mrb[0].mxu0
    %v870 = vpop.f32.mrb[0].mxu0
    %871 = vdwg.mxu0
    %872 = vmatprep.subr.bf16.mxu0 %v826
    %873 = vmatpush1.bf16.msra.mxu0 %v825
    %874 = vmatprep.subr.bf16.mxu0 0
    %875 = vmatpush1.bf16.msra.mxu0 0
    %876 = vmatprep.subr.bf16.mxu0 0
    %877 = vmatpush1.bf16.msra.mxu0 0
    %878 = vmatprep.subr.bf16.mxu0 0
    %879 = vmatpush1.bf16.msra.mxu0 0
    %880 = vmatprep.subr.bf16.mxu0 0
    %881 = vmatpush1.bf16.msra.mxu0 0
    %882 = vmatprep.subr.bf16.mxu0 0
    %883 = vmatpush1.bf16.msra.mxu0 0
    %884 = vmatprep.subr.bf16.mxu0 0
    %885 = vmatpush1.bf16.msra.mxu0 0
    %886 = vmatprep.subr.bf16.mxu0 0
    %887 = vmatpush1.bf16.msra.mxu0 0
    %888 = vmatprep.subr.bf16.mxu0 0
    %889 = vmatpush1.bf16.msra.mxu0 0
    %890 = vmatprep.subr.bf16.mxu0 0
    %891 = vmatpush1.bf16.msra.mxu0 0
    %892 = vmatprep.subr.bf16.mxu0 0
    %893 = vmatpush1.bf16.msra.mxu0 0
    %894 = vmatprep.subr.bf16.mxu0 0
    %895 = vmatpush1.bf16.msra.mxu0 0
    %896 = vmatprep.subr.bf16.mxu0 0
    %897 = vmatpush1.bf16.msra.mxu0 0
    %898 = vmatprep.subr.bf16.mxu0 0
    %899 = vmatpush1.bf16.msra.mxu0 0
    %900 = vmatprep.subr.bf16.mxu0 0
    %901 = vmatpush1.bf16.msra.mxu0 0
    %902 = vmatprep.subr.bf16.mxu0 0
    %903 = vmatpush1.bf16.msra.mxu0 0
    %904 = vmatprep.mubr.bf16.mxu0 0
    %905 = vmatmul.mubr.bf16.gmra.mrb[0].mxu0 %v566
    %v906 = vpop.f32.mrb[0].mxu0
    %v907 = vadd.f32 %v805, %v906
    %v908 = vpop.f32.mrb[0].mxu0
    %v909 = vadd.f32 %v807, %v908
    %v910 = vpop.f32.mrb[0].mxu0
    %v911 = vpop.f32.mrb[0].mxu0
    %912 = vdwg.mxu0
    %s913 = scalar_lea.vmem [#allocation11], 35
    %v914 = vld [vmem:[%s913] ss:$8 sm:$0xf]
    %v916 = vlaneseq
    %v917 = vshrl.u32 %v916, 7
    %v918 = vsub.s32 0, %v917
    %v919 = vrot.slane %v914, %v918
    %v920 = vlaneseq
    %v921 = vshrl.u32 %v920, 7
    %v922 = vsub.s32 1, %v921
    %v923 = vrot.slane %v914, %v922
    %v924 = vlaneseq
    %v925 = vshrl.u32 %v924, 7
    %v926 = vsub.s32 2, %v925
    %v927 = vrot.slane %v914, %v926
    %v928 = vlaneseq
    %v929 = vshrl.u32 %v928, 7
    %v930 = vsub.s32 3, %v929
    %v931 = vrot.slane %v914, %v930
    %v936 = vadd.f32 %v866, %v919
    %v937 = vadd.f32 %v868, %v923
    %v938 = vadd.f32 %v907, %v927
    %v939 = vadd.f32 %v909, %v931
    %s940 = scalar_lea.vmem [#allocation11], 4
    %v941 = vld [vmem:[%s940] ss:$8 sm:$0xf]
    %s942 = scalar_lea.vmem [#allocation11], 5
    %v943 = vld [vmem:[%s942] ss:$8 sm:$0xf]
    %vm944 = vcmask 1041408
    %v945 = vsel %vm944, %v673, 0.0
    %v946 = vsel %vm944, %v674, 0.0
    %v947 = vadd.f32 %v945, %v946
    %v948 = vsel %vm944, %v675, 0.0
    %v949 = vadd.f32 %v947, %v948
    %v950 = vsel %vm944, %v676, 0.0
    %v951 = vadd.f32 %v949, %v950
    %952 = vadd.xlane.f32.xlu0 %v951
    %v953 = vpop.xlane.xlu0 %952
    %v954 = vmul.f32 %v953, 0.0025
    %v955 = vlaneseq
    %v956 = vand.u32 %v955, 127
    %v957 = vadd.s32 %v956, 128
    %v958 = vadd.s32 %v956, 256
    %v959 = vadd.s32 %v956, 384
    %vm960 = vcmp.lt.s32.totalorder %v956, 400
    %vm961 = vcmp.lt.s32.totalorder %v957, 400
    %vm962 = vcmp.lt.s32.totalorder %v958, 400
    %vm963 = vcmp.lt.s32.totalorder %v959, 400
    %v964 = vsel %vm960, 1, 0
    %v965 = vsel %vm961, 1, 0
    %v966 = vsel %vm962, 1, 0
    %v967 = vsel %vm963, 1, 0
    %v968 = vcvt.s32.f32 %v964
    %v969 = vcvt.s32.f32 %v965
    %v970 = vcvt.s32.f32 %v966
    %v971 = vcvt.s32.f32 %v967
    %v972 = vsub.f32 %v673, %v954
    %v973 = vsub.f32 %v674, %v954
    %v974 = vsub.f32 %v675, %v954
    %v975 = vsub.f32 %v676, %v954
    %v976 = vmul.f32 %v972, %v968
    %v977 = vmul.f32 %v973, %v969
    %v978 = vmul.f32 %v974, %v970
    %v979 = vmul.f32 %v975, %v971
    %v980 = vmul.f32 %v976, %v976
    %v981 = vmul.f32 %v977, %v977
    %v982 = vmul.f32 %v978, %v978
    %v983 = vmul.f32 %v979, %v979
    %v984 = vsel %vm944, %v980, 0.0
    %v985 = vsel %vm944, %v981, 0.0
    %v986 = vadd.f32 %v984, %v985
    %v987 = vsel %vm944, %v982, 0.0
    %v988 = vadd.f32 %v986, %v987
    %v989 = vsel %vm944, %v983, 0.0
    %v990 = vadd.f32 %v988, %v989
    %991 = vadd.xlane.f32.xlu0 %v990
    %v992 = vpop.xlane.xlu0 %991
    %v993 = vmul.f32 %v992, 0.0025062656
    %v994 = vrsqrt.pop %v993
    %v995 = vmul.f32 %v993, %v994
    %vm996 = vcmp.eq.f32.partialorder %v993, inf
    %v997 = vsel %vm996, %v993, %v995
    %vm998 = vcmp.eq.f32.partialorder %v993, 0.0
    %v999 = vand.u32 %v993, 2147483648
    %v1000 = vsel %vm998, %v999, %v997
    %v1001 = vadd.f32 %v1000, 1e-06
    %v1002 = vrcp.pop %v1001
    %v1003 = vmul.f32 %v976, %v1002
    %v1004 = vmul.f32 %v977, %v1002
    %v1005 = vmul.f32 %v978, %v1002
    %v1006 = vmul.f32 %v979, %v1002
    %v1008 = vlaneseq
    %v1009 = vshrl.u32 %v1008, 7
    %v1010 = vsub.s32 0, %v1009
    %v1011 = vrot.slane %v941, %v1010
    %v1012 = vlaneseq
    %v1013 = vshrl.u32 %v1012, 7
    %v1014 = vsub.s32 1, %v1013
    %v1015 = vrot.slane %v941, %v1014
    %v1016 = vlaneseq
    %v1017 = vshrl.u32 %v1016, 7
    %v1018 = vsub.s32 2, %v1017
    %v1019 = vrot.slane %v941, %v1018
    %v1020 = vlaneseq
    %v1021 = vshrl.u32 %v1020, 7
    %v1022 = vsub.s32 3, %v1021
    %v1023 = vrot.slane %v941, %v1022
    %v1028 = vmul.f32 %v1011, %v1003
    %v1029 = vmul.f32 %v1015, %v1004
    %v1030 = vmul.f32 %v1019, %v1005
    %v1031 = vmul.f32 %v1023, %v1006
    %v1033 = vlaneseq
    %v1034 = vshrl.u32 %v1033, 7
    %v1035 = vsub.s32 0, %v1034
    %v1036 = vrot.slane %v943, %v1035
    %v1037 = vlaneseq
    %v1038 = vshrl.u32 %v1037, 7
    %v1039 = vsub.s32 1, %v1038
    %v1040 = vrot.slane %v943, %v1039
    %v1041 = vlaneseq
    %v1042 = vshrl.u32 %v1041, 7
    %v1043 = vsub.s32 2, %v1042
    %v1044 = vrot.slane %v943, %v1043
    %v1045 = vlaneseq
    %v1046 = vshrl.u32 %v1045, 7
    %v1047 = vsub.s32 3, %v1046
    %v1048 = vrot.slane %v943, %v1047
    %v1053 = vadd.f32 %v1028, %v1036
    %v1054 = vadd.f32 %v1029, %v1040
    %v1055 = vadd.f32 %v1030, %v1044
    %v1056 = vadd.f32 %v1031, %v1048
    %s1057 = scalar_lea.vmem [#allocation11], 36
    %v1058 = vld [vmem:[%s1057] ss:$8 sm:$0xf]
    %s1059 = scalar_lea.vmem [#allocation11], 37
    %v1060 = vld [vmem:[%s1059] ss:$8 sm:$0xf]
    %v1061 = vsel %vm944, %v936, 0.0
    %v1062 = vsel %vm944, %v937, 0.0
    %v1063 = vadd.f32 %v1061, %v1062
    %v1064 = vsel %vm944, %v938, 0.0
    %v1065 = vadd.f32 %v1063, %v1064
    %v1066 = vsel %vm944, %v939, 0.0
    %v1067 = vadd.f32 %v1065, %v1066
    %1068 = vadd.xlane.f32.xlu0 %v1067
    %v1069 = vpop.xlane.xlu0 %1068
    %v1070 = vmul.f32 %v1069, 0.0025
    %v1071 = vsub.f32 %v936, %v1070
    %v1072 = vsub.f32 %v937, %v1070
    %v1073 = vsub.f32 %v938, %v1070
    %v1074 = vsub.f32 %v939, %v1070
    %v1075 = vmul.f32 %v1071, %v968
    %v1076 = vmul.f32 %v1072, %v969
    %v1077 = vmul.f32 %v1073, %v970
    %v1078 = vmul.f32 %v1074, %v971
    %v1079 = vmul.f32 %v1075, %v1075
    %v1080 = vmul.f32 %v1076, %v1076
    %v1081 = vmul.f32 %v1077, %v1077
    %v1082 = vmul.f32 %v1078, %v1078
    %v1083 = vsel %vm944, %v1079, 0.0
    %v1084 = vsel %vm944, %v1080, 0.0
    %v1085 = vadd.f32 %v1083, %v1084
    %v1086 = vsel %vm944, %v1081, 0.0
    %v1087 = vadd.f32 %v1085, %v1086
    %v1088 = vsel %vm944, %v1082, 0.0
    %v1089 = vadd.f32 %v1087, %v1088
    %1090 = vadd.xlane.f32.xlu0 %v1089
    %v1091 = vpop.xlane.xlu0 %1090
    %v1092 = vmul.f32 %v1091, 0.0025062656
    %v1093 = vrsqrt.pop %v1092
    %v1094 = vmul.f32 %v1092, %v1093
    %vm1095 = vcmp.eq.f32.partialorder %v1092, inf
    %v1096 = vsel %vm1095, %v1092, %v1094
    %vm1097 = vcmp.eq.f32.partialorder %v1092, 0.0
    %v1098 = vand.u32 %v1092, 2147483648
    %v1099 = vsel %vm1097, %v1098, %v1096
    %v1100 = vadd.f32 %v1099, 1e-06
    %v1101 = vrcp.pop %v1100
    %v1102 = vmul.f32 %v1075, %v1101
    %v1103 = vmul.f32 %v1076, %v1101
    %v1104 = vmul.f32 %v1077, %v1101
    %v1105 = vmul.f32 %v1078, %v1101
    %v1107 = vlaneseq
    %v1108 = vshrl.u32 %v1107, 7
    %v1109 = vsub.s32 0, %v1108
    %v1110 = vrot.slane %v1058, %v1109
    %v1111 = vlaneseq
    %v1112 = vshrl.u32 %v1111, 7
    %v1113 = vsub.s32 1, %v1112
    %v1114 = vrot.slane %v1058, %v1113
    %v1115 = vlaneseq
    %v1116 = vshrl.u32 %v1115, 7
    %v1117 = vsub.s32 2, %v1116
    %v1118 = vrot.slane %v1058, %v1117
    %v1119 = vlaneseq
    %v1120 = vshrl.u32 %v1119, 7
    %v1121 = vsub.s32 3, %v1120
    %v1122 = vrot.slane %v1058, %v1121
    %v1127 = vmul.f32 %v1110, %v1102
    %v1128 = vmul.f32 %v1114, %v1103
    %v1129 = vmul.f32 %v1118, %v1104
    %v1130 = vmul.f32 %v1122, %v1105
    %v1132 = vlaneseq
    %v1133 = vshrl.u32 %v1132, 7
    %v1134 = vsub.s32 0, %v1133
    %v1135 = vrot.slane %v1060, %v1134
    %v1136 = vlaneseq
    %v1137 = vshrl.u32 %v1136, 7
    %v1138 = vsub.s32 1, %v1137
    %v1139 = vrot.slane %v1060, %v1138
    %v1140 = vlaneseq
    %v1141 = vshrl.u32 %v1140, 7
    %v1142 = vsub.s32 2, %v1141
    %v1143 = vrot.slane %v1060, %v1142
    %v1144 = vlaneseq
    %v1145 = vshrl.u32 %v1144, 7
    %v1146 = vsub.s32 3, %v1145
    %v1147 = vrot.slane %v1060, %v1146
    %v1152 = vadd.f32 %v1127, %v1135
    %v1153 = vadd.f32 %v1128, %v1139
    %v1154 = vadd.f32 %v1129, %v1143
    %v1155 = vadd.f32 %v1130, %v1147
    %vm1156 = vcmp.ge.f32.partialorder %v1053, 0.0
    %vm1157 = vcmp.ge.f32.partialorder %v1054, 0.0
    %vm1158 = vcmp.ge.f32.partialorder %v1055, 0.0
    %vm1159 = vcmp.ge.f32.partialorder %v1056, 0.0
    %v1160 = vmul.f32 %v1053, 0.01
    %v1161 = vmul.f32 %v1054, 0.01
    %v1162 = vmul.f32 %v1055, 0.01
    %v1163 = vmul.f32 %v1056, 0.01
    %v1164 = vsel %vm1156, %v1053, %v1160
    %v1165 = vsel %vm1157, %v1054, %v1161
    %v1166 = vsel %vm1158, %v1055, %v1162
    %v1167 = vsel %vm1159, %v1056, %v1163
    %vm1168 = vcmp.ge.f32.partialorder %v1152, 0.0
    %vm1169 = vcmp.ge.f32.partialorder %v1153, 0.0
    %vm1170 = vcmp.ge.f32.partialorder %v1154, 0.0
    %vm1171 = vcmp.ge.f32.partialorder %v1155, 0.0
    %v1172 = vmul.f32 %v1152, 0.01
    %v1173 = vmul.f32 %v1153, 0.01
    %v1174 = vmul.f32 %v1154, 0.01
    %v1175 = vmul.f32 %v1155, 0.01
    %v1176 = vsel %vm1168, %v1152, %v1172
    %v1177 = vsel %vm1169, %v1153, %v1173
    %v1178 = vsel %vm1170, %v1154, %v1174
    %v1179 = vsel %vm1171, %v1155, %v1175
    %v1180 = vld [vmem:[#allocation8] sm:$0xff]
    %v1181 = vld [vmem:[#allocation8 + $0x8] sm:$0xf]
    %v1182 = vld [vmem:[#allocation8 + $0xc] sm:$0xff]
    %v1183 = vld [vmem:[#allocation8 + $0x14] sm:$0xf]
    %v1184 = vld [vmem:[#allocation8 + $0x18] sm:$0xff]
    %v1185 = vld [vmem:[#allocation8 + $0x20] sm:$0xf]
    %v1186 = vld [vmem:[#allocation8 + $0x24] sm:$0xff]
    %v1187 = vld [vmem:[#allocation8 + $0x2c] sm:$0xf]
    %v1188 = vld [vmem:[#allocation8 + $0x30] sm:$0xff]
    %v1189 = vld [vmem:[#allocation8 + $0x38] sm:$0xf]
    %v1190 = vld [vmem:[#allocation8 + $0x3c] sm:$0xff]
    %v1191 = vld [vmem:[#allocation8 + $0x44] sm:$0xf]
    %v1192 = vld [vmem:[#allocation8 + $0x48] sm:$0xff]
    %v1193 = vld [vmem:[#allocation8 + $0x50] sm:$0xf]
    %v1194 = vld [vmem:[#allocation8 + $0x54] sm:$0xff]
    %v1195 = vld [vmem:[#allocation8 + $0x5c] sm:$0xf]
    %v1196 = vld [vmem:[#allocation8 + $0x60] sm:$0xff]
    %v1197 = vld [vmem:[#allocation8 + $0x68] sm:$0xf]
    %v1198 = vld [vmem:[#allocation8 + $0x6c] sm:$0xff]
    %v1199 = vld [vmem:[#allocation8 + $0x74] sm:$0xf]
    %v1200 = vld [vmem:[#allocation8 + $0x78] sm:$0xff]
    %v1201 = vld [vmem:[#allocation8 + $0x80] sm:$0xf]
    %v1202 = vld [vmem:[#allocation8 + $0x84] sm:$0xff]
    %v1203 = vld [vmem:[#allocation8 + $0x8c] sm:$0xf]
    %v1204 = vld [vmem:[#allocation8 + $0x90] sm:$0xff]
    %v1205 = vld [vmem:[#allocation8 + $0x98] sm:$0xf]
    %v1206 = vld [vmem:[#allocation8 + $0x9c] sm:$0xff]
    %v1207 = vld [vmem:[#allocation8 + $0xa4] sm:$0xf]
    %v1208 = vld [vmem:[#allocation8 + $0xa8] sm:$0xff]
    %v1209 = vld [vmem:[#allocation8 + $0xb0] sm:$0xf]
    %v1210 = vld [vmem:[#allocation8 + $0xb4] sm:$0xff]
    %v1211 = vld [vmem:[#allocation8 + $0xbc] sm:$0xf]
    %v1212 = vld [vmem:[#allocation8 + $0xc0] sm:$0xff]
    %v1213 = vld [vmem:[#allocation8 + $0xc8] sm:$0xf]
    %v1214 = vld [vmem:[#allocation8 + $0xcc] sm:$0xff]
    %v1215 = vld [vmem:[#allocation8 + $0xd4] sm:$0xf]
    %v1216 = vld [vmem:[#allocation8 + $0xd8] sm:$0xff]
    %v1217 = vld [vmem:[#allocation8 + $0xe0] sm:$0xf]
    %v1218 = vld [vmem:[#allocation8 + $0xe4] sm:$0xff]
    %v1219 = vld [vmem:[#allocation8 + $0xec] sm:$0xf]
    %v1220 = vld [vmem:[#allocation8 + $0xf0] sm:$0xff]
    %v1221 = vld [vmem:[#allocation8 + $0xf8] sm:$0xf]
    %v1222 = vld [vmem:[#allocation8 + $0xfc] sm:$0xff]
    %v1223 = vld [vmem:[#allocation8 + $0x104] sm:$0xf]
    %v1224 = vld [vmem:[#allocation8 + $0x108] sm:$0xff]
    %v1225 = vld [vmem:[#allocation8 + $0x110] sm:$0xf]
    %v1226 = vld [vmem:[#allocation8 + $0x114] sm:$0xff]
    %v1227 = vld [vmem:[#allocation8 + $0x11c] sm:$0xf]
    %v1228 = vld [vmem:[#allocation8 + $0x120] sm:$0xff]
    %v1229 = vld [vmem:[#allocation8 + $0x128] sm:$0xf]
    %v1230 = vld [vmem:[#allocation8 + $0x12c] sm:$0xff]
    %v1231 = vld [vmem:[#allocation8 + $0x134] sm:$0xf]
    %v1232 = vld [vmem:[#allocation8 + $0x138] sm:$0xff]
    %v1233 = vld [vmem:[#allocation8 + $0x140] sm:$0xf]
    %v1234 = vld [vmem:[#allocation8 + $0x144] sm:$0xff]
    %v1235 = vld [vmem:[#allocation8 + $0x14c] sm:$0xf]
    %v1236 = vld [vmem:[#allocation8 + $0x150] sm:$0xff]
    %v1237 = vld [vmem:[#allocation8 + $0x158] sm:$0xf]
    %v1238 = vld [vmem:[#allocation8 + $0x15c] sm:$0xff]
    %v1239 = vld [vmem:[#allocation8 + $0x164] sm:$0xf]
    %v1240 = vld [vmem:[#allocation8 + $0x168] sm:$0xff]
    %v1241 = vld [vmem:[#allocation8 + $0x170] sm:$0xf]
    %v1242 = vld [vmem:[#allocation8 + $0x174] sm:$0xff]
    %v1243 = vld [vmem:[#allocation8 + $0x17c] sm:$0xf]
    %v1244 = vld [vmem:[#allocation8 + $0x180] sm:$0xff]
    %v1245 = vld [vmem:[#allocation8 + $0x188] sm:$0xf]
    %v1246 = vld [vmem:[#allocation8 + $0x18c] sm:$0xff]
    %v1247 = vld [vmem:[#allocation8 + $0x194] sm:$0xf]
    %v1248 = vld [vmem:[#allocation8 + $0x198] sm:$0xff]
    %v1249 = vld [vmem:[#allocation8 + $0x1a0] sm:$0xf]
    %v1250 = vld [vmem:[#allocation8 + $0x1a4] sm:$0xff]
    %v1251 = vld [vmem:[#allocation8 + $0x1ac] sm:$0xf]
    %v1252 = vld [vmem:[#allocation8 + $0x1b0] sm:$0xff]
    %v1253 = vld [vmem:[#allocation8 + $0x1b8] sm:$0xf]
    %v1254 = vld [vmem:[#allocation8 + $0x1bc] sm:$0xff]
    %v1255 = vld [vmem:[#allocation8 + $0x1c4] sm:$0xf]
    %v1256 = vld [vmem:[#allocation8 + $0x1c8] sm:$0xff]
    %v1257 = vld [vmem:[#allocation8 + $0x1d0] sm:$0xf]
    %v1258 = vld [vmem:[#allocation8 + $0x1d4] sm:$0xff]
    %v1259 = vld [vmem:[#allocation8 + $0x1dc] sm:$0xf]
    %v1260 = vld [vmem:[#allocation8 + $0x1e0] sm:$0xff]
    %v1261 = vld [vmem:[#allocation8 + $0x1e8] sm:$0xf]
    %v1262 = vld [vmem:[#allocation8 + $0x1ec] sm:$0xff]
    %v1263 = vld [vmem:[#allocation8 + $0x1f4] sm:$0xf]
    %v1264 = vld [vmem:[#allocation8 + $0x1f8] sm:$0xff]
    %v1265 = vld [vmem:[#allocation8 + $0x200] sm:$0xf]
    %v1266 = vld [vmem:[#allocation8 + $0x204] sm:$0xff]
    %v1267 = vld [vmem:[#allocation8 + $0x20c] sm:$0xf]
    %v1268 = vld [vmem:[#allocation8 + $0x210] sm:$0xff]
    %v1269 = vld [vmem:[#allocation8 + $0x218] sm:$0xf]
    %v1270 = vld [vmem:[#allocation8 + $0x21c] sm:$0xff]
    %v1271 = vld [vmem:[#allocation8 + $0x224] sm:$0xf]
    %v1272 = vld [vmem:[#allocation8 + $0x228] sm:$0xff]
    %v1273 = vld [vmem:[#allocation8 + $0x230] sm:$0xf]
    %v1274 = vld [vmem:[#allocation8 + $0x234] sm:$0xff]
    %v1275 = vld [vmem:[#allocation8 + $0x23c] sm:$0xf]
    %v1276 = vld [vmem:[#allocation8 + $0x240] sm:$0xff]
    %v1277 = vld [vmem:[#allocation8 + $0x248] sm:$0xf]
    %v1278 = vld [vmem:[#allocation8 + $0x24c] sm:$0xff]
    %v1279 = vld [vmem:[#allocation8 + $0x254] sm:$0xf]
    %v1280 = vld [vmem:[#allocation8 + $0x258] sm:$0xff]
    %v1281 = vld [vmem:[#allocation8 + $0x260] sm:$0xf]
    %v1282 = vld [vmem:[#allocation8 + $0x264] sm:$0xff]
    %v1283 = vld [vmem:[#allocation8 + $0x26c] sm:$0xf]
    %v1284 = vld [vmem:[#allocation8 + $0x270] sm:$0xff]
    %v1285 = vld [vmem:[#allocation8 + $0x278] sm:$0xf]
    %v1286 = vld [vmem:[#allocation8 + $0x27c] sm:$0xff]
    %v1287 = vld [vmem:[#allocation8 + $0x284] sm:$0xf]
    %v1288 = vld [vmem:[#allocation8 + $0x288] sm:$0xff]
    %v1289 = vld [vmem:[#allocation8 + $0x290] sm:$0xf]
    %v1290 = vld [vmem:[#allocation8 + $0x294] sm:$0xff]
    %v1291 = vld [vmem:[#allocation8 + $0x29c] sm:$0xf]
    %v1292 = vld [vmem:[#allocation8 + $0x2a0] sm:$0xff]
    %v1293 = vld [vmem:[#allocation8 + $0x2a8] sm:$0xf]
    %v1294 = vld [vmem:[#allocation8 + $0x2ac] sm:$0xff]
    %v1295 = vld [vmem:[#allocation8 + $0x2b4] sm:$0xf]
    %v1296 = vld [vmem:[#allocation8 + $0x2b8] sm:$0xff]
    %v1297 = vld [vmem:[#allocation8 + $0x2c0] sm:$0xf]
    %v1298 = vld [vmem:[#allocation8 + $0x2c4] sm:$0xff]
    %v1299 = vld [vmem:[#allocation8 + $0x2cc] sm:$0xf]
    %v1300 = vld [vmem:[#allocation8 + $0x2d0] sm:$0xff]
    %v1301 = vld [vmem:[#allocation8 + $0x2d8] sm:$0xf]
    %v1302 = vld [vmem:[#allocation8 + $0x2dc] sm:$0xff]
    %v1303 = vld [vmem:[#allocation8 + $0x2e4] sm:$0xf]
    %v1304 = vld [vmem:[#allocation8 + $0x2e8] sm:$0xff]
    %v1305 = vld [vmem:[#allocation8 + $0x2f0] sm:$0xf]
    %v1306 = vld [vmem:[#allocation8 + $0x2f4] sm:$0xff]
    %v1307 = vld [vmem:[#allocation8 + $0x2fc] sm:$0xf]
    %v1308 = vpack.c.bf16 %v1164, %v1164
    %v1309 = vpack.c.bf16 %v1165, %v1165
    %v1310 = vpack.c.bf16 %v1166, %v1166
    %v1311 = vpack.c.bf16 %v1167, %v1167
    %s1312 = scalar_lea.vmem [#allocation11], 6
    %v1313 = vld [vmem:[%s1312] ss:$8 sm:$0x7]
    %v1315 = vlaneseq
    %v1316 = vshrl.u32 %v1315, 7
    %v1317 = vsub.s32 0, %v1316
    %v1318 = vrot.slane %v1313, %v1317
    %v1319 = vlaneseq
    %v1320 = vshrl.u32 %v1319, 7
    %v1321 = vsub.s32 1, %v1320
    %v1322 = vrot.slane %v1313, %v1321
    %v1323 = vlaneseq
    %v1324 = vshrl.u32 %v1323, 7
    %v1325 = vsub.s32 2, %v1324
    %v1326 = vrot.slane %v1313, %v1325
    %v1458 = vunpack.c.l.b16 %v1180
    %v1459 = vunpack.c.h.b16 %v1180
    %v1460 = vunpack.c.l.b16 %v1181
    %v1461 = vunpack.c.l.b16 %v1182
    %v1462 = vunpack.c.h.b16 %v1182
    %v1463 = vunpack.c.l.b16 %v1183
    %v1464 = vunpack.c.l.b16 %v1184
    %v1465 = vunpack.c.h.b16 %v1184
    %v1466 = vunpack.c.l.b16 %v1185
    %v1467 = vunpack.c.l.b16 %v1186
    %v1468 = vunpack.c.h.b16 %v1186
    %v1469 = vunpack.c.l.b16 %v1187
    %v1470 = vunpack.c.l.b16 %v1188
    %v1471 = vunpack.c.h.b16 %v1188
    %v1472 = vunpack.c.l.b16 %v1189
    %v1473 = vunpack.c.l.b16 %v1190
    %v1474 = vunpack.c.h.b16 %v1190
    %v1475 = vunpack.c.l.b16 %v1191
    %v1476 = vunpack.c.l.b16 %v1192
    %v1477 = vunpack.c.h.b16 %v1192
    %v1478 = vunpack.c.l.b16 %v1193
    %v1479 = vunpack.c.l.b16 %v1194
    %v1480 = vunpack.c.h.b16 %v1194
    %v1481 = vunpack.c.l.b16 %v1195
    %v1482 = vunpack.c.l.b16 %v1196
    %v1483 = vunpack.c.h.b16 %v1196
    %v1484 = vunpack.c.l.b16 %v1197
    %v1485 = vunpack.c.l.b16 %v1198
    %v1486 = vunpack.c.h.b16 %v1198
    %v1487 = vunpack.c.l.b16 %v1199
    %v1488 = vunpack.c.l.b16 %v1200
    %v1489 = vunpack.c.h.b16 %v1200
    %v1490 = vunpack.c.l.b16 %v1201
    %v1491 = vunpack.c.l.b16 %v1202
    %v1492 = vunpack.c.h.b16 %v1202
    %v1493 = vunpack.c.l.b16 %v1203
    %v1494 = vunpack.c.l.b16 %v1204
    %v1495 = vunpack.c.h.b16 %v1204
    %v1496 = vunpack.c.l.b16 %v1205
    %v1497 = vunpack.c.l.b16 %v1206
    %v1498 = vunpack.c.h.b16 %v1206
    %v1499 = vunpack.c.l.b16 %v1207
    %v1500 = vunpack.c.l.b16 %v1208
    %v1501 = vunpack.c.h.b16 %v1208
    %v1502 = vunpack.c.l.b16 %v1209
    %v1503 = vunpack.c.l.b16 %v1210
    %v1504 = vunpack.c.h.b16 %v1210
    %v1505 = vunpack.c.l.b16 %v1211
    %v1506 = vunpack.c.l.b16 %v1212
    %v1507 = vunpack.c.h.b16 %v1212
    %v1508 = vunpack.c.l.b16 %v1213
    %v1509 = vunpack.c.l.b16 %v1214
    %v1510 = vunpack.c.h.b16 %v1214
    %v1511 = vunpack.c.l.b16 %v1215
    %v1512 = vunpack.c.l.b16 %v1216
    %v1513 = vunpack.c.h.b16 %v1216
    %v1514 = vunpack.c.l.b16 %v1217
    %v1515 = vunpack.c.l.b16 %v1218
    %v1516 = vunpack.c.h.b16 %v1218
    %v1517 = vunpack.c.l.b16 %v1219
    %v1518 = vunpack.c.l.b16 %v1220
    %v1519 = vunpack.c.h.b16 %v1220
    %v1520 = vunpack.c.l.b16 %v1221
    %v1521 = vunpack.c.l.b16 %v1222
    %v1522 = vunpack.c.h.b16 %v1222
    %v1523 = vunpack.c.l.b16 %v1223
    %v1524 = vunpack.c.l.b16 %v1224
    %v1525 = vunpack.c.h.b16 %v1224
    %v1526 = vunpack.c.l.b16 %v1225
    %v1527 = vunpack.c.l.b16 %v1226
    %v1528 = vunpack.c.h.b16 %v1226
    %v1529 = vunpack.c.l.b16 %v1227
    %v1530 = vunpack.c.l.b16 %v1228
    %v1531 = vunpack.c.h.b16 %v1228
    %v1532 = vunpack.c.l.b16 %v1229
    %v1533 = vunpack.c.l.b16 %v1230
    %v1534 = vunpack.c.h.b16 %v1230
    %v1535 = vunpack.c.l.b16 %v1231
    %v1536 = vunpack.c.l.b16 %v1232
    %v1537 = vunpack.c.h.b16 %v1232
    %v1538 = vunpack.c.l.b16 %v1233
    %v1539 = vunpack.c.l.b16 %v1234
    %v1540 = vunpack.c.h.b16 %v1234
    %v1541 = vunpack.c.l.b16 %v1235
    %v1542 = vunpack.c.l.b16 %v1236
    %v1543 = vunpack.c.h.b16 %v1236
    %v1544 = vunpack.c.l.b16 %v1237
    %v1545 = vunpack.c.l.b16 %v1238
    %v1546 = vunpack.c.h.b16 %v1238
    %v1547 = vunpack.c.l.b16 %v1239
    %v1548 = vunpack.c.l.b16 %v1240
    %v1549 = vunpack.c.h.b16 %v1240
    %v1550 = vunpack.c.l.b16 %v1241
    %v1551 = vunpack.c.l.b16 %v1242
    %v1552 = vunpack.c.h.b16 %v1242
    %v1553 = vunpack.c.l.b16 %v1243
    %v1554 = vunpack.c.l.b16 %v1244
    %v1555 = vunpack.c.h.b16 %v1244
    %v1556 = vunpack.c.l.b16 %v1245
    %v1557 = vunpack.c.l.b16 %v1246
    %v1558 = vunpack.c.h.b16 %v1246
    %v1559 = vunpack.c.l.b16 %v1247
    %v1560 = vunpack.c.l.b16 %v1248
    %v1561 = vunpack.c.h.b16 %v1248
    %v1562 = vunpack.c.l.b16 %v1249
    %v1563 = vunpack.c.l.b16 %v1250
    %v1564 = vunpack.c.h.b16 %v1250
    %v1565 = vunpack.c.l.b16 %v1251
    %v1566 = vunpack.c.l.b16 %v1252
    %v1567 = vunpack.c.h.b16 %v1252
    %v1568 = vunpack.c.l.b16 %v1253
    %v1569 = vunpack.c.l.b16 %v1254
    %v1570 = vunpack.c.h.b16 %v1254
    %v1571 = vunpack.c.l.b16 %v1255
    %v1572 = vunpack.c.l.b16 %v1256
    %v1573 = vunpack.c.h.b16 %v1256
    %v1574 = vunpack.c.l.b16 %v1257
    %v1575 = vunpack.c.l.b16 %v1258
    %v1576 = vunpack.c.h.b16 %v1258
    %v1577 = vunpack.c.l.b16 %v1259
    %v1578 = vunpack.c.l.b16 %v1260
    %v1579 = vunpack.c.h.b16 %v1260
    %v1580 = vunpack.c.l.b16 %v1261
    %v1581 = vunpack.c.l.b16 %v1262
    %v1582 = vunpack.c.h.b16 %v1262
    %v1583 = vunpack.c.l.b16 %v1263
    %v1584 = vunpack.c.l.b16 %v1264
    %v1585 = vunpack.c.h.b16 %v1264
    %v1586 = vunpack.c.l.b16 %v1265
    %v1587 = vunpack.c.l.b16 %v1266
    %v1588 = vunpack.c.h.b16 %v1266
    %v1589 = vunpack.c.l.b16 %v1267
    %v1590 = vunpack.c.l.b16 %v1268
    %v1591 = vunpack.c.h.b16 %v1268
    %v1592 = vunpack.c.l.b16 %v1269
    %v1593 = vunpack.c.l.b16 %v1270
    %v1594 = vunpack.c.h.b16 %v1270
    %v1595 = vunpack.c.l.b16 %v1271
    %v1596 = vunpack.c.l.b16 %v1272
    %v1597 = vunpack.c.h.b16 %v1272
    %v1598 = vunpack.c.l.b16 %v1273
    %v1599 = vunpack.c.l.b16 %v1274
    %v1600 = vunpack.c.h.b16 %v1274
    %v1601 = vunpack.c.l.b16 %v1275
    %v1602 = vunpack.c.l.b16 %v1276
    %v1603 = vunpack.c.h.b16 %v1276
    %v1604 = vunpack.c.l.b16 %v1277
    %v1605 = vunpack.c.l.b16 %v1278
    %v1606 = vunpack.c.h.b16 %v1278
    %v1607 = vunpack.c.l.b16 %v1279
    %v1608 = vunpack.c.l.b16 %v1280
    %v1609 = vunpack.c.h.b16 %v1280
    %v1610 = vunpack.c.l.b16 %v1281
    %v1611 = vunpack.c.l.b16 %v1282
    %v1612 = vunpack.c.h.b16 %v1282
    %v1613 = vunpack.c.l.b16 %v1283
    %v1614 = vunpack.c.l.b16 %v1284
    %v1615 = vunpack.c.h.b16 %v1284
    %v1616 = vunpack.c.l.b16 %v1285
    %v1617 = vunpack.c.l.b16 %v1286
    %v1618 = vunpack.c.h.b16 %v1286
    %v1619 = vunpack.c.l.b16 %v1287
    %v1620 = vunpack.c.l.b16 %v1288
    %v1621 = vunpack.c.h.b16 %v1288
    %v1622 = vunpack.c.l.b16 %v1289
    %v1623 = vunpack.c.l.b16 %v1290
    %v1624 = vunpack.c.h.b16 %v1290
    %v1625 = vunpack.c.l.b16 %v1291
    %v1626 = vunpack.c.l.b16 %v1292
    %v1627 = vunpack.c.h.b16 %v1292
    %v1628 = vunpack.c.l.b16 %v1293
    %v1629 = vunpack.c.l.b16 %v1294
    %v1630 = vunpack.c.h.b16 %v1294
    %v1631 = vunpack.c.l.b16 %v1295
    %v1632 = vunpack.c.l.b16 %v1296
    %v1633 = vunpack.c.h.b16 %v1296
    %v1634 = vunpack.c.l.b16 %v1297
    %v1635 = vunpack.c.l.b16 %v1298
    %v1636 = vunpack.c.h.b16 %v1298
    %v1637 = vunpack.c.l.b16 %v1299
    %v1638 = vunpack.c.l.b16 %v1300
    %v1639 = vunpack.c.h.b16 %v1300
    %v1640 = vunpack.c.l.b16 %v1301
    %v1641 = vunpack.c.l.b16 %v1302
    %v1642 = vunpack.c.h.b16 %v1302
    %v1643 = vunpack.c.l.b16 %v1303
    %v1644 = vunpack.c.l.b16 %v1304
    %v1645 = vunpack.c.h.b16 %v1304
    %v1646 = vunpack.c.l.b16 %v1305
    %v1647 = vunpack.c.l.b16 %v1306
    %v1648 = vunpack.c.h.b16 %v1306
    %v1649 = vunpack.c.l.b16 %v1307
    %v1650 = vpack.c.b16 %v1461, %v1458
    %v1651 = vpack.c.b16 %v1462, %v1459
    %v1652 = vpack.c.b16 %v1463, %v1460
    %v1653 = vpack.c.b16 %v1467, %v1464
    %v1654 = vpack.c.b16 %v1468, %v1465
    %v1655 = vpack.c.b16 %v1469, %v1466
    %v1656 = vpack.c.b16 %v1473, %v1470
    %v1657 = vpack.c.b16 %v1474, %v1471
    %v1658 = vpack.c.b16 %v1475, %v1472
    %v1659 = vpack.c.b16 %v1479, %v1476
    %v1660 = vpack.c.b16 %v1480, %v1477
    %v1661 = vpack.c.b16 %v1481, %v1478
    %v1662 = vpack.c.b16 %v1485, %v1482
    %v1663 = vpack.c.b16 %v1486, %v1483
    %v1664 = vpack.c.b16 %v1487, %v1484
    %v1665 = vpack.c.b16 %v1491, %v1488
    %v1666 = vpack.c.b16 %v1492, %v1489
    %v1667 = vpack.c.b16 %v1493, %v1490
    %v1668 = vpack.c.b16 %v1497, %v1494
    %v1669 = vpack.c.b16 %v1498, %v1495
    %v1670 = vpack.c.b16 %v1499, %v1496
    %v1671 = vpack.c.b16 %v1503, %v1500
    %v1672 = vpack.c.b16 %v1504, %v1501
    %v1673 = vpack.c.b16 %v1505, %v1502
    %v1674 = vpack.c.b16 %v1509, %v1506
    %v1675 = vpack.c.b16 %v1510, %v1507
    %v1676 = vpack.c.b16 %v1511, %v1508
    %v1677 = vpack.c.b16 %v1515, %v1512
    %v1678 = vpack.c.b16 %v1516, %v1513
    %v1679 = vpack.c.b16 %v1517, %v1514
    %v1680 = vpack.c.b16 %v1521, %v1518
    %v1681 = vpack.c.b16 %v1522, %v1519
    %v1682 = vpack.c.b16 %v1523, %v1520
    %v1683 = vpack.c.b16 %v1527, %v1524
    %v1684 = vpack.c.b16 %v1528, %v1525
    %v1685 = vpack.c.b16 %v1529, %v1526
    %v1686 = vpack.c.b16 %v1533, %v1530
    %v1687 = vpack.c.b16 %v1534, %v1531
    %v1688 = vpack.c.b16 %v1535, %v1532
    %v1689 = vpack.c.b16 %v1539, %v1536
    %v1690 = vpack.c.b16 %v1540, %v1537
    %v1691 = vpack.c.b16 %v1541, %v1538
    %v1692 = vpack.c.b16 %v1545, %v1542
    %v1693 = vpack.c.b16 %v1546, %v1543
    %v1694 = vpack.c.b16 %v1547, %v1544
    %v1695 = vpack.c.b16 %v1551, %v1548
    %v1696 = vpack.c.b16 %v1552, %v1549
    %v1697 = vpack.c.b16 %v1553, %v1550
    %v1698 = vpack.c.b16 %v1557, %v1554
    %v1699 = vpack.c.b16 %v1558, %v1555
    %v1700 = vpack.c.b16 %v1559, %v1556
    %v1701 = vpack.c.b16 %v1563, %v1560
    %v1702 = vpack.c.b16 %v1564, %v1561
    %v1703 = vpack.c.b16 %v1565, %v1562
    %v1704 = vpack.c.b16 %v1569, %v1566
    %v1705 = vpack.c.b16 %v1570, %v1567
    %v1706 = vpack.c.b16 %v1571, %v1568
    %v1707 = vpack.c.b16 %v1575, %v1572
    %v1708 = vpack.c.b16 %v1576, %v1573
    %v1709 = vpack.c.b16 %v1577, %v1574
    %v1710 = vpack.c.b16 %v1581, %v1578
    %v1711 = vpack.c.b16 %v1582, %v1579
    %v1712 = vpack.c.b16 %v1583, %v1580
    %v1713 = vpack.c.b16 %v1587, %v1584
    %v1714 = vpack.c.b16 %v1588, %v1585
    %v1715 = vpack.c.b16 %v1589, %v1586
    %v1716 = vpack.c.b16 %v1593, %v1590
    %v1717 = vpack.c.b16 %v1594, %v1591
    %v1718 = vpack.c.b16 %v1595, %v1592
    %v1719 = vpack.c.b16 %v1599, %v1596
    %v1720 = vpack.c.b16 %v1600, %v1597
    %v1721 = vpack.c.b16 %v1601, %v1598
    %v1722 = vpack.c.b16 %v1605, %v1602
    %v1723 = vpack.c.b16 %v1606, %v1603
    %v1724 = vpack.c.b16 %v1607, %v1604
    %v1725 = vpack.c.b16 %v1611, %v1608
    %v1726 = vpack.c.b16 %v1612, %v1609
    %v1727 = vpack.c.b16 %v1613, %v1610
    %v1728 = vpack.c.b16 %v1617, %v1614
    %v1729 = vpack.c.b16 %v1618, %v1615
    %v1730 = vpack.c.b16 %v1619, %v1616
    %v1731 = vpack.c.b16 %v1623, %v1620
    %v1732 = vpack.c.b16 %v1624, %v1621
    %v1733 = vpack.c.b16 %v1625, %v1622
    %v1734 = vpack.c.b16 %v1629, %v1626
    %v1735 = vpack.c.b16 %v1630, %v1627
    %v1736 = vpack.c.b16 %v1631, %v1628
    %v1737 = vpack.c.b16 %v1635, %v1632
    %v1738 = vpack.c.b16 %v1636, %v1633
    %v1739 = vpack.c.b16 %v1637, %v1634
    %v1740 = vpack.c.b16 %v1641, %v1638
    %v1741 = vpack.c.b16 %v1642, %v1639
    %v1742 = vpack.c.b16 %v1643, %v1640
    %v1743 = vpack.c.b16 %v1647, %v1644
    %v1744 = vpack.c.b16 %v1648, %v1645
    %v1745 = vpack.c.b16 %v1649, %v1646
    %1842 = vmatprep.subr.bf16.mxu0 %v1651
    %1843 = vmatpush1.bf16.msra.mxu0 %v1650
    %1844 = vmatprep.subr.bf16.mxu0 %v1654
    %1845 = vmatpush1.bf16.msra.mxu0 %v1653
    %1846 = vmatprep.subr.bf16.mxu0 %v1657
    %1847 = vmatpush1.bf16.msra.mxu0 %v1656
    %1848 = vmatprep.subr.bf16.mxu0 %v1660
    %1849 = vmatpush1.bf16.msra.mxu0 %v1659
    %1850 = vmatprep.subr.bf16.mxu0 %v1663
    %1851 = vmatpush1.bf16.msra.mxu0 %v1662
    %1852 = vmatprep.subr.bf16.mxu0 %v1666
    %1853 = vmatpush1.bf16.msra.mxu0 %v1665
    %1854 = vmatprep.subr.bf16.mxu0 %v1669
    %1855 = vmatpush1.bf16.msra.mxu0 %v1668
    %1856 = vmatprep.subr.bf16.mxu0 %v1672
    %1857 = vmatpush1.bf16.msra.mxu0 %v1671
    %1858 = vmatprep.subr.bf16.mxu0 %v1675
    %1859 = vmatpush1.bf16.msra.mxu0 %v1674
    %1860 = vmatprep.subr.bf16.mxu0 %v1678
    %1861 = vmatpush1.bf16.msra.mxu0 %v1677
    %1862 = vmatprep.subr.bf16.mxu0 %v1681
    %1863 = vmatpush1.bf16.msra.mxu0 %v1680
    %1864 = vmatprep.subr.bf16.mxu0 %v1684
    %1865 = vmatpush1.bf16.msra.mxu0 %v1683
    %1866 = vmatprep.subr.bf16.mxu0 %v1687
    %1867 = vmatpush1.bf16.msra.mxu0 %v1686
    %1868 = vmatprep.subr.bf16.mxu0 %v1690
    %1869 = vmatpush1.bf16.msra.mxu0 %v1689
    %1870 = vmatprep.subr.bf16.mxu0 %v1693
    %1871 = vmatpush1.bf16.msra.mxu0 %v1692
    %1872 = vmatprep.subr.bf16.mxu0 %v1696
    %1873 = vmatpush1.bf16.msra.mxu0 %v1695
    %1874 = vmatprep.mubr.bf16.mxu0 %v1309
    %1875 = vmatmul.mubr.bf16.gmra.mrb[0].mxu0 %v1308
    %v1876 = vpop.f32.mrb[0].mxu0
    %v1877 = vadd.f32 %v1318, %v1876
    %v1878 = vpop.f32.mrb[0].mxu0
    %v1879 = vadd.f32 %v1322, %v1878
    %v1880 = vpop.f32.mrb[0].mxu0
    %v1881 = vpop.f32.mrb[0].mxu0
    %1882 = vdwg.mxu0
    %1883 = vmatprep.subr.bf16.mxu0 %v1699
    %1884 = vmatpush1.bf16.msra.mxu0 %v1698
    %1885 = vmatprep.subr.bf16.mxu0 %v1702
    %1886 = vmatpush1.bf16.msra.mxu0 %v1701
    %1887 = vmatprep.subr.bf16.mxu0 %v1705
    %1888 = vmatpush1.bf16.msra.mxu0 %v1704
    %1889 = vmatprep.subr.bf16.mxu0 %v1708
    %1890 = vmatpush1.bf16.msra.mxu0 %v1707
    %1891 = vmatprep.subr.bf16.mxu0 %v1711
    %1892 = vmatpush1.bf16.msra.mxu0 %v1710
    %1893 = vmatprep.subr.bf16.mxu0 %v1714
    %1894 = vmatpush1.bf16.msra.mxu0 %v1713
    %1895 = vmatprep.subr.bf16.mxu0 %v1717
    %1896 = vmatpush1.bf16.msra.mxu0 %v1716
    %1897 = vmatprep.subr.bf16.mxu0 %v1720
    %1898 = vmatpush1.bf16.msra.mxu0 %v1719
    %1899 = vmatprep.subr.bf16.mxu0 %v1723
    %1900 = vmatpush1.bf16.msra.mxu0 %v1722
    %1901 = vmatprep.subr.bf16.mxu0 %v1726
    %1902 = vmatpush1.bf16.msra.mxu0 %v1725
    %1903 = vmatprep.subr.bf16.mxu0 %v1729
    %1904 = vmatpush1.bf16.msra.mxu0 %v1728
    %1905 = vmatprep.subr.bf16.mxu0 %v1732
    %1906 = vmatpush1.bf16.msra.mxu0 %v1731
    %1907 = vmatprep.subr.bf16.mxu0 %v1735
    %1908 = vmatpush1.bf16.msra.mxu0 %v1734
    %1909 = vmatprep.subr.bf16.mxu0 %v1738
    %1910 = vmatpush1.bf16.msra.mxu0 %v1737
    %1911 = vmatprep.subr.bf16.mxu0 %v1741
    %1912 = vmatpush1.bf16.msra.mxu0 %v1740
    %1913 = vmatprep.subr.bf16.mxu0 %v1744
    %1914 = vmatpush1.bf16.msra.mxu0 %v1743
    %1915 = vmatprep.mubr.bf16.mxu0 %v1311
    %1916 = vmatmul.mubr.bf16.gmra.mrb[0].mxu0 %v1310
    %v1917 = vpop.f32.mrb[0].mxu0
    %v1918 = vadd.f32 %v1877, %v1917
    %v1919 = vpop.f32.mrb[0].mxu0
    %v1920 = vadd.f32 %v1879, %v1919
    %v1921 = vpop.f32.mrb[0].mxu0
    %v1922 = vpop.f32.mrb[0].mxu0
    %1923 = vdwg.mxu0
    %1924 = vmatprep.subr.bf16.mxu0 0
    %1925 = vmatpush1.bf16.msra.mxu0 %v1652
    %1926 = vmatprep.subr.bf16.mxu0 0
    %1927 = vmatpush1.bf16.msra.mxu0 %v1655
    %1928 = vmatprep.subr.bf16.mxu0 0
    %1929 = vmatpush1.bf16.msra.mxu0 %v1658
    %1930 = vmatprep.subr.bf16.mxu0 0
    %1931 = vmatpush1.bf16.msra.mxu0 %v1661
    %1932 = vmatprep.subr.bf16.mxu0 0
    %1933 = vmatpush1.bf16.msra.mxu0 %v1664
    %1934 = vmatprep.subr.bf16.mxu0 0
    %1935 = vmatpush1.bf16.msra.mxu0 %v1667
    %1936 = vmatprep.subr.bf16.mxu0 0
    %1937 = vmatpush1.bf16.msra.mxu0 %v1670
    %1938 = vmatprep.subr.bf16.mxu0 0
    %1939 = vmatpush1.bf16.msra.mxu0 %v1673
    %1940 = vmatprep.subr.bf16.mxu0 0
    %1941 = vmatpush1.bf16.msra.mxu0 %v1676
    %1942 = vmatprep.subr.bf16.mxu0 0
    %1943 = vmatpush1.bf16.msra.mxu0 %v1679
    %1944 = vmatprep.subr.bf16.mxu0 0
    %1945 = vmatpush1.bf16.msra.mxu0 %v1682
    %1946 = vmatprep.subr.bf16.mxu0 0
    %1947 = vmatpush1.bf16.msra.mxu0 %v1685
    %1948 = vmatprep.subr.bf16.mxu0 0
    %1949 = vmatpush1.bf16.msra.mxu0 %v1688
    %1950 = vmatprep.subr.bf16.mxu0 0
    %1951 = vmatpush1.bf16.msra.mxu0 %v1691
    %1952 = vmatprep.subr.bf16.mxu0 0
    %1953 = vmatpush1.bf16.msra.mxu0 %v1694
    %1954 = vmatprep.subr.bf16.mxu0 0
    %1955 = vmatpush1.bf16.msra.mxu0 %v1697
    %1956 = vmatprep.mubr.bf16.mxu0 %v1309
    %1957 = vmatmul.mubr.bf16.gmra.mrb[0].mxu0 %v1308
    %v1958 = vpop.f32.mrb[0].mxu0
    %v1959 = vadd.f32 %v1326, %v1958
    %v1960 = vpop.f32.mrb[0].mxu0
    %v1961 = vpop.f32.mrb[0].mxu0
    %v1962 = vpop.f32.mrb[0].mxu0
    %1963 = vdwg.mxu0
    %1964 = vmatprep.subr.bf16.mxu0 0
    %1965 = vmatpush1.bf16.msra.mxu0 %v1700
    %1966 = vmatprep.subr.bf16.mxu0 0
    %1967 = vmatpush1.bf16.msra.mxu0 %v1703
    %1968 = vmatprep.subr.bf16.mxu0 0
    %1969 = vmatpush1.bf16.msra.mxu0 %v1706
    %1970 = vmatprep.subr.bf16.mxu0 0
    %1971 = vmatpush1.bf16.msra.mxu0 %v1709
    %1972 = vmatprep.subr.bf16.mxu0 0
    %1973 = vmatpush1.bf16.msra.mxu0 %v1712
    %1974 = vmatprep.subr.bf16.mxu0 0
    %1975 = vmatpush1.bf16.msra.mxu0 %v1715
    %1976 = vmatprep.subr.bf16.mxu0 0
    %1977 = vmatpush1.bf16.msra.mxu0 %v1718
    %1978 = vmatprep.subr.bf16.mxu0 0
    %1979 = vmatpush1.bf16.msra.mxu0 %v1721
    %1980 = vmatprep.subr.bf16.mxu0 0
    %1981 = vmatpush1.bf16.msra.mxu0 %v1724
    %1982 = vmatprep.subr.bf16.mxu0 0
    %1983 = vmatpush1.bf16.msra.mxu0 %v1727
    %1984 = vmatprep.subr.bf16.mxu0 0
    %1985 = vmatpush1.bf16.msra.mxu0 %v1730
    %1986 = vmatprep.subr.bf16.mxu0 0
    %1987 = vmatpush1.bf16.msra.mxu0 %v1733
    %1988 = vmatprep.subr.bf16.mxu0 0
    %1989 = vmatpush1.bf16.msra.mxu0 %v1736
    %1990 = vmatprep.subr.bf16.mxu0 0
    %1991 = vmatpush1.bf16.msra.mxu0 %v1739
    %1992 = vmatprep.subr.bf16.mxu0 0
    %1993 = vmatpush1.bf16.msra.mxu0 %v1742
    %1994 = vmatprep.subr.bf16.mxu0 0
    %1995 = vmatpush1.bf16.msra.mxu0 %v1745
    %1996 = vmatprep.mubr.bf16.mxu0 %v1311
    %1997 = vmatmul.mubr.bf16.gmra.mrb[0].mxu0 %v1310
    %v1998 = vpop.f32.mrb[0].mxu0
    %v1999 = vadd.f32 %v1959, %v1998
    %v2000 = vpop.f32.mrb[0].mxu0
    %v2001 = vpop.f32.mrb[0].mxu0
    %v2002 = vpop.f32.mrb[0].mxu0
    %2003 = vdwg.mxu0
    %v2004 = vld [vmem:[#allocation8 + $0x300] sm:$0xff]
    %v2005 = vld [vmem:[#allocation8 + $0x308] sm:$0xf]
    %v2006 = vld [vmem:[#allocation8 + $0x30c] sm:$0xff]
    %v2007 = vld [vmem:[#allocation8 + $0x314] sm:$0xf]
    %v2008 = vld [vmem:[#allocation8 + $0x318] sm:$0xff]
    %v2009 = vld [vmem:[#allocation8 + $0x320] sm:$0xf]
    %v2010 = vld [vmem:[#allocation8 + $0x324] sm:$0xff]
    %v2011 = vld [vmem:[#allocation8 + $0x32c] sm:$0xf]
    %v2012 = vld [vmem:[#allocation8 + $0x330] sm:$0xff]
    %v2013 = vld [vmem:[#allocation8 + $0x338] sm:$0xf]
    %v2014 = vld [vmem:[#allocation8 + $0x33c] sm:$0xff]
    %v2015 = vld [vmem:[#allocation8 + $0x344] sm:$0xf]
    %v2016 = vld [vmem:[#allocation8 + $0x348] sm:$0xff]
    %v2017 = vld [vmem:[#allocation8 + $0x350] sm:$0xf]
    %v2018 = vld [vmem:[#allocation8 + $0x354] sm:$0xff]
    %v2019 = vld [vmem:[#allocation8 + $0x35c] sm:$0xf]
    %v2020 = vld [vmem:[#allocation8 + $0x360] sm:$0xff]
    %v2021 = vld [vmem:[#allocation8 + $0x368] sm:$0xf]
    %v2022 = vld [vmem:[#allocation8 + $0x36c] sm:$0xff]
    %v2023 = vld [vmem:[#allocation8 + $0x374] sm:$0xf]
    %v2024 = vld [vmem:[#allocation8 + $0x378] sm:$0xff]
    %v2025 = vld [vmem:[#allocation8 + $0x380] sm:$0xf]
    %v2026 = vld [vmem:[#allocation8 + $0x384] sm:$0xff]
    %v2027 = vld [vmem:[#allocation8 + $0x38c] sm:$0xf]
    %v2028 = vld [vmem:[#allocation8 + $0x390] sm:$0xff]
    %v2029 = vld [vmem:[#allocation8 + $0x398] sm:$0xf]
    %v2030 = vld [vmem:[#allocation8 + $0x39c] sm:$0xff]
    %v2031 = vld [vmem:[#allocation8 + $0x3a4] sm:$0xf]
    %v2032 = vld [vmem:[#allocation8 + $0x3a8] sm:$0xff]
    %v2033 = vld [vmem:[#allocation8 + $0x3b0] sm:$0xf]
    %v2034 = vld [vmem:[#allocation8 + $0x3b4] sm:$0xff]
    %v2035 = vld [vmem:[#allocation8 + $0x3bc] sm:$0xf]
    %v2036 = vld [vmem:[#allocation8 + $0x3c0] sm:$0xff]
    %v2037 = vld [vmem:[#allocation8 + $0x3c8] sm:$0xf]
    %v2038 = vld [vmem:[#allocation8 + $0x3cc] sm:$0xff]
    %v2039 = vld [vmem:[#allocation8 + $0x3d4] sm:$0xf]
    %v2040 = vld [vmem:[#allocation8 + $0x3d8] sm:$0xff]
    %v2041 = vld [vmem:[#allocation8 + $0x3e0] sm:$0xf]
    %v2042 = vld [vmem:[#allocation8 + $0x3e4] sm:$0xff]
    %v2043 = vld [vmem:[#allocation8 + $0x3ec] sm:$0xf]
    %v2044 = vld [vmem:[#allocation8 + $0x3f0] sm:$0xff]
    %v2045 = vld [vmem:[#allocation8 + $0x3f8] sm:$0xf]
    %v2046 = vld [vmem:[#allocation8 + $0x3fc] sm:$0xff]
    %v2047 = vld [vmem:[#allocation8 + $0x404] sm:$0xf]
    %v2048 = vld [vmem:[#allocation8 + $0x408] sm:$0xff]
    %v2049 = vld [vmem:[#allocation8 + $0x410] sm:$0xf]
    %v2050 = vld [vmem:[#allocation8 + $0x414] sm:$0xff]
    %v2051 = vld [vmem:[#allocation8 + $0x41c] sm:$0xf]
    %v2052 = vld [vmem:[#allocation8 + $0x420] sm:$0xff]
    %v2053 = vld [vmem:[#allocation8 + $0x428] sm:$0xf]
    %v2054 = vld [vmem:[#allocation8 + $0x42c] sm:$0xff]
    %v2055 = vld [vmem:[#allocation8 + $0x434] sm:$0xf]
    %v2056 = vld [vmem:[#allocation8 + $0x438] sm:$0xff]
    %v2057 = vld [vmem:[#allocation8 + $0x440] sm:$0xf]
    %v2058 = vld [vmem:[#allocation8 + $0x444] sm:$0xff]
    %v2059 = vld [vmem:[#allocation8 + $0x44c] sm:$0xf]
    %v2060 = vld [vmem:[#allocation8 + $0x450] sm:$0xff]
    %v2061 = vld [vmem:[#allocation8 + $0x458] sm:$0xf]
    %v2062 = vld [vmem:[#allocation8 + $0x45c] sm:$0xff]
    %v2063 = vld [vmem:[#allocation8 + $0x464] sm:$0xf]
    %v2064 = vld [vmem:[#allocation8 + $0x468] sm:$0xff]
    %v2065 = vld [vmem:[#allocation8 + $0x470] sm:$0xf]
    %v2066 = vld [vmem:[#allocation8 + $0x474] sm:$0xff]
    %v2067 = vld [vmem:[#allocation8 + $0x47c] sm:$0xf]
    %v2068 = vld [vmem:[#allocation8 + $0x480] sm:$0xff]
    %v2069 = vld [vmem:[#allocation8 + $0x488] sm:$0xf]
    %v2070 = vld [vmem:[#allocation8 + $0x48c] sm:$0xff]
    %v2071 = vld [vmem:[#allocation8 + $0x494] sm:$0xf]
    %v2072 = vld [vmem:[#allocation8 + $0x498] sm:$0xff]
    %v2073 = vld [vmem:[#allocation8 + $0x4a0] sm:$0xf]
    %v2074 = vld [vmem:[#allocation8 + $0x4a4] sm:$0xff]
    %v2075 = vld [vmem:[#allocation8 + $0x4ac] sm:$0xf]
    %v2076 = vld [vmem:[#allocation8 + $0x4b0] sm:$0xff]
    %v2077 = vld [vmem:[#allocation8 + $0x4b8] sm:$0xf]
    %v2078 = vld [vmem:[#allocation8 + $0x4bc] sm:$0xff]
    %v2079 = vld [vmem:[#allocation8 + $0x4c4] sm:$0xf]
    %v2080 = vld [vmem:[#allocation8 + $0x4c8] sm:$0xff]
    %v2081 = vld [vmem:[#allocation8 + $0x4d0] sm:$0xf]
    %v2082 = vld [vmem:[#allocation8 + $0x4d4] sm:$0xff]
    %v2083 = vld [vmem:[#allocation8 + $0x4dc] sm:$0xf]
    %v2084 = vld [vmem:[#allocation8 + $0x4e0] sm:$0xff]
    %v2085 = vld [vmem:[#allocation8 + $0x4e8] sm:$0xf]
    %v2086 = vld [vmem:[#allocation8 + $0x4ec] sm:$0xff]
    %v2087 = vld [vmem:[#allocation8 + $0x4f4] sm:$0xf]
    %v2088 = vld [vmem:[#allocation8 + $0x4f8] sm:$0xff]
    %v2089 = vld [vmem:[#allocation8 + $0x500] sm:$0xf]
    %v2090 = vld [vmem:[#allocation8 + $0x504] sm:$0xff]
    %v2091 = vld [vmem:[#allocation8 + $0x50c] sm:$0xf]
    %v2092 = vld [vmem:[#allocation8 + $0x510] sm:$0xff]
    %v2093 = vld [vmem:[#allocation8 + $0x518] sm:$0xf]
    %v2094 = vld [vmem:[#allocation8 + $0x51c] sm:$0xff]
    %v2095 = vld [vmem:[#allocation8 + $0x524] sm:$0xf]
    %v2096 = vld [vmem:[#allocation8 + $0x528] sm:$0xff]
    %v2097 = vld [vmem:[#allocation8 + $0x530] sm:$0xf]
    %v2098 = vld [vmem:[#allocation8 + $0x534] sm:$0xff]
    %v2099 = vld [vmem:[#allocation8 + $0x53c] sm:$0xf]
    %v2100 = vld [vmem:[#allocation8 + $0x540] sm:$0xff]
    %v2101 = vld [vmem:[#allocation8 + $0x548] sm:$0xf]
    %v2102 = vld [vmem:[#allocation8 + $0x54c] sm:$0xff]
    %v2103 = vld [vmem:[#allocation8 + $0x554] sm:$0xf]
    %v2104 = vld [vmem:[#allocation8 + $0x558] sm:$0xff]
    %v2105 = vld [vmem:[#allocation8 + $0x560] sm:$0xf]
    %v2106 = vld [vmem:[#allocation8 + $0x564] sm:$0xff]
    %v2107 = vld [vmem:[#allocation8 + $0x56c] sm:$0xf]
    %v2108 = vld [vmem:[#allocation8 + $0x570] sm:$0xff]
    %v2109 = vld [vmem:[#allocation8 + $0x578] sm:$0xf]
    %v2110 = vld [vmem:[#allocation8 + $0x57c] sm:$0xff]
    %v2111 = vld [vmem:[#allocation8 + $0x584] sm:$0xf]
    %v2112 = vld [vmem:[#allocation8 + $0x588] sm:$0xff]
    %v2113 = vld [vmem:[#allocation8 + $0x590] sm:$0xf]
    %v2114 = vld [vmem:[#allocation8 + $0x594] sm:$0xff]
    %v2115 = vld [vmem:[#allocation8 + $0x59c] sm:$0xf]
    %v2116 = vld [vmem:[#allocation8 + $0x5a0] sm:$0xff]
    %v2117 = vld [vmem:[#allocation8 + $0x5a8] sm:$0xf]
    %v2118 = vld [vmem:[#allocation8 + $0x5ac] sm:$0xff]
    %v2119 = vld [vmem:[#allocation8 + $0x5b4] sm:$0xf]
    %v2120 = vld [vmem:[#allocation8 + $0x5b8] sm:$0xff]
    %v2121 = vld [vmem:[#allocation8 + $0x5c0] sm:$0xf]
    %v2122 = vld [vmem:[#allocation8 + $0x5c4] sm:$0xff]
    %v2123 = vld [vmem:[#allocation8 + $0x5cc] sm:$0xf]
    %v2124 = vld [vmem:[#allocation8 + $0x5d0] sm:$0xff]
    %v2125 = vld [vmem:[#allocation8 + $0x5d8] sm:$0xf]
    %v2126 = vld [vmem:[#allocation8 + $0x5dc] sm:$0xff]
    %v2127 = vld [vmem:[#allocation8 + $0x5e4] sm:$0xf]
    %v2128 = vld [vmem:[#allocation8 + $0x5e8] sm:$0xff]
    %v2129 = vld [vmem:[#allocation8 + $0x5f0] sm:$0xf]
    %v2130 = vld [vmem:[#allocation8 + $0x5f4] sm:$0xff]
    %v2131 = vld [vmem:[#allocation8 + $0x5fc] sm:$0xf]
    %v2132 = vpack.c.bf16 %v1176, %v1176
    %v2133 = vpack.c.bf16 %v1177, %v1177
    %v2134 = vpack.c.bf16 %v1178, %v1178
    %v2135 = vpack.c.bf16 %v1179, %v1179
    %s2136 = scalar_lea.vmem [#allocation11], 30
    %v2137 = vld [vmem:[%s2136] ss:$8 sm:$0x7]
    %v2139 = vlaneseq
    %v2140 = vshrl.u32 %v2139, 7
    %v2141 = vsub.s32 0, %v2140
    %v2142 = vrot.slane %v2137, %v2141
    %v2143 = vlaneseq
    %v2144 = vshrl.u32 %v2143, 7
    %v2145 = vsub.s32 1, %v2144
    %v2146 = vrot.slane %v2137, %v2145
    %v2147 = vlaneseq
    %v2148 = vshrl.u32 %v2147, 7
    %v2149 = vsub.s32 2, %v2148
    %v2150 = vrot.slane %v2137, %v2149
    %v2282 = vunpack.c.l.b16 %v2004
    %v2283 = vunpack.c.h.b16 %v2004
    %v2284 = vunpack.c.l.b16 %v2005
    %v2285 = vunpack.c.l.b16 %v2006
    %v2286 = vunpack.c.h.b16 %v2006
    %v2287 = vunpack.c.l.b16 %v2007
    %v2288 = vunpack.c.l.b16 %v2008
    %v2289 = vunpack.c.h.b16 %v2008
    %v2290 = vunpack.c.l.b16 %v2009
    %v2291 = vunpack.c.l.b16 %v2010
    %v2292 = vunpack.c.h.b16 %v2010
    %v2293 = vunpack.c.l.b16 %v2011
    %v2294 = vunpack.c.l.b16 %v2012
    %v2295 = vunpack.c.h.b16 %v2012
    %v2296 = vunpack.c.l.b16 %v2013
    %v2297 = vunpack.c.l.b16 %v2014
    %v2298 = vunpack.c.h.b16 %v2014
    %v2299 = vunpack.c.l.b16 %v2015
    %v2300 = vunpack.c.l.b16 %v2016
    %v2301 = vunpack.c.h.b16 %v2016
    %v2302 = vunpack.c.l.b16 %v2017
    %v2303 = vunpack.c.l.b16 %v2018
    %v2304 = vunpack.c.h.b16 %v2018
    %v2305 = vunpack.c.l.b16 %v2019
    %v2306 = vunpack.c.l.b16 %v2020
    %v2307 = vunpack.c.h.b16 %v2020
    %v2308 = vunpack.c.l.b16 %v2021
    %v2309 = vunpack.c.l.b16 %v2022
    %v2310 = vunpack.c.h.b16 %v2022
    %v2311 = vunpack.c.l.b16 %v2023
    %v2312 = vunpack.c.l.b16 %v2024
    %v2313 = vunpack.c.h.b16 %v2024
    %v2314 = vunpack.c.l.b16 %v2025
    %v2315 = vunpack.c.l.b16 %v2026
    %v2316 = vunpack.c.h.b16 %v2026
    %v2317 = vunpack.c.l.b16 %v2027
    %v2318 = vunpack.c.l.b16 %v2028
    %v2319 = vunpack.c.h.b16 %v2028
    %v2320 = vunpack.c.l.b16 %v2029
    %v2321 = vunpack.c.l.b16 %v2030
    %v2322 = vunpack.c.h.b16 %v2030
    %v2323 = vunpack.c.l.b16 %v2031
    %v2324 = vunpack.c.l.b16 %v2032
    %v2325 = vunpack.c.h.b16 %v2032
    %v2326 = vunpack.c.l.b16 %v2033
    %v2327 = vunpack.c.l.b16 %v2034
    %v2328 = vunpack.c.h.b16 %v2034
    %v2329 = vunpack.c.l.b16 %v2035
    %v2330 = vunpack.c.l.b16 %v2036
    %v2331 = vunpack.c.h.b16 %v2036
    %v2332 = vunpack.c.l.b16 %v2037
    %v2333 = vunpack.c.l.b16 %v2038
    %v2334 = vunpack.c.h.b16 %v2038
    %v2335 = vunpack.c.l.b16 %v2039
    %v2336 = vunpack.c.l.b16 %v2040
    %v2337 = vunpack.c.h.b16 %v2040
    %v2338 = vunpack.c.l.b16 %v2041
    %v2339 = vunpack.c.l.b16 %v2042
    %v2340 = vunpack.c.h.b16 %v2042
    %v2341 = vunpack.c.l.b16 %v2043
    %v2342 = vunpack.c.l.b16 %v2044
    %v2343 = vunpack.c.h.b16 %v2044
    %v2344 = vunpack.c.l.b16 %v2045
    %v2345 = vunpack.c.l.b16 %v2046
    %v2346 = vunpack.c.h.b16 %v2046
    %v2347 = vunpack.c.l.b16 %v2047
    %v2348 = vunpack.c.l.b16 %v2048
    %v2349 = vunpack.c.h.b16 %v2048
    %v2350 = vunpack.c.l.b16 %v2049
    %v2351 = vunpack.c.l.b16 %v2050
    %v2352 = vunpack.c.h.b16 %v2050
    %v2353 = vunpack.c.l.b16 %v2051
    %v2354 = vunpack.c.l.b16 %v2052
    %v2355 = vunpack.c.h.b16 %v2052
    %v2356 = vunpack.c.l.b16 %v2053
    %v2357 = vunpack.c.l.b16 %v2054
    %v2358 = vunpack.c.h.b16 %v2054
    %v2359 = vunpack.c.l.b16 %v2055
    %v2360 = vunpack.c.l.b16 %v2056
    %v2361 = vunpack.c.h.b16 %v2056
    %v2362 = vunpack.c.l.b16 %v2057
    %v2363 = vunpack.c.l.b16 %v2058
    %v2364 = vunpack.c.h.b16 %v2058
    %v2365 = vunpack.c.l.b16 %v2059
    %v2366 = vunpack.c.l.b16 %v2060
    %v2367 = vunpack.c.h.b16 %v2060
    %v2368 = vunpack.c.l.b16 %v2061
    %v2369 = vunpack.c.l.b16 %v2062
    %v2370 = vunpack.c.h.b16 %v2062
    %v2371 = vunpack.c.l.b16 %v2063
    %v2372 = vunpack.c.l.b16 %v2064
    %v2373 = vunpack.c.h.b16 %v2064
    %v2374 = vunpack.c.l.b16 %v2065
    %v2375 = vunpack.c.l.b16 %v2066
    %v2376 = vunpack.c.h.b16 %v2066
    %v2377 = vunpack.c.l.b16 %v2067
    %v2378 = vunpack.c.l.b16 %v2068
    %v2379 = vunpack.c.h.b16 %v2068
    %v2380 = vunpack.c.l.b16 %v2069
    %v2381 = vunpack.c.l.b16 %v2070
    %v2382 = vunpack.c.h.b16 %v2070
    %v2383 = vunpack.c.l.b16 %v2071
    %v2384 = vunpack.c.l.b16 %v2072
    %v2385 = vunpack.c.h.b16 %v2072
    %v2386 = vunpack.c.l.b16 %v2073
    %v2387 = vunpack.c.l.b16 %v2074
    %v2388 = vunpack.c.h.b16 %v2074
    %v2389 = vunpack.c.l.b16 %v2075
    %v2390 = vunpack.c.l.b16 %v2076
    %v2391 = vunpack.c.h.b16 %v2076
    %v2392 = vunpack.c.l.b16 %v2077
    %v2393 = vunpack.c.l.b16 %v2078
    %v2394 = vunpack.c.h.b16 %v2078
    %v2395 = vunpack.c.l.b16 %v2079
    %v2396 = vunpack.c.l.b16 %v2080
    %v2397 = vunpack.c.h.b16 %v2080
    %v2398 = vunpack.c.l.b16 %v2081
    %v2399 = vunpack.c.l.b16 %v2082
    %v2400 = vunpack.c.h.b16 %v2082
    %v2401 = vunpack.c.l.b16 %v2083
    %v2402 = vunpack.c.l.b16 %v2084
    %v2403 = vunpack.c.h.b16 %v2084
    %v2404 = vunpack.c.l.b16 %v2085
    %v2405 = vunpack.c.l.b16 %v2086
    %v2406 = vunpack.c.h.b16 %v2086
    %v2407 = vunpack.c.l.b16 %v2087
    %v2408 = vunpack.c.l.b16 %v2088
    %v2409 = vunpack.c.h.b16 %v2088
    %v2410 = vunpack.c.l.b16 %v2089
    %v2411 = vunpack.c.l.b16 %v2090
    %v2412 = vunpack.c.h.b16 %v2090
    %v2413 = vunpack.c.l.b16 %v2091
    %v2414 = vunpack.c.l.b16 %v2092
    %v2415 = vunpack.c.h.b16 %v2092
    %v2416 = vunpack.c.l.b16 %v2093
    %v2417 = vunpack.c.l.b16 %v2094
    %v2418 = vunpack.c.h.b16 %v2094
    %v2419 = vunpack.c.l.b16 %v2095
    %v2420 = vunpack.c.l.b16 %v2096
    %v2421 = vunpack.c.h.b16 %v2096
    %v2422 = vunpack.c.l.b16 %v2097
    %v2423 = vunpack.c.l.b16 %v2098
    %v2424 = vunpack.c.h.b16 %v2098
    %v2425 = vunpack.c.l.b16 %v2099
    %v2426 = vunpack.c.l.b16 %v2100
    %v2427 = vunpack.c.h.b16 %v2100
    %v2428 = vunpack.c.l.b16 %v2101
    %v2429 = vunpack.c.l.b16 %v2102
    %v2430 = vunpack.c.h.b16 %v2102
    %v2431 = vunpack.c.l.b16 %v2103
    %v2432 = vunpack.c.l.b16 %v2104
    %v2433 = vunpack.c.h.b16 %v2104
    %v2434 = vunpack.c.l.b16 %v2105
    %v2435 = vunpack.c.l.b16 %v2106
    %v2436 = vunpack.c.h.b16 %v2106
    %v2437 = vunpack.c.l.b16 %v2107
    %v2438 = vunpack.c.l.b16 %v2108
    %v2439 = vunpack.c.h.b16 %v2108
    %v2440 = vunpack.c.l.b16 %v2109
    %v2441 = vunpack.c.l.b16 %v2110
    %v2442 = vunpack.c.h.b16 %v2110
    %v2443 = vunpack.c.l.b16 %v2111
    %v2444 = vunpack.c.l.b16 %v2112
    %v2445 = vunpack.c.h.b16 %v2112
    %v2446 = vunpack.c.l.b16 %v2113
    %v2447 = vunpack.c.l.b16 %v2114
    %v2448 = vunpack.c.h.b16 %v2114
    %v2449 = vunpack.c.l.b16 %v2115
    %v2450 = vunpack.c.l.b16 %v2116
    %v2451 = vunpack.c.h.b16 %v2116
    %v2452 = vunpack.c.l.b16 %v2117
    %v2453 = vunpack.c.l.b16 %v2118
    %v2454 = vunpack.c.h.b16 %v2118
    %v2455 = vunpack.c.l.b16 %v2119
    %v2456 = vunpack.c.l.b16 %v2120
    %v2457 = vunpack.c.h.b16 %v2120
    %v2458 = vunpack.c.l.b16 %v2121
    %v2459 = vunpack.c.l.b16 %v2122
    %v2460 = vunpack.c.h.b16 %v2122
    %v2461 = vunpack.c.l.b16 %v2123
    %v2462 = vunpack.c.l.b16 %v2124
    %v2463 = vunpack.c.h.b16 %v2124
    %v2464 = vunpack.c.l.b16 %v2125
    %v2465 = vunpack.c.l.b16 %v2126
    %v2466 = vunpack.c.h.b16 %v2126
    %v2467 = vunpack.c.l.b16 %v2127
    %v2468 = vunpack.c.l.b16 %v2128
    %v2469 = vunpack.c.h.b16 %v2128
    %v2470 = vunpack.c.l.b16 %v2129
    %v2471 = vunpack.c.l.b16 %v2130
    %v2472 = vunpack.c.h.b16 %v2130
    %v2473 = vunpack.c.l.b16 %v2131
    %v2474 = vpack.c.b16 %v2285, %v2282
    %v2475 = vpack.c.b16 %v2286, %v2283
    %v2476 = vpack.c.b16 %v2287, %v2284
    %v2477 = vpack.c.b16 %v2291, %v2288
    %v2478 = vpack.c.b16 %v2292, %v2289
    %v2479 = vpack.c.b16 %v2293, %v2290
    %v2480 = vpack.c.b16 %v2297, %v2294
    %v2481 = vpack.c.b16 %v2298, %v2295
    %v2482 = vpack.c.b16 %v2299, %v2296
    %v2483 = vpack.c.b16 %v2303, %v2300
    %v2484 = vpack.c.b16 %v2304, %v2301
    %v2485 = vpack.c.b16 %v2305, %v2302
    %v2486 = vpack.c.b16 %v2309, %v2306
    %v2487 = vpack.c.b16 %v2310, %v2307
    %v2488 = vpack.c.b16 %v2311, %v2308
    %v2489 = vpack.c.b16 %v2315, %v2312
    %v2490 = vpack.c.b16 %v2316, %v2313
    %v2491 = vpack.c.b16 %v2317, %v2314
    %v2492 = vpack.c.b16 %v2321, %v2318
    %v2493 = vpack.c.b16 %v2322, %v2319
    %v2494 = vpack.c.b16 %v2323, %v2320
    %v2495 = vpack.c.b16 %v2327, %v2324
    %v2496 = vpack.c.b16 %v2328, %v2325
    %v2497 = vpack.c.b16 %v2329, %v2326
    %v2498 = vpack.c.b16 %v2333, %v2330
    %v2499 = vpack.c.b16 %v2334, %v2331
    %v2500 = vpack.c.b16 %v2335, %v2332
    %v2501 = vpack.c.b16 %v2339, %v2336
    %v2502 = vpack.c.b16 %v2340, %v2337
    %v2503 = vpack.c.b16 %v2341, %v2338
    %v2504 = vpack.c.b16 %v2345, %v2342
    %v2505 = vpack.c.b16 %v2346, %v2343
    %v2506 = vpack.c.b16 %v2347, %v2344
    %v2507 = vpack.c.b16 %v2351, %v2348
    %v2508 = vpack.c.b16 %v2352, %v2349
    %v2509 = vpack.c.b16 %v2353, %v2350
    %v2510 = vpack.c.b16 %v2357, %v2354
    %v2511 = vpack.c.b16 %v2358, %v2355
    %v2512 = vpack.c.b16 %v2359, %v2356
    %v2513 = vpack.c.b16 %v2363, %v2360
    %v2514 = vpack.c.b16 %v2364, %v2361
    %v2515 = vpack.c.b16 %v2365, %v2362
    %v2516 = vpack.c.b16 %v2369, %v2366
    %v2517 = vpack.c.b16 %v2370, %v2367
    %v2518 = vpack.c.b16 %v2371, %v2368
    %v2519 = vpack.c.b16 %v2375, %v2372
    %v2520 = vpack.c.b16 %v2376, %v2373
    %v2521 = vpack.c.b16 %v2377, %v2374
    %v2522 = vpack.c.b16 %v2381, %v2378
    %v2523 = vpack.c.b16 %v2382, %v2379
    %v2524 = vpack.c.b16 %v2383, %v2380
    %v2525 = vpack.c.b16 %v2387, %v2384
    %v2526 = vpack.c.b16 %v2388, %v2385
    %v2527 = vpack.c.b16 %v2389, %v2386
    %v2528 = vpack.c.b16 %v2393, %v2390
    %v2529 = vpack.c.b16 %v2394, %v2391
    %v2530 = vpack.c.b16 %v2395, %v2392
    %v2531 = vpack.c.b16 %v2399, %v2396
    %v2532 = vpack.c.b16 %v2400, %v2397
    %v2533 = vpack.c.b16 %v2401, %v2398
    %v2534 = vpack.c.b16 %v2405, %v2402
    %v2535 = vpack.c.b16 %v2406, %v2403
    %v2536 = vpack.c.b16 %v2407, %v2404
    %v2537 = vpack.c.b16 %v2411, %v2408
    %v2538 = vpack.c.b16 %v2412, %v2409
    %v2539 = vpack.c.b16 %v2413, %v2410
    %v2540 = vpack.c.b16 %v2417, %v2414
    %v2541 = vpack.c.b16 %v2418, %v2415
    %v2542 = vpack.c.b16 %v2419, %v2416
    %v2543 = vpack.c.b16 %v2423, %v2420
    %v2544 = vpack.c.b16 %v2424, %v2421
    %v2545 = vpack.c.b16 %v2425, %v2422
    %v2546 = vpack.c.b16 %v2429, %v2426
    %v2547 = vpack.c.b16 %v2430, %v2427
    %v2548 = vpack.c.b16 %v2431, %v2428
    %v2549 = vpack.c.b16 %v2435, %v2432
    %v2550 = vpack.c.b16 %v2436, %v2433
    %v2551 = vpack.c.b16 %v2437, %v2434
    %v2552 = vpack.c.b16 %v2441, %v2438
    %v2553 = vpack.c.b16 %v2442, %v2439
    %v2554 = vpack.c.b16 %v2443, %v2440
    %v2555 = vpack.c.b16 %v2447, %v2444
    %v2556 = vpack.c.b16 %v2448, %v2445
    %v2557 = vpack.c.b16 %v2449, %v2446
    %v2558 = vpack.c.b16 %v2453, %v2450
    %v2559 = vpack.c.b16 %v2454, %v2451
    %v2560 = vpack.c.b16 %v2455, %v2452
    %v2561 = vpack.c.b16 %v2459, %v2456
    %v2562 = vpack.c.b16 %v2460, %v2457
    %v2563 = vpack.c.b16 %v2461, %v2458
    %v2564 = vpack.c.b16 %v2465, %v2462
    %v2565 = vpack.c.b16 %v2466, %v2463
    %v2566 = vpack.c.b16 %v2467, %v2464
    %v2567 = vpack.c.b16 %v2471, %v2468
    %v2568 = vpack.c.b16 %v2472, %v2469
    %v2569 = vpack.c.b16 %v2473, %v2470
    %2666 = vmatprep.subr.bf16.mxu0 %v2475
    %2667 = vmatpush1.bf16.msra.mxu0 %v2474
    %2668 = vmatprep.subr.bf16.mxu0 %v2478
    %2669 = vmatpush1.bf16.msra.mxu0 %v2477
    %2670 = vmatprep.subr.bf16.mxu0 %v2481
    %2671 = vmatpush1.bf16.msra.mxu0 %v2480
    %2672 = vmatprep.subr.bf16.mxu0 %v2484
    %2673 = vmatpush1.bf16.msra.mxu0 %v2483
    %2674 = vmatprep.subr.bf16.mxu0 %v2487
    %2675 = vmatpush1.bf16.msra.mxu0 %v2486
    %2676 = vmatprep.subr.bf16.mxu0 %v2490
    %2677 = vmatpush1.bf16.msra.mxu0 %v2489
    %2678 = vmatprep.subr.bf16.mxu0 %v2493
    %2679 = vmatpush1.bf16.msra.mxu0 %v2492
    %2680 = vmatprep.subr.bf16.mxu0 %v2496
    %2681 = vmatpush1.bf16.msra.mxu0 %v2495
    %2682 = vmatprep.subr.bf16.mxu0 %v2499
    %2683 = vmatpush1.bf16.msra.mxu0 %v2498
    %2684 = vmatprep.subr.bf16.mxu0 %v2502
    %2685 = vmatpush1.bf16.msra.mxu0 %v2501
    %2686 = vmatprep.subr.bf16.mxu0 %v2505
    %2687 = vmatpush1.bf16.msra.mxu0 %v2504
    %2688 = vmatprep.subr.bf16.mxu0 %v2508
    %2689 = vmatpush1.bf16.msra.mxu0 %v2507
    %2690 = vmatprep.subr.bf16.mxu0 %v2511
    %2691 = vmatpush1.bf16.msra.mxu0 %v2510
    %2692 = vmatprep.subr.bf16.mxu0 %v2514
    %2693 = vmatpush1.bf16.msra.mxu0 %v2513
    %2694 = vmatprep.subr.bf16.mxu0 %v2517
    %2695 = vmatpush1.bf16.msra.mxu0 %v2516
    %2696 = vmatprep.subr.bf16.mxu0 %v2520
    %2697 = vmatpush1.bf16.msra.mxu0 %v2519
    %2698 = vmatprep.mubr.bf16.mxu0 %v2133
    %2699 = vmatmul.mubr.bf16.gmra.mrb[0].mxu0 %v2132
    %v2700 = vpop.f32.mrb[0].mxu0
    %v2701 = vadd.f32 %v2142, %v2700
    %v2702 = vpop.f32.mrb[0].mxu0
    %v2703 = vadd.f32 %v2146, %v2702
    %v2704 = vpop.f32.mrb[0].mxu0
    %v2705 = vpop.f32.mrb[0].mxu0
    %2706 = vdwg.mxu0
    %2707 = vmatprep.subr.bf16.mxu0 %v2523
    %2708 = vmatpush1.bf16.msra.mxu0 %v2522
    %2709 = vmatprep.subr.bf16.mxu0 %v2526
    %2710 = vmatpush1.bf16.msra.mxu0 %v2525
    %2711 = vmatprep.subr.bf16.mxu0 %v2529
    %2712 = vmatpush1.bf16.msra.mxu0 %v2528
    %2713 = vmatprep.subr.bf16.mxu0 %v2532
    %2714 = vmatpush1.bf16.msra.mxu0 %v2531
    %2715 = vmatprep.subr.bf16.mxu0 %v2535
    %2716 = vmatpush1.bf16.msra.mxu0 %v2534
    %2717 = vmatprep.subr.bf16.mxu0 %v2538
    %2718 = vmatpush1.bf16.msra.mxu0 %v2537
    %2719 = vmatprep.subr.bf16.mxu0 %v2541
    %2720 = vmatpush1.bf16.msra.mxu0 %v2540
    %2721 = vmatprep.subr.bf16.mxu0 %v2544
    %2722 = vmatpush1.bf16.msra.mxu0 %v2543
    %2723 = vmatprep.subr.bf16.mxu0 %v2547
    %2724 = vmatpush1.bf16.msra.mxu0 %v2546
    %2725 = vmatprep.subr.bf16.mxu0 %v2550
    %2726 = vmatpush1.bf16.msra.mxu0 %v2549
    %2727 = vmatprep.subr.bf16.mxu0 %v2553
    %2728 = vmatpush1.bf16.msra.mxu0 %v2552
    %2729 = vmatprep.subr.bf16.mxu0 %v2556
    %2730 = vmatpush1.bf16.msra.mxu0 %v2555
    %2731 = vmatprep.subr.bf16.mxu0 %v2559
    %2732 = vmatpush1.bf16.msra.mxu0 %v2558
    %2733 = vmatprep.subr.bf16.mxu0 %v2562
    %2734 = vmatpush1.bf16.msra.mxu0 %v2561
    %2735 = vmatprep.subr.bf16.mxu0 %v2565
    %2736 = vmatpush1.bf16.msra.mxu0 %v2564
    %2737 = vmatprep.subr.bf16.mxu0 %v2568
    %2738 = vmatpush1.bf16.msra.mxu0 %v2567
    %2739 = vmatprep.mubr.bf16.mxu0 %v2135
    %2740 = vmatmul.mubr.bf16.gmra.mrb[0].mxu0 %v2134
    %v2741 = vpop.f32.mrb[0].mxu0
    %v2742 = vadd.f32 %v2701, %v2741
    %v2743 = vpop.f32.mrb[0].mxu0
    %v2744 = vadd.f32 %v2703, %v2743
    %v2745 = vpop.f32.mrb[0].mxu0
    %v2746 = vpop.f32.mrb[0].mxu0
    %2747 = vdwg.mxu0
    %2748 = vmatprep.subr.bf16.mxu0 0
    %2749 = vmatpush1.bf16.msra.mxu0 %v2476
    %2750 = vmatprep.subr.bf16.mxu0 0
    %2751 = vmatpush1.bf16.msra.mxu0 %v2479
    %2752 = vmatprep.subr.bf16.mxu0 0
    %2753 = vmatpush1.bf16.msra.mxu0 %v2482
    %2754 = vmatprep.subr.bf16.mxu0 0
    %2755 = vmatpush1.bf16.msra.mxu0 %v2485
    %2756 = vmatprep.subr.bf16.mxu0 0
    %2757 = vmatpush1.bf16.msra.mxu0 %v2488
    %2758 = vmatprep.subr.bf16.mxu0 0
    %2759 = vmatpush1.bf16.msra.mxu0 %v2491
    %2760 = vmatprep.subr.bf16.mxu0 0
    %2761 = vmatpush1.bf16.msra.mxu0 %v2494
    %2762 = vmatprep.subr.bf16.mxu0 0
    %2763 = vmatpush1.bf16.msra.mxu0 %v2497
    %2764 = vmatprep.subr.bf16.mxu0 0
    %2765 = vmatpush1.bf16.msra.mxu0 %v2500
    %2766 = vmatprep.subr.bf16.mxu0 0
    %2767 = vmatpush1.bf16.msra.mxu0 %v2503
    %2768 = vmatprep.subr.bf16.mxu0 0
    %2769 = vmatpush1.bf16.msra.mxu0 %v2506
    %2770 = vmatprep.subr.bf16.mxu0 0
    %2771 = vmatpush1.bf16.msra.mxu0 %v2509
    %2772 = vmatprep.subr.bf16.mxu0 0
    %2773 = vmatpush1.bf16.msra.mxu0 %v2512
    %2774 = vmatprep.subr.bf16.mxu0 0
    %2775 = vmatpush1.bf16.msra.mxu0 %v2515
    %2776 = vmatprep.subr.bf16.mxu0 0
    %2777 = vmatpush1.bf16.msra.mxu0 %v2518
    %2778 = vmatprep.subr.bf16.mxu0 0
    %2779 = vmatpush1.bf16.msra.mxu0 %v2521
    %2780 = vmatprep.mubr.bf16.mxu0 %v2133
    %2781 = vmatmul.mubr.bf16.gmra.mrb[0].mxu0 %v2132
    %v2782 = vpop.f32.mrb[0].mxu0
    %v2783 = vadd.f32 %v2150, %v2782
    %v2784 = vpop.f32.mrb[0].mxu0
    %v2785 = vpop.f32.mrb[0].mxu0
    %v2786 = vpop.f32.mrb[0].mxu0
    %2787 = vdwg.mxu0
    %2788 = vmatprep.subr.bf16.mxu0 0
    %2789 = vmatpush1.bf16.msra.mxu0 %v2524
    %2790 = vmatprep.subr.bf16.mxu0 0
    %2791 = vmatpush1.bf16.msra.mxu0 %v2527
    %2792 = vmatprep.subr.bf16.mxu0 0
    %2793 = vmatpush1.bf16.msra.mxu0 %v2530
    %2794 = vmatprep.subr.bf16.mxu0 0
    %2795 = vmatpush1.bf16.msra.mxu0 %v2533
    %2796 = vmatprep.subr.bf16.mxu0 0
    %2797 = vmatpush1.bf16.msra.mxu0 %v2536
    %2798 = vmatprep.subr.bf16.mxu0 0
    %2799 = vmatpush1.bf16.msra.mxu0 %v2539
    %2800 = vmatprep.subr.bf16.mxu0 0
    %2801 = vmatpush1.bf16.msra.mxu0 %v2542
    %2802 = vmatprep.subr.bf16.mxu0 0
    %2803 = vmatpush1.bf16.msra.mxu0 %v2545
    %2804 = vmatprep.subr.bf16.mxu0 0
    %2805 = vmatpush1.bf16.msra.mxu0 %v2548
    %2806 = vmatprep.subr.bf16.mxu0 0
    %2807 = vmatpush1.bf16.msra.mxu0 %v2551
    %2808 = vmatprep.subr.bf16.mxu0 0
    %2809 = vmatpush1.bf16.msra.mxu0 %v2554
    %2810 = vmatprep.subr.bf16.mxu0 0
    %2811 = vmatpush1.bf16.msra.mxu0 %v2557
    %2812 = vmatprep.subr.bf16.mxu0 0
    %2813 = vmatpush1.bf16.msra.mxu0 %v2560
    %2814 = vmatprep.subr.bf16.mxu0 0
    %2815 = vmatpush1.bf16.msra.mxu0 %v2563
    %2816 = vmatprep.subr.bf16.mxu0 0
    %2817 = vmatpush1.bf16.msra.mxu0 %v2566
    %2818 = vmatprep.subr.bf16.mxu0 0
    %2819 = vmatpush1.bf16.msra.mxu0 %v2569
    %2820 = vmatprep.mubr.bf16.mxu0 %v2135
    %2821 = vmatmul.mubr.bf16.gmra.mrb[0].mxu0 %v2134
    %v2822 = vpop.f32.mrb[0].mxu0
    %v2823 = vadd.f32 %v2783, %v2822
    %v2824 = vpop.f32.mrb[0].mxu0
    %v2825 = vpop.f32.mrb[0].mxu0
    %v2826 = vpop.f32.mrb[0].mxu0
    %2827 = vdwg.mxu0
    %s2828 = scalar_lea.vmem [#allocation11], 7
    %v2829 = vld [vmem:[%s2828] ss:$8 sm:$0x7]
    %s2830 = scalar_lea.vmem [#allocation11], 64
    %v2831 = vld [vmem:[%s2830] ss:$8 sm:$0x7]
    %v2832 = vsel %vm944, %v1918, 0.0
    %v2833 = vsel %vm944, %v1920, 0.0
    %v2834 = vadd.f32 %v2832, %v2833
    %v2835 = vsel %vm944, %v1999, 0.0
    %v2836 = vadd.f32 %v2834, %v2835
    %2837 = vadd.xlane.f32.xlu0 %v2836
    %v2838 = vpop.xlane.xlu0 %2837
    %v2839 = vmul.f32 %v2838, 0.0033333334
    %vm2840 = vcmp.lt.s32.totalorder %v956, 300
    %vm2841 = vcmp.lt.s32.totalorder %v957, 300
    %vm2842 = vcmp.lt.s32.totalorder %v958, 300
    %v2843 = vsel %vm2840, 1, 0
    %v2844 = vsel %vm2841, 1, 0
    %v2845 = vsel %vm2842, 1, 0
    %v2846 = vcvt.s32.f32 %v2843
    %v2847 = vcvt.s32.f32 %v2844
    %v2848 = vcvt.s32.f32 %v2845
    %v2849 = vsub.f32 %v1918, %v2839
    %v2850 = vsub.f32 %v1920, %v2839
    %v2851 = vsub.f32 %v1999, %v2839
    %v2852 = vmul.f32 %v2849, %v2846
    %v2853 = vmul.f32 %v2850, %v2847
    %v2854 = vmul.f32 %v2851, %v2848
    %v2855 = vmul.f32 %v2852, %v2852
    %v2856 = vmul.f32 %v2853, %v2853
    %v2857 = vmul.f32 %v2854, %v2854
    %v2858 = vsel %vm944, %v2855, 0.0
    %v2859 = vsel %vm944, %v2856, 0.0
    %v2860 = vadd.f32 %v2858, %v2859
    %v2861 = vsel %vm944, %v2857, 0.0
    %v2862 = vadd.f32 %v2860, %v2861
    %2863 = vadd.xlane.f32.xlu0 %v2862
    %v2864 = vpop.xlane.xlu0 %2863
    %v2865 = vmul.f32 %v2864, 0.0033444816
    %v2866 = vrsqrt.pop %v2865
    %v2867 = vmul.f32 %v2865, %v2866
    %vm2868 = vcmp.eq.f32.partialorder %v2865, inf
    %v2869 = vsel %vm2868, %v2865, %v2867
    %vm2870 = vcmp.eq.f32.partialorder %v2865, 0.0
    %v2871 = vand.u32 %v2865, 2147483648
    %v2872 = vsel %vm2870, %v2871, %v2869
    %v2873 = vadd.f32 %v2872, 1e-06
    %v2874 = vrcp.pop %v2873
    %v2875 = vmul.f32 %v2852, %v2874
    %v2876 = vmul.f32 %v2853, %v2874
    %v2877 = vmul.f32 %v2854, %v2874
    %v2879 = vlaneseq
    %v2880 = vshrl.u32 %v2879, 7
    %v2881 = vsub.s32 0, %v2880
    %v2882 = vrot.slane %v2829, %v2881
    %v2883 = vlaneseq
    %v2884 = vshrl.u32 %v2883, 7
    %v2885 = vsub.s32 1, %v2884
    %v2886 = vrot.slane %v2829, %v2885
    %v2887 = vlaneseq
    %v2888 = vshrl.u32 %v2887, 7
    %v2889 = vsub.s32 2, %v2888
    %v2890 = vrot.slane %v2829, %v2889
    %v2894 = vmul.f32 %v2882, %v2875
    %v2895 = vmul.f32 %v2886, %v2876
    %v2896 = vmul.f32 %v2890, %v2877
    %v2898 = vlaneseq
    %v2899 = vshrl.u32 %v2898, 7
    %v2900 = vsub.s32 0, %v2899
    %v2901 = vrot.slane %v2831, %v2900
    %v2902 = vlaneseq
    %v2903 = vshrl.u32 %v2902, 7
    %v2904 = vsub.s32 1, %v2903
    %v2905 = vrot.slane %v2831, %v2904
    %v2906 = vlaneseq
    %v2907 = vshrl.u32 %v2906, 7
    %v2908 = vsub.s32 2, %v2907
    %v2909 = vrot.slane %v2831, %v2908
    %v2913 = vadd.f32 %v2894, %v2901
    %v2914 = vadd.f32 %v2895, %v2905
    %v2915 = vadd.f32 %v2896, %v2909
    %s2916 = scalar_lea.vmem [#allocation11], 31
    %v2917 = vld [vmem:[%s2916] ss:$8 sm:$0x7]
    %s2918 = scalar_lea.vmem [#allocation11], 88
    %v2919 = vld [vmem:[%s2918] ss:$8 sm:$0x7]
    %v2920 = vsel %vm944, %v2742, 0.0
    %v2921 = vsel %vm944, %v2744, 0.0
    %v2922 = vadd.f32 %v2920, %v2921
    %v2923 = vsel %vm944, %v2823, 0.0
    %v2924 = vadd.f32 %v2922, %v2923
    %2925 = vadd.xlane.f32.xlu0 %v2924
    %v2926 = vpop.xlane.xlu0 %2925
    %v2927 = vmul.f32 %v2926, 0.0033333334
    %v2928 = vsub.f32 %v2742, %v2927
    %v2929 = vsub.f32 %v2744, %v2927
    %v2930 = vsub.f32 %v2823, %v2927
    %v2931 = vmul.f32 %v2928, %v2846
    %v2932 = vmul.f32 %v2929, %v2847
    %v2933 = vmul.f32 %v2930, %v2848
    %v2934 = vmul.f32 %v2931, %v2931
    %v2935 = vmul.f32 %v2932, %v2932
    %v2936 = vmul.f32 %v2933, %v2933
    %v2937 = vsel %vm944, %v2934, 0.0
    %v2938 = vsel %vm944, %v2935, 0.0
    %v2939 = vadd.f32 %v2937, %v2938
    %v2940 = vsel %vm944, %v2936, 0.0
    %v2941 = vadd.f32 %v2939, %v2940
    %2942 = vadd.xlane.f32.xlu0 %v2941
    %v2943 = vpop.xlane.xlu0 %2942
    %v2944 = vmul.f32 %v2943, 0.0033444816
    %v2945 = vrsqrt.pop %v2944
    %v2946 = vmul.f32 %v2944, %v2945
    %vm2947 = vcmp.eq.f32.partialorder %v2944, inf
    %v2948 = vsel %vm2947, %v2944, %v2946
    %vm2949 = vcmp.eq.f32.partialorder %v2944, 0.0
    %v2950 = vand.u32 %v2944, 2147483648
    %v2951 = vsel %vm2949, %v2950, %v2948
    %v2952 = vadd.f32 %v2951, 1e-06
    %v2953 = vrcp.pop %v2952
    %v2954 = vmul.f32 %v2931, %v2953
    %v2955 = vmul.f32 %v2932, %v2953
    %v2956 = vmul.f32 %v2933, %v2953
    %v2958 = vlaneseq
    %v2959 = vshrl.u32 %v2958, 7
    %v2960 = vsub.s32 0, %v2959
    %v2961 = vrot.slane %v2917, %v2960
    %v2962 = vlaneseq
    %v2963 = vshrl.u32 %v2962, 7
    %v2964 = vsub.s32 1, %v2963
    %v2965 = vrot.slane %v2917, %v2964
    %v2966 = vlaneseq
    %v2967 = vshrl.u32 %v2966, 7
    %v2968 = vsub.s32 2, %v2967
    %v2969 = vrot.slane %v2917, %v2968
    %v2973 = vmul.f32 %v2961, %v2954
    %v2974 = vmul.f32 %v2965, %v2955
    %v2975 = vmul.f32 %v2969, %v2956
    %v2977 = vlaneseq
    %v2978 = vshrl.u32 %v2977, 7
    %v2979 = vsub.s32 0, %v2978
    %v2980 = vrot.slane %v2919, %v2979
    %v2981 = vlaneseq
    %v2982 = vshrl.u32 %v2981, 7
    %v2983 = vsub.s32 1, %v2982
    %v2984 = vrot.slane %v2919, %v2983
    %v2985 = vlaneseq
    %v2986 = vshrl.u32 %v2985, 7
    %v2987 = vsub.s32 2, %v2986
    %v2988 = vrot.slane %v2919, %v2987
    %v2992 = vadd.f32 %v2973, %v2980
    %v2993 = vadd.f32 %v2974, %v2984
    %v2994 = vadd.f32 %v2975, %v2988
    %vm2995 = vcmp.ge.f32.partialorder %v2913, 0.0
    %vm2996 = vcmp.ge.f32.partialorder %v2914, 0.0
    %vm2997 = vcmp.ge.f32.partialorder %v2915, 0.0
    %v2998 = vmul.f32 %v2913, 0.01
    %v2999 = vmul.f32 %v2914, 0.01
    %v3000 = vmul.f32 %v2915, 0.01
    %v3001 = vsel %vm2995, %v2913, %v2998
    %v3002 = vsel %vm2996, %v2914, %v2999
    %v3003 = vsel %vm2997, %v2915, %v3000
    %vm3004 = vcmp.ge.f32.partialorder %v2992, 0.0
    %vm3005 = vcmp.ge.f32.partialorder %v2993, 0.0
    %vm3006 = vcmp.ge.f32.partialorder %v2994, 0.0
    %v3007 = vmul.f32 %v2992, 0.01
    %v3008 = vmul.f32 %v2993, 0.01
    %v3009 = vmul.f32 %v2994, 0.01
    %v3010 = vsel %vm3004, %v2992, %v3007
    %v3011 = vsel %vm3005, %v2993, %v3008
    %v3012 = vsel %vm3006, %v2994, %v3009
    %v3013 = vld [vmem:[#allocation10] sm:$0xf]
    %v3014 = vld [vmem:[#allocation10 + $0x4] sm:$0xf]
    %v3015 = vld [vmem:[#allocation10 + $0x8] sm:$0xf]
    %v3016 = vld [vmem:[#allocation10 + $0xc] sm:$0xf]
    %v3017 = vld [vmem:[#allocation10 + $0x10] sm:$0xf]
    %v3018 = vld [vmem:[#allocation10 + $0x14] sm:$0xf]
    %v3019 = vld [vmem:[#allocation10 + $0x18] sm:$0xf]
    %v3020 = vld [vmem:[#allocation10 + $0x1c] sm:$0xf]
    %v3021 = vld [vmem:[#allocation10 + $0x20] sm:$0xf]
    %v3022 = vld [vmem:[#allocation10 + $0x24] sm:$0xf]
    %v3023 = vld [vmem:[#allocation10 + $0x28] sm:$0xf]
    %v3024 = vld [vmem:[#allocation10 + $0x2c] sm:$0xf]
    %v3025 = vld [vmem:[#allocation10 + $0x30] sm:$0xf]
    %v3026 = vld [vmem:[#allocation10 + $0x34] sm:$0xf]
    %v3027 = vld [vmem:[#allocation10 + $0x38] sm:$0xf]
    %v3028 = vld [vmem:[#allocation10 + $0x3c] sm:$0xf]
    %v3029 = vld [vmem:[#allocation10 + $0x40] sm:$0xf]
    %v3030 = vld [vmem:[#allocation10 + $0x44] sm:$0xf]
    %v3031 = vld [vmem:[#allocation10 + $0x48] sm:$0xf]
    %v3032 = vld [vmem:[#allocation10 + $0x4c] sm:$0xf]
    %v3033 = vld [vmem:[#allocation10 + $0x50] sm:$0xf]
    %v3034 = vld [vmem:[#allocation10 + $0x54] sm:$0xf]
    %v3035 = vld [vmem:[#allocation10 + $0x58] sm:$0xf]
    %v3036 = vld [vmem:[#allocation10 + $0x5c] sm:$0xf]
    %v3037 = vld [vmem:[#allocation10 + $0x60] sm:$0xf]
    %v3038 = vld [vmem:[#allocation10 + $0x64] sm:$0xf]
    %v3039 = vld [vmem:[#allocation10 + $0x68] sm:$0xf]
    %v3040 = vld [vmem:[#allocation10 + $0x6c] sm:$0xf]
    %v3041 = vld [vmem:[#allocation10 + $0x70] sm:$0xf]
    %v3042 = vld [vmem:[#allocation10 + $0x74] sm:$0xf]
    %v3043 = vld [vmem:[#allocation10 + $0x78] sm:$0xf]
    %v3044 = vld [vmem:[#allocation10 + $0x7c] sm:$0xf]
    %v3045 = vld [vmem:[#allocation10 + $0x80] sm:$0xf]
    %v3046 = vld [vmem:[#allocation10 + $0x84] sm:$0xf]
    %v3047 = vld [vmem:[#allocation10 + $0x88] sm:$0xf]
    %v3048 = vld [vmem:[#allocation10 + $0x8c] sm:$0xf]
    %v3049 = vld [vmem:[#allocation10 + $0x90] sm:$0xf]
    %v3050 = vld [vmem:[#allocation10 + $0x94] sm:$0xf]
    %v3051 = vld [vmem:[#allocation10 + $0x98] sm:$0xf]
    %v3052 = vld [vmem:[#allocation10 + $0x9c] sm:$0xf]
    %v3053 = vld [vmem:[#allocation10 + $0xa0] sm:$0xf]
    %v3054 = vld [vmem:[#allocation10 + $0xa4] sm:$0xf]
    %v3055 = vld [vmem:[#allocation10 + $0xa8] sm:$0xf]
    %v3056 = vld [vmem:[#allocation10 + $0xac] sm:$0xf]
    %v3057 = vld [vmem:[#allocation10 + $0xb0] sm:$0xf]
    %v3058 = vld [vmem:[#allocation10 + $0xb4] sm:$0xf]
    %v3059 = vld [vmem:[#allocation10 + $0xb8] sm:$0xf]
    %v3060 = vld [vmem:[#allocation10 + $0xbc] sm:$0xf]
    %v3061 = vpack.c.bf16 %v3001, %v3001
    %v3062 = vpack.c.bf16 %v3002, %v3002
    %v3063 = vpack.c.bf16 %v3003, %v3003
    %v3064 = vld [vmem:[#allocation10 + $0xc0] sm:$0xf]
    %v3065 = vld [vmem:[#allocation10 + $0xc4] sm:$0xf]
    %v3066 = vld [vmem:[#allocation10 + $0xc8] sm:$0xf]
    %v3067 = vld [vmem:[#allocation10 + $0xcc] sm:$0xf]
    %v3068 = vld [vmem:[#allocation10 + $0xd0] sm:$0xf]
    %v3069 = vld [vmem:[#allocation10 + $0xd4] sm:$0xf]
    %v3070 = vld [vmem:[#allocation10 + $0xd8] sm:$0xf]
    %v3071 = vld [vmem:[#allocation10 + $0xdc] sm:$0xf]
    %v3072 = vld [vmem:[#allocation10 + $0xe0] sm:$0xf]
    %v3073 = vld [vmem:[#allocation10 + $0xe4] sm:$0xf]
    %v3074 = vld [vmem:[#allocation10 + $0xe8] sm:$0xf]
    %v3075 = vld [vmem:[#allocation10 + $0xec] sm:$0xf]
    %v3076 = vld [vmem:[#allocation10 + $0xf0] sm:$0xf]
    %v3077 = vld [vmem:[#allocation10 + $0xf4] sm:$0xf]
    %v3078 = vld [vmem:[#allocation10 + $0xf8] sm:$0xf]
    %v3079 = vld [vmem:[#allocation10 + $0xfc] sm:$0xf]
    %v3080 = vld [vmem:[#allocation10 + $0x100] sm:$0xf]
    %v3081 = vld [vmem:[#allocation10 + $0x104] sm:$0xf]
    %v3082 = vld [vmem:[#allocation10 + $0x108] sm:$0xf]
    %v3083 = vld [vmem:[#allocation10 + $0x10c] sm:$0xf]
    %v3084 = vld [vmem:[#allocation10 + $0x110] sm:$0xf]
    %v3085 = vld [vmem:[#allocation10 + $0x114] sm:$0xf]
    %v3086 = vld [vmem:[#allocation10 + $0x118] sm:$0xf]
    %v3087 = vld [vmem:[#allocation10 + $0x11c] sm:$0xf]
    %v3088 = vld [vmem:[#allocation10 + $0x120] sm:$0xf]
    %v3089 = vld [vmem:[#allocation10 + $0x124] sm:$0xf]
    %v3090 = vld [vmem:[#allocation10 + $0x128] sm:$0xf]
    %v3091 = vld [vmem:[#allocation10 + $0x12c] sm:$0xf]
    %v3092 = vld [vmem:[#allocation10 + $0x130] sm:$0xf]
    %v3093 = vld [vmem:[#allocation10 + $0x134] sm:$0xf]
    %v3094 = vld [vmem:[#allocation10 + $0x138] sm:$0xf]
    %v3095 = vld [vmem:[#allocation10 + $0x13c] sm:$0xf]
    %v3096 = vld [vmem:[#allocation10 + $0x140] sm:$0xf]
    %v3097 = vld [vmem:[#allocation10 + $0x144] sm:$0xf]
    %v3098 = vld [vmem:[#allocation10 + $0x148] sm:$0xf]
    %v3099 = vld [vmem:[#allocation10 + $0x14c] sm:$0xf]
    %v3100 = vld [vmem:[#allocation10 + $0x150] sm:$0xf]
    %v3101 = vld [vmem:[#allocation10 + $0x154] sm:$0xf]
    %v3102 = vld [vmem:[#allocation10 + $0x158] sm:$0xf]
    %v3103 = vld [vmem:[#allocation10 + $0x15c] sm:$0xf]
    %v3104 = vld [vmem:[#allocation10 + $0x160] sm:$0xf]
    %v3105 = vld [vmem:[#allocation10 + $0x164] sm:$0xf]
    %v3106 = vld [vmem:[#allocation10 + $0x168] sm:$0xf]
    %v3107 = vld [vmem:[#allocation10 + $0x16c] sm:$0xf]
    %v3108 = vld [vmem:[#allocation10 + $0x170] sm:$0xf]
    %v3109 = vld [vmem:[#allocation10 + $0x174] sm:$0xf]
    %v3110 = vld [vmem:[#allocation10 + $0x178] sm:$0xf]
    %v3111 = vld [vmem:[#allocation10 + $0x17c] sm:$0xf]
    %v3112 = vpack.c.bf16 %v3010, %v3010
    %v3113 = vpack.c.bf16 %v3011, %v3011
    %v3114 = vpack.c.bf16 %v3012, %v3012
    %v3163 = vunpack.c.l.b16 %v3064
    %v3164 = vunpack.c.l.b16 %v3065
    %v3165 = vunpack.c.l.b16 %v3066
    %v3166 = vunpack.c.l.b16 %v3067
    %v3167 = vunpack.c.l.b16 %v3068
    %v3168 = vunpack.c.l.b16 %v3069
    %v3169 = vunpack.c.l.b16 %v3070
    %v3170 = vunpack.c.l.b16 %v3071
    %v3171 = vunpack.c.l.b16 %v3072
    %v3172 = vunpack.c.l.b16 %v3073
    %v3173 = vunpack.c.l.b16 %v3074
    %v3174 = vunpack.c.l.b16 %v3075
    %v3175 = vunpack.c.l.b16 %v3076
    %v3176 = vunpack.c.l.b16 %v3077
    %v3177 = vunpack.c.l.b16 %v3078
    %v3178 = vunpack.c.l.b16 %v3079
    %v3179 = vunpack.c.l.b16 %v3080
    %v3180 = vunpack.c.l.b16 %v3081
    %v3181 = vunpack.c.l.b16 %v3082
    %v3182 = vunpack.c.l.b16 %v3083
    %v3183 = vunpack.c.l.b16 %v3084
    %v3184 = vunpack.c.l.b16 %v3085
    %v3185 = vunpack.c.l.b16 %v3086
    %v3186 = vunpack.c.l.b16 %v3087
    %v3187 = vunpack.c.l.b16 %v3088
    %v3188 = vunpack.c.l.b16 %v3089
    %v3189 = vunpack.c.l.b16 %v3090
    %v3190 = vunpack.c.l.b16 %v3091
    %v3191 = vunpack.c.l.b16 %v3092
    %v3192 = vunpack.c.l.b16 %v3093
    %v3193 = vunpack.c.l.b16 %v3094
    %v3194 = vunpack.c.l.b16 %v3095
    %v3195 = vunpack.c.l.b16 %v3096
    %v3196 = vunpack.c.l.b16 %v3097
    %v3197 = vunpack.c.l.b16 %v3098
    %v3198 = vunpack.c.l.b16 %v3099
    %v3199 = vunpack.c.l.b16 %v3100
    %v3200 = vunpack.c.l.b16 %v3101
    %v3201 = vunpack.c.l.b16 %v3102
    %v3202 = vunpack.c.l.b16 %v3103
    %v3203 = vunpack.c.l.b16 %v3104
    %v3204 = vunpack.c.l.b16 %v3105
    %v3205 = vunpack.c.l.b16 %v3106
    %v3206 = vunpack.c.l.b16 %v3107
    %v3207 = vunpack.c.l.b16 %v3108
    %v3208 = vunpack.c.l.b16 %v3109
    %v3209 = vunpack.c.l.b16 %v3110
    %v3210 = vunpack.c.l.b16 %v3111
    %v3211 = vpack.c.b16 %v3164, %v3163
    %v3212 = vpack.c.b16 %v3166, %v3165
    %v3213 = vpack.c.b16 %v3168, %v3167
    %v3214 = vpack.c.b16 %v3170, %v3169
    %v3215 = vpack.c.b16 %v3172, %v3171
    %v3216 = vpack.c.b16 %v3174, %v3173
    %v3217 = vpack.c.b16 %v3176, %v3175
    %v3218 = vpack.c.b16 %v3178, %v3177
    %v3219 = vpack.c.b16 %v3180, %v3179
    %v3220 = vpack.c.b16 %v3182, %v3181
    %v3221 = vpack.c.b16 %v3184, %v3183
    %v3222 = vpack.c.b16 %v3186, %v3185
    %v3223 = vpack.c.b16 %v3188, %v3187
    %v3224 = vpack.c.b16 %v3190, %v3189
    %v3225 = vpack.c.b16 %v3192, %v3191
    %v3226 = vpack.c.b16 %v3194, %v3193
    %v3227 = vpack.c.b16 %v3196, %v3195
    %v3228 = vpack.c.b16 %v3198, %v3197
    %v3229 = vpack.c.b16 %v3200, %v3199
    %v3230 = vpack.c.b16 %v3202, %v3201
    %v3231 = vpack.c.b16 %v3204, %v3203
    %v3232 = vpack.c.b16 %v3206, %v3205
    %v3233 = vpack.c.b16 %v3208, %v3207
    %v3234 = vpack.c.b16 %v3210, %v3209
    %3259 = vmatprep.subr.bf16.mxu0 0
    %3260 = vmatpush1.bf16.msra.mxu0 %v3211
    %3261 = vmatprep.subr.bf16.mxu0 0
    %3262 = vmatpush1.bf16.msra.mxu0 %v3212
    %3263 = vmatprep.subr.bf16.mxu0 0
    %3264 = vmatpush1.bf16.msra.mxu0 %v3213
    %3265 = vmatprep.subr.bf16.mxu0 0
    %3266 = vmatpush1.bf16.msra.mxu0 %v3214
    %3267 = vmatprep.subr.bf16.mxu0 0
    %3268 = vmatpush1.bf16.msra.mxu0 %v3215
    %3269 = vmatprep.subr.bf16.mxu0 0
    %3270 = vmatpush1.bf16.msra.mxu0 %v3216
    %3271 = vmatprep.subr.bf16.mxu0 0
    %3272 = vmatpush1.bf16.msra.mxu0 %v3217
    %3273 = vmatprep.subr.bf16.mxu0 0
    %3274 = vmatpush1.bf16.msra.mxu0 %v3218
    %3275 = vmatprep.subr.bf16.mxu0 0
    %3276 = vmatpush1.bf16.msra.mxu0 %v3219
    %3277 = vmatprep.subr.bf16.mxu0 0
    %3278 = vmatpush1.bf16.msra.mxu0 %v3220
    %3279 = vmatprep.subr.bf16.mxu0 0
    %3280 = vmatpush1.bf16.msra.mxu0 %v3221
    %3281 = vmatprep.subr.bf16.mxu0 0
    %3282 = vmatpush1.bf16.msra.mxu0 %v3222
    %3283 = vmatprep.subr.bf16.mxu0 0
    %3284 = vmatpush1.bf16.msra.mxu0 %v3223
    %3285 = vmatprep.subr.bf16.mxu0 0
    %3286 = vmatpush1.bf16.msra.mxu0 %v3224
    %3287 = vmatprep.subr.bf16.mxu0 0
    %3288 = vmatpush1.bf16.msra.mxu0 %v3225
    %3289 = vmatprep.subr.bf16.mxu0 0
    %3290 = vmatpush1.bf16.msra.mxu0 %v3226
    %3291 = vmatprep.mubr.bf16.mxu0 %v3113
    %3292 = vmatmul.mubr.bf16.gmra.mrb[0].mxu0 %v3112
    %v3293 = vpop.f32.mrb[0].mxu0
    %v3294 = vadd.f32 0.0, %v3293
    %v3295 = vpop.f32.mrb[0].mxu0
    %v3296 = vpop.f32.mrb[0].mxu0
    %v3297 = vpop.f32.mrb[0].mxu0
    %3298 = vdwg.mxu0
    %3299 = vmatprep.subr.bf16.mxu0 0
    %3300 = vmatpush1.bf16.msra.mxu0 %v3227
    %3301 = vmatprep.subr.bf16.mxu0 0
    %3302 = vmatpush1.bf16.msra.mxu0 %v3228
    %3303 = vmatprep.subr.bf16.mxu0 0
    %3304 = vmatpush1.bf16.msra.mxu0 %v3229
    %3305 = vmatprep.subr.bf16.mxu0 0
    %3306 = vmatpush1.bf16.msra.mxu0 %v3230
    %3307 = vmatprep.subr.bf16.mxu0 0
    %3308 = vmatpush1.bf16.msra.mxu0 %v3231
    %3309 = vmatprep.subr.bf16.mxu0 0
    %3310 = vmatpush1.bf16.msra.mxu0 %v3232
    %3311 = vmatprep.subr.bf16.mxu0 0
    %3312 = vmatpush1.bf16.msra.mxu0 %v3233
    %3313 = vmatprep.subr.bf16.mxu0 0
    %3314 = vmatpush1.bf16.msra.mxu0 %v3234
    %3315 = vmatprep.subr.bf16.mxu0 0
    %3316 = vmatpush1.bf16.msra.mxu0 0
    %3317 = vmatprep.subr.bf16.mxu0 0
    %3318 = vmatpush1.bf16.msra.mxu0 0
    %3319 = vmatprep.subr.bf16.mxu0 0
    %3320 = vmatpush1.bf16.msra.mxu0 0
    %3321 = vmatprep.subr.bf16.mxu0 0
    %3322 = vmatpush1.bf16.msra.mxu0 0
    %3323 = vmatprep.subr.bf16.mxu0 0
    %3324 = vmatpush1.bf16.msra.mxu0 0
    %3325 = vmatprep.subr.bf16.mxu0 0
    %3326 = vmatpush1.bf16.msra.mxu0 0
    %3327 = vmatprep.subr.bf16.mxu0 0
    %3328 = vmatpush1.bf16.msra.mxu0 0
    %3329 = vmatprep.subr.bf16.mxu0 0
    %3330 = vmatpush1.bf16.msra.mxu0 0
    %3331 = vmatprep.mubr.bf16.mxu0 0
    %3332 = vmatmul.mubr.bf16.gmra.mrb[0].mxu0 %v3114
    %v3333 = vpop.f32.mrb[0].mxu0
    %v3334 = vadd.f32 %v3294, %v3333
    %v3335 = vpop.f32.mrb[0].mxu0
    %v3336 = vpop.f32.mrb[0].mxu0
    %v3337 = vpop.f32.mrb[0].mxu0
    %3338 = vdwg.mxu0
    %v3387 = vunpack.c.l.b16 %v3013
    %v3388 = vunpack.c.l.b16 %v3014
    %v3389 = vunpack.c.l.b16 %v3015
    %v3390 = vunpack.c.l.b16 %v3016
    %v3391 = vunpack.c.l.b16 %v3017
    %v3392 = vunpack.c.l.b16 %v3018
    %v3393 = vunpack.c.l.b16 %v3019
    %v3394 = vunpack.c.l.b16 %v3020
    %v3395 = vunpack.c.l.b16 %v3021
    %v3396 = vunpack.c.l.b16 %v3022
    %v3397 = vunpack.c.l.b16 %v3023
    %v3398 = vunpack.c.l.b16 %v3024
    %v3399 = vunpack.c.l.b16 %v3025
    %v3400 = vunpack.c.l.b16 %v3026
    %v3401 = vunpack.c.l.b16 %v3027
    %v3402 = vunpack.c.l.b16 %v3028
    %v3403 = vunpack.c.l.b16 %v3029
    %v3404 = vunpack.c.l.b16 %v3030
    %v3405 = vunpack.c.l.b16 %v3031
    %v3406 = vunpack.c.l.b16 %v3032
    %v3407 = vunpack.c.l.b16 %v3033
    %v3408 = vunpack.c.l.b16 %v3034
    %v3409 = vunpack.c.l.b16 %v3035
    %v3410 = vunpack.c.l.b16 %v3036
    %v3411 = vunpack.c.l.b16 %v3037
    %v3412 = vunpack.c.l.b16 %v3038
    %v3413 = vunpack.c.l.b16 %v3039
    %v3414 = vunpack.c.l.b16 %v3040
    %v3415 = vunpack.c.l.b16 %v3041
    %v3416 = vunpack.c.l.b16 %v3042
    %v3417 = vunpack.c.l.b16 %v3043
    %v3418 = vunpack.c.l.b16 %v3044
    %v3419 = vunpack.c.l.b16 %v3045
    %v3420 = vunpack.c.l.b16 %v3046
    %v3421 = vunpack.c.l.b16 %v3047
    %v3422 = vunpack.c.l.b16 %v3048
    %v3423 = vunpack.c.l.b16 %v3049
    %v3424 = vunpack.c.l.b16 %v3050
    %v3425 = vunpack.c.l.b16 %v3051
    %v3426 = vunpack.c.l.b16 %v3052
    %v3427 = vunpack.c.l.b16 %v3053
    %v3428 = vunpack.c.l.b16 %v3054
    %v3429 = vunpack.c.l.b16 %v3055
    %v3430 = vunpack.c.l.b16 %v3056
    %v3431 = vunpack.c.l.b16 %v3057
    %v3432 = vunpack.c.l.b16 %v3058
    %v3433 = vunpack.c.l.b16 %v3059
    %v3434 = vunpack.c.l.b16 %v3060
    %v3435 = vpack.c.b16 %v3388, %v3387
    %v3436 = vpack.c.b16 %v3390, %v3389
    %v3437 = vpack.c.b16 %v3392, %v3391
    %v3438 = vpack.c.b16 %v3394, %v3393
    %v3439 = vpack.c.b16 %v3396, %v3395
    %v3440 = vpack.c.b16 %v3398, %v3397
    %v3441 = vpack.c.b16 %v3400, %v3399
    %v3442 = vpack.c.b16 %v3402, %v3401
    %v3443 = vpack.c.b16 %v3404, %v3403
    %v3444 = vpack.c.b16 %v3406, %v3405
    %v3445 = vpack.c.b16 %v3408, %v3407
    %v3446 = vpack.c.b16 %v3410, %v3409
    %v3447 = vpack.c.b16 %v3412, %v3411
    %v3448 = vpack.c.b16 %v3414, %v3413
    %v3449 = vpack.c.b16 %v3416, %v3415
    %v3450 = vpack.c.b16 %v3418, %v3417
    %v3451 = vpack.c.b16 %v3420, %v3419
    %v3452 = vpack.c.b16 %v3422, %v3421
    %v3453 = vpack.c.b16 %v3424, %v3423
    %v3454 = vpack.c.b16 %v3426, %v3425
    %v3455 = vpack.c.b16 %v3428, %v3427
    %v3456 = vpack.c.b16 %v3430, %v3429
    %v3457 = vpack.c.b16 %v3432, %v3431
    %v3458 = vpack.c.b16 %v3434, %v3433
    %3483 = vmatprep.subr.bf16.mxu0 0
    %3484 = vmatpush1.bf16.msra.mxu0 %v3435
    %3485 = vmatprep.subr.bf16.mxu0 0
    %3486 = vmatpush1.bf16.msra.mxu0 %v3436
    %3487 = vmatprep.subr.bf16.mxu0 0
    %3488 = vmatpush1.bf16.msra.mxu0 %v3437
    %3489 = vmatprep.subr.bf16.mxu0 0
    %3490 = vmatpush1.bf16.msra.mxu0 %v3438
    %3491 = vmatprep.subr.bf16.mxu0 0
    %3492 = vmatpush1.bf16.msra.mxu0 %v3439
    %3493 = vmatprep.subr.bf16.mxu0 0
    %3494 = vmatpush1.bf16.msra.mxu0 %v3440
    %3495 = vmatprep.subr.bf16.mxu0 0
    %3496 = vmatpush1.bf16.msra.mxu0 %v3441
    %3497 = vmatprep.subr.bf16.mxu0 0
    %3498 = vmatpush1.bf16.msra.mxu0 %v3442
    %3499 = vmatprep.subr.bf16.mxu0 0
    %3500 = vmatpush1.bf16.msra.mxu0 %v3443
    %3501 = vmatprep.subr.bf16.mxu0 0
    %3502 = vmatpush1.bf16.msra.mxu0 %v3444
    %3503 = vmatprep.subr.bf16.mxu0 0
    %3504 = vmatpush1.bf16.msra.mxu0 %v3445
    %3505 = vmatprep.subr.bf16.mxu0 0
    %3506 = vmatpush1.bf16.msra.mxu0 %v3446
    %3507 = vmatprep.subr.bf16.mxu0 0
    %3508 = vmatpush1.bf16.msra.mxu0 %v3447
    %3509 = vmatprep.subr.bf16.mxu0 0
    %3510 = vmatpush1.bf16.msra.mxu0 %v3448
    %3511 = vmatprep.subr.bf16.mxu0 0
    %3512 = vmatpush1.bf16.msra.mxu0 %v3449
    %3513 = vmatprep.subr.bf16.mxu0 0
    %3514 = vmatpush1.bf16.msra.mxu0 %v3450
    %3515 = vmatprep.mubr.bf16.mxu0 %v3062
    %3516 = vmatmul.mubr.bf16.gmra.mrb[0].mxu0 %v3061
    %v3517 = vpop.f32.mrb[0].mxu0
    %v3518 = vadd.f32 %v3334, %v3517
    %v3519 = vpop.f32.mrb[0].mxu0
    %v3520 = vpop.f32.mrb[0].mxu0
    %v3521 = vpop.f32.mrb[0].mxu0
    %3522 = vdwg.mxu0
    %3523 = vmatprep.subr.bf16.mxu0 0
    %3524 = vmatpush1.bf16.msra.mxu0 %v3451
    %3525 = vmatprep.subr.bf16.mxu0 0
    %3526 = vmatpush1.bf16.msra.mxu0 %v3452
    %3527 = vmatprep.subr.bf16.mxu0 0
    %3528 = vmatpush1.bf16.msra.mxu0 %v3453
    %3529 = vmatprep.subr.bf16.mxu0 0
    %3530 = vmatpush1.bf16.msra.mxu0 %v3454
    %3531 = vmatprep.subr.bf16.mxu0 0
    %3532 = vmatpush1.bf16.msra.mxu0 %v3455
    %3533 = vmatprep.subr.bf16.mxu0 0
    %3534 = vmatpush1.bf16.msra.mxu0 %v3456
    %3535 = vmatprep.subr.bf16.mxu0 0
    %3536 = vmatpush1.bf16.msra.mxu0 %v3457
    %3537 = vmatprep.subr.bf16.mxu0 0
    %3538 = vmatpush1.bf16.msra.mxu0 %v3458
    %3539 = vmatprep.subr.bf16.mxu0 0
    %3540 = vmatpush1.bf16.msra.mxu0 0
    %3541 = vmatprep.subr.bf16.mxu0 0
    %3542 = vmatpush1.bf16.msra.mxu0 0
    %3543 = vmatprep.subr.bf16.mxu0 0
    %3544 = vmatpush1.bf16.msra.mxu0 0
    %3545 = vmatprep.subr.bf16.mxu0 0
    %3546 = vmatpush1.bf16.msra.mxu0 0
    %3547 = vmatprep.subr.bf16.mxu0 0
    %3548 = vmatpush1.bf16.msra.mxu0 0
    %3549 = vmatprep.subr.bf16.mxu0 0
    %3550 = vmatpush1.bf16.msra.mxu0 0
    %3551 = vmatprep.subr.bf16.mxu0 0
    %3552 = vmatpush1.bf16.msra.mxu0 0
    %3553 = vmatprep.subr.bf16.mxu0 0
    %3554 = vmatpush1.bf16.msra.mxu0 0
    %3555 = vmatprep.mubr.bf16.mxu0 0
    %3556 = vmatmul.mubr.bf16.gmra.mrb[0].mxu0 %v3063
    %v3557 = vpop.f32.mrb[0].mxu0
    %v3558 = vadd.f32 %v3518, %v3557
    %v3559 = vpop.f32.mrb[0].mxu0
    %v3560 = vpop.f32.mrb[0].mxu0
    %v3561 = vpop.f32.mrb[0].mxu0
    %3562 = vdwg.mxu0
    %v3563 = vld [vmem:[#allocation11 + $0x41] ss:$0 sm:$0xff]
    %v3564 = vadd.f32 %v3558, %v3563
    %3565 = vst [vmem:[#allocation13] sm:$0x3] %v3564
    // Predicated region
    $region54: #{tpu_custom_call.1} parent=1 // pred_check
      _
    $region55: #{tpu_custom_call.1} parent=1 // pred_check_branch
      %3567 = sbr.rel (0) target = $region57
    $region56: #{tpu_custom_call.1} parent=1 // pred_region
      %s3569 = ssub.s32 32, 32
      %3570 = vsyncadd [#allocation4], %s3569
      %s3572 = sshll.u32 [#allocation13], 4
      %s3573 = int_to_ptr.vmem [resolvable:$true] %s3572
      %3575 = dma.vmem_to_hbm [thread:$0]  %s3573, 32, %s7, [#allocation4]
    $region57: #{tpu_custom_call.1} parent=1 // pred_fallthru
      _
    // Predicated region
    $region58: #{tpu_custom_call.1} parent=1 // pred_check
      _
    $region59: #{tpu_custom_call.1} parent=1 // pred_check_branch
      %3577 = sbr.rel (0) target = $region61
    $region60: #{tpu_custom_call.1} parent=1 // pred_region
      %3578 = dma.done [#allocation4], 32
    $region61: #{tpu_custom_call.1} parent=1 // pred_fallthru
      _
    %3579 = vsyncpa [#allocation3], 1
    %3580 = vsyncpa [#allocation6], 1
    %3581 = vsyncpa [#allocation9], 1
    %3582 = vsyncpa [#allocation12], 1
    %3583 = vsyncpa [#allocation4], 1

</llo_original>
